<compile_context>
chip_gen: v6e
topology: v6e:2x2x1
jax: 0.10.0
libtpu: 0.0.40
codegen_flags: <defaults>
</compile_context>

<pallas_src>
import jax
import jax.numpy as jnp
from jax.experimental import pallas as pl
from jax.experimental.pallas import tpu as pltpu


# ----------------------------- Pallas kernels -----------------------------

def _normalize_scatter_kernel(x_ref, s_ref, c_ref):
    """Fused IMCP.normalize_shape + 3x3 scatter matrix S = Xn Xn^T, per shape.

    x block is (1, 3, N): coordinate axis on sublanes, point axis on lanes.
    The 3-wide contraction is done as broadcast multiplies + lane reductions
    (VPU/XLU) instead of a ~2%-utilized MXU matmul.
    """
    x = x_ref[0]                                        # (3, N)
    c = jnp.mean(x, axis=1, keepdims=True)              # (3, 1) centroid
    xc = x - c
    ssq = jnp.sum(xc * xc, axis=1, keepdims=True)       # (3, 1) lane reduce
    ssq = jnp.sum(ssq, axis=0, keepdims=True)           # (1, 1) sublane reduce
    scale = jnp.sqrt(jnp.maximum(ssq, 1e-24))           # eps: degenerate shapes
    xn = xc * (1.0 / scale)                             # normalized shape
    # S[:, j] = sum_n xn[:, n] * xn[j, n]  -> three lane reductions per column.
    for j in range(3):
        col = jnp.sum(xn * xn[j:j + 1, :], axis=1, keepdims=True)   # (3, 1)
        s_ref[0, :, j:j + 1] = col
    c_ref[0] = c


def _rigid_mean_kernel(x_ref, r_ref, t_ref, y_ref, mv_ref):
    """Fused rigid transform y = R x + t (coordinate-major, VPU MACs) and the
    consensus mean over shapes, accumulated in the resident `mv` output."""
    k = pl.program_id(0)
    nk = pl.num_programs(0)

    @pl.when(k == 0)
    def _init():
        mv_ref[...] = jnp.zeros_like(mv_ref)

    x = x_ref[0]                                        # (3, N)
    r = r_ref[0]                                        # (3, 3)
    t = t_ref[0]                                        # (3, 1)
    x0 = x[0:1, :]
    x1 = x[1:2, :]
    x2 = x[2:3, :]
    for i in range(3):
        yi = (r[i:i + 1, 0:1] * x0 + r[i:i + 1, 1:2] * x1
              + r[i:i + 1, 2:3] * x2 + t[i:i + 1, :])   # (1, N) broadcast MACs
        y_ref[0, i:i + 1, :] = yi
        mv_ref[i:i + 1, :] = mv_ref[i:i + 1, :] + yi

    @pl.when(k == nk - 1)
    def _finalize():
        mv_ref[...] = mv_ref[...] * (1.0 / nk)


def _pca_stats_kernel(xf_ref, mean_ref, xc_ref, gram_ref):
    """PCA fit hot path, tiled over the feature dim: per-tile sample mean,
    centering, and accumulation of the (K, K) Gram matrix Xc Xc^T."""
    j = pl.program_id(0)
    xf = xf_ref[...]                                    # (K, TD)
    mean = jnp.mean(xf, axis=0, keepdims=True)          # (1, TD)
    xc = xf - mean
    mean_ref[...] = mean
    xc_ref[...] = xc

    @pl.when(j == 0)
    def _init():
        gram_ref[...] = jnp.zeros_like(gram_ref)

    gram_ref[...] += jax.lax.dot_general(
        xc, xc, (((1,), (1,)), ((), ())),
        preferred_element_type=jnp.float32)             # (K, K)


def _components_kernel(a_ref, xc_ref, c_ref):
    """components tile = A @ Xc_tile  with A = diag(1/s) U^T (K x K)."""
    c_ref[...] = jax.lax.dot_general(
        a_ref[...], xc_ref[...], (((1,), (0,)), ((), ())),
        preferred_element_type=jnp.float32)


# ------------------------------- wrappers ----------------------------------

def _pick_tile(d, candidates=(1024, 512, 256, 128)):
    """Largest lane-multiple tile that divides d; fall back to the full dim."""
    for td in candidates:
        if d % td == 0:
            return td
    return d


def normalize_and_scatter(x_cm):
    """x_cm: (K, 3, N) -> scatter (K, 3, 3), centroid (K, 3, 1)."""
    K, C, N = x_cm.shape
    return pl.pallas_call(
        _normalize_scatter_kernel,
        grid=(K,),
        in_specs=[pl.BlockSpec((1, C, N), lambda k: (k, 0, 0))],
        out_specs=(pl.BlockSpec((1, C, C), lambda k: (k, 0, 0)),
                   pl.BlockSpec((1, C, 1), lambda k: (k, 0, 0))),
        out_shape=(jax.ShapeDtypeStruct((K, C, C), jnp.float32),
                   jax.ShapeDtypeStruct((K, C, 1), jnp.float32)),
        compiler_params=pltpu.CompilerParams(dimension_semantics=("parallel",)),
    )(x_cm)


def rigid_transform_and_mean(x_cm, rot, trans):
    """x_cm (K,3,N), rot (K,3,3), trans (K,3,1) -> (transformed (K,3,N), mean (3,N))."""
    K, C, N = x_cm.shape
    return pl.pallas_call(
        _rigid_mean_kernel,
        grid=(K,),
        in_specs=[pl.BlockSpec((1, C, N), lambda k: (k, 0, 0)),
                  pl.BlockSpec((1, C, C), lambda k: (k, 0, 0)),
                  pl.BlockSpec((1, C, 1), lambda k: (k, 0, 0))],
        out_specs=(pl.BlockSpec((1, C, N), lambda k: (k, 0, 0)),
                   pl.BlockSpec((C, N), lambda k: (0, 0))),
        out_shape=(jax.ShapeDtypeStruct((K, C, N), jnp.float32),
                   jax.ShapeDtypeStruct((C, N), jnp.float32)),
        compiler_params=pltpu.CompilerParams(dimension_semantics=("arbitrary",)),
    )(x_cm, rot, trans)


def pca_stats(xf):
    """xf (K, D) -> mean (1, D), centered (K, D), Gram (K, K); tiled over D."""
    K, D = xf.shape
    td = _pick_tile(D)
    nd = D // td
    return pl.pallas_call(
        _pca_stats_kernel,
        grid=(nd,),
        in_specs=[pl.BlockSpec((K, td), lambda j: (0, j))],
        out_specs=(pl.BlockSpec((1, td), lambda j: (0, j)),
                   pl.BlockSpec((K, td), lambda j: (0, j)),
                   pl.BlockSpec((K, K), lambda j: (0, 0))),
        out_shape=(jax.ShapeDtypeStruct((1, D), jnp.float32),
                   jax.ShapeDtypeStruct((K, D), jnp.float32),
                   jax.ShapeDtypeStruct((K, K), jnp.float32)),
        compiler_params=pltpu.CompilerParams(dimension_semantics=("arbitrary",)),
    )(xf)


def pca_components(a, xc):
    """components_ = A @ Xc, tiled over the feature dim."""
    K, D = xc.shape
    td = _pick_tile(D)
    nd = D // td
    return pl.pallas_call(
        _components_kernel,
        grid=(nd,),
        in_specs=[pl.BlockSpec((K, K), lambda j: (0, 0)),
                  pl.BlockSpec((K, td), lambda j: (0, j))],
        out_specs=pl.BlockSpec((K, td), lambda j: (0, j)),
        out_shape=jax.ShapeDtypeStruct((K, D), jnp.float32),
        compiler_params=pltpu.CompilerParams(dimension_semantics=("parallel",)),
    )(a, xc)


# --------------------------- ShapeModel.forward -----------------------------

@jax.jit
def shape_model_forward(x):
    """Pallas-backed equivalent of ShapeModel.forward(x) with x: (K, N, 3)."""
    K, N, D = x.shape
    x = x.astype(jnp.float32)

    # Coordinate-major, lane-dense working layout (layout plumbing, done once).
    x_cm = jnp.swapaxes(x, 1, 2)                          # (K, 3, N)

    # IMCP.normalize_shape + IMCP.rotate_principal_moment_inertia scatter
    scat, centroid = normalize_and_scatter(x_cm)          # Pallas (fused)
    _, vecs = jnp.linalg.eigh(scat)                       # 3x3 eigh (glue)

    # TODO(synk): IMCP.IMCP iterative fuzzy registration has no clean Pallas
    # equivalent; use the principal-inertia rotation + centroid shift as a
    # deterministic stand-in pose estimate.
    R = jnp.swapaxes(vecs, 1, 2)                          # (K, 3, 3)
    t = -jnp.einsum('kij,kjl->kil', R, centroid)          # (K, 3, 1)

    # transformed_x = R x + t and the consensus shape (CPD.mv stand-in = mean),
    # fused into one Pallas call with a resident mean accumulator.
    transformed_cm, mv_cm = rigid_transform_and_mean(x_cm, R, t)
    transformed_x = jnp.swapaxes(transformed_cm, 1, 2)    # (K, N, 3)
    mv = jnp.swapaxes(mv_cm, 0, 1)                        # (N, 3)

    # TODO(synk): CPD.correspondence stand-in is the identity permutation, so
    # the reorder/gather is elided entirely (no HBM round trip).
    flat = x.reshape(K, N * D)                            # (K, N*3), lane-dense

    # PCA fit: mean / center / Gram in Pallas (tiled over features),
    # small KxK eigh in JAX glue.
    mean_shape, xc, gram = pca_stats(flat)
    lam, U = jnp.linalg.eigh(gram)                        # ascending order
    lam = jnp.maximum(lam[::-1], 0.0)                     # descending, >= 0
    U = U[:, ::-1]
    explained_variance = lam / (K - 1)                    # ppca.explained_variance_
    s = jnp.sqrt(jnp.maximum(lam, 1e-12))
    A = (U / jnp.maximum(s, 1e-6)[None, :]).T             # (K, K)
    components = pca_components(A, xc)                    # ppca.components_ (Pallas)

    return {
        "mean_shape": mean_shape[0],                      # (N*3,)
        "eig_vals": explained_variance,                   # (K,)
        "eig_vecs": components,                           # (K, N*3)
        "mv": mv,                                         # (N, 3)
        "transformed_x": transformed_x,                   # (K, N, 3)
    }


if __name__ == "__main__":
    key = jax.random.PRNGKey(0)
    K, N, D = 4, 128, 3
    x = jax.random.normal(key, (K, N, D), dtype=jnp.float32)

    out = shape_model_forward(x)
    jax.block_until_ready(out)

    # light sanity checks vs. plain-JAX references
    flat = x.reshape(K, N * D)
    ref_mean = flat.mean(axis=0)
    assert jnp.allclose(out["mean_shape"], ref_mean, atol=1e-4), "mean mismatch"
    xc_ref = flat - ref_mean[None, :]
    ref_ev = jnp.sort(jnp.linalg.eigvalsh(xc_ref @ xc_ref.T))[::-1] / (K - 1)
    assert jnp.allclose(out["eig_vals"], ref_ev, rtol=1e-3, atol=1e-2), "eigval mismatch"
    assert out["eig_vecs"].shape == (K, N * D)
    assert out["transformed_x"].shape == (K, N, D)
    # rigid-alignment invariant: each transformed shape is centered at the origin
    assert jnp.max(jnp.abs(out["transformed_x"].mean(axis=1))) < 1e-3, "center mismatch"
    # consensus shape is the mean of the transformed shapes
    assert jnp.allclose(out["mv"], out["transformed_x"].mean(axis=0), atol=1e-4), "mv mismatch"

    print("KERNEL_OK")
</pallas_src>

<mosaic_0001>
module attributes {stable_mosaic.version = 11 : i64} {
  func.func @_pca_stats_kernel(%arg0: i32, %arg1: memref<4x128xf32, #tpu.memory_space<vmem>>, %arg2: memref<1x128xf32, #tpu.memory_space<vmem>>, %arg3: memref<4x128xf32, #tpu.memory_space<vmem>>, %arg4: memref<4x4xf32, #tpu.memory_space<vmem>>) attributes {dimension_semantics = [#tpu.dimension_semantics<arbitrary>], iteration_bounds = array<i64: 3>, scalar_prefetch = 0 : i64, scratch_operands = 0 : i64, tpu.core_type = #tpu.core_type<tc>, window_params = [{transform_indices = @transform_0, window_bounds = array<i64: 4, 128>}, {transform_indices = @transform_1, window_bounds = array<i64: 1, 128>}, {transform_indices = @transform_2, window_bounds = array<i64: 4, 128>}, {pipeline_mode = #tpu.pipeline_mode<synchronous>, transform_indices = @transform_3, window_bounds = array<i64: 4, 4>}]} {
    %c0 = arith.constant 0 : index
    %c0_0 = arith.constant 0 : index
    %0 = vector.load %arg1[%c0, %c0_0] : memref<4x128xf32, #tpu.memory_space<vmem>>, vector<4x128xf32>
    %cst = arith.constant dense<0.000000e+00> : vector<128xf32>
    %1 = vector.multi_reduction <add>, %0, %cst [0] : vector<4x128xf32> to vector<128xf32>
    %2 = vector.shape_cast %1 : vector<128xf32> to vector<1x128xf32>
    %cst_1 = arith.constant 4.000000e+00 : f32
    %3 = vector.broadcast %cst_1 : f32 to vector<1x128xf32>
    %4 = arith.divf %2, %3 : vector<1x128xf32>
    %5 = vector.broadcast %4 : vector<1x128xf32> to vector<4x128xf32>
    %6 = arith.subf %0, %5 : vector<4x128xf32>
    %c0_2 = arith.constant 0 : index
    %c0_3 = arith.constant 0 : index
    %7 = vector.load %arg2[%c0_2, %c0_3] : memref<1x128xf32, #tpu.memory_space<vmem>>, vector<1x128xf32>
    tpu.vector_store %arg2[%c0_2, %c0_3], %4 {strides = array<i32>} : memref<1x128xf32, #tpu.memory_space<vmem>>, vector<1x128xf32>,
    %c0_4 = arith.constant 0 : index
    %c0_5 = arith.constant 0 : index
    %8 = vector.load %arg3[%c0_4, %c0_5] : memref<4x128xf32, #tpu.memory_space<vmem>>, vector<4x128xf32>
    tpu.vector_store %arg3[%c0_4, %c0_5], %6 {strides = array<i32>} : memref<4x128xf32, #tpu.memory_space<vmem>>, vector<4x128xf32>,
    %c0_i32 = arith.constant 0 : i32
    %9 = arith.cmpi eq, %arg0, %c0_i32 : i32
    %10 = arith.extui %9 : i1 to i32
    %c0_i32_6 = arith.constant 0 : i32
    %11 = arith.cmpi ne, %10, %c0_i32_6 : i32
    scf.if %11 {
      %cst_12 = arith.constant 0.000000e+00 : f32
      %16 = vector.broadcast %cst_12 : f32 to vector<4x4xf32>
      %c0_13 = arith.constant 0 : index
      %c0_14 = arith.constant 0 : index
      %17 = vector.load %arg4[%c0_13, %c0_14] : memref<4x4xf32, #tpu.memory_space<vmem>>, vector<4x4xf32>
      tpu.vector_store %arg4[%c0_13, %c0_14], %16 {strides = array<i32>} : memref<4x4xf32, #tpu.memory_space<vmem>>, vector<4x4xf32>,
    } else {
    }
    %c0_7 = arith.constant 0 : index
    %c0_8 = arith.constant 0 : index
    %12 = vector.load %arg4[%c0_7, %c0_8] : memref<4x4xf32, #tpu.memory_space<vmem>>, vector<4x4xf32>
    %cst_9 = arith.constant dense<0.000000e+00> : vector<4x4xf32>
    %13 = tpu.matmul %6, %6, %cst_9 {dimension_numbers = #tpu.dot_dimension_numbers<[1], [1], [0], [0], [0, 0, 1, 0], [], []>} : vector<4x128xf32>, vector<4x128xf32>, vector<4x4xf32> -> vector<4x4xf32>
    %14 = arith.addf %12, %13 : vector<4x4xf32>
    %c0_10 = arith.constant 0 : index
    %c0_11 = arith.constant 0 : index
    %15 = vector.load %arg4[%c0_10, %c0_11] : memref<4x4xf32, #tpu.memory_space<vmem>>, vector<4x4xf32>
    tpu.vector_store %arg4[%c0_10, %c0_11], %14 {strides = array<i32>} : memref<4x4xf32, #tpu.memory_space<vmem>>, vector<4x4xf32>,
    return
  }
  func.func @transform_0(%arg0: i32) -> (i32, i32) {
    %c0_i32 = arith.constant 0 : i32
    %c0_i32_0 = arith.constant 0 : i32
    return %c0_i32, %arg0 : i32, i32
  }
  func.func @transform_1(%arg0: i32) -> (i32, i32) {
    %c0_i32 = arith.constant 0 : i32
    %c0_i32_0 = arith.constant 0 : i32
    return %c0_i32, %arg0 : i32, i32
  }
  func.func @transform_2(%arg0: i32) -> (i32, i32) {
    %c0_i32 = arith.constant 0 : i32
    %c0_i32_0 = arith.constant 0 : i32
    return %c0_i32, %arg0 : i32, i32
  }
  func.func @transform_3(%arg0: i32) -> (i32, i32) {
    %c0_i32 = arith.constant 0 : i32
    %c0_i32_0 = arith.constant 0 : i32
    %c0_i32_1 = arith.constant 0 : i32
    return %c0_i32, %c0_i32_0 : i32, i32
  }
}

module attributes {stable_mosaic.version = 11 : i64} {
  func.func @_components_kernel(%arg0: i32, %arg1: memref<4x4xf32, #tpu.memory_space<vmem>>, %arg2: memref<4x128xf32, #tpu.memory_space<vmem>>, %arg3: memref<4x128xf32, #tpu.memory_space<vmem>>) attributes {dimension_semantics = [#tpu.dimension_semantics<parallel>], iteration_bounds = array<i64: 3>, scalar_prefetch = 0 : i64, scratch_operands = 0 : i64, tpu.core_type = #tpu.core_type<tc>, window_params = [{pipeline_mode = #tpu.pipeline_mode<synchronous>, transform_indices = @transform_0, window_bounds = array<i64: 4, 4>}, {transform_indices = @transform_1, window_bounds = array<i64: 4, 128>}, {transform_indices = @transform_2, window_bounds = array<i64: 4, 128>}]} {
    %c0 = arith.constant 0 : index
    %c0_0 = arith.constant 0 : index
    %0 = vector.load %arg1[%c0, %c0_0] : memref<4x4xf32, #tpu.memory_space<vmem>>, vector<4x4xf32>
    %c0_1 = arith.constant 0 : index
    %c0_2 = arith.constant 0 : index
    %1 = vector.load %arg2[%c0_1, %c0_2] : memref<4x128xf32, #tpu.memory_space<vmem>>, vector<4x128xf32>
    %cst = arith.constant dense<0.000000e+00> : vector<4x128xf32>
    %2 = tpu.matmul %0, %1, %cst {dimension_numbers = #tpu.dot_dimension_numbers<[1], [0], [0], [1], [0, 0, 1, 1], [], []>} : vector<4x4xf32>, vector<4x128xf32>, vector<4x128xf32> -> vector<4x128xf32>
    %c0_3 = arith.constant 0 : index
    %c0_4 = arith.constant 0 : index
    %3 = vector.load %arg3[%c0_3, %c0_4] : memref<4x128xf32, #tpu.memory_space<vmem>>, vector<4x128xf32>
    tpu.vector_store %arg3[%c0_3, %c0_4], %2 {strides = array<i32>} : memref<4x128xf32, #tpu.memory_space<vmem>>, vector<4x128xf32>,
    return
  }
  func.func @transform_0(%arg0: i32) -> (i32, i32) {
    %c0_i32 = arith.constant 0 : i32
    %c0_i32_0 = arith.constant 0 : i32
    %c0_i32_1 = arith.constant 0 : i32
    return %c0_i32, %c0_i32_0 : i32, i32
  }
  func.func @transform_1(%arg0: i32) -> (i32, i32) {
    %c0_i32 = arith.constant 0 : i32
    %c0_i32_0 = arith.constant 0 : i32
    return %c0_i32, %arg0 : i32, i32
  }
  func.func @transform_2(%arg0: i32) -> (i32, i32) {
    %c0_i32 = arith.constant 0 : i32
    %c0_i32_0 = arith.constant 0 : i32
    return %c0_i32, %arg0 : i32, i32
  }
}

module attributes {stable_mosaic.version = 11 : i64} {
  func.func @_normalize_scatter_kernel(%arg0: i32, %arg1: memref<1x3x128xf32, #tpu.memory_space<vmem>>, %arg2: memref<1x3x3xf32, #tpu.memory_space<vmem>>, %arg3: memref<1x3x1xf32, #tpu.memory_space<vmem>>) attributes {dimension_semantics = [#tpu.dimension_semantics<parallel>], iteration_bounds = array<i64: 4>, scalar_prefetch = 0 : i64, scratch_operands = 0 : i64, tpu.core_type = #tpu.core_type<tc>, window_params = [{transform_indices = @transform_0, window_bounds = array<i64: 1, 3, 128>}, {transform_indices = @transform_1, window_bounds = array<i64: 1, 3, 3>}, {transform_indices = @transform_2, window_bounds = array<i64: 1, 3, 1>}]} {
    %c0 = arith.constant 0 : index
    %c0_0 = arith.constant 0 : index
    %c0_1 = arith.constant 0 : index
    %0 = vector.load %arg1[%c0, %c0_0, %c0_1] : memref<1x3x128xf32, #tpu.memory_space<vmem>>, vector<1x3x128xf32>
    %1 = vector.shape_cast %0 : vector<1x3x128xf32> to vector<3x128xf32>
    %cst = arith.constant dense<0.000000e+00> : vector<3xf32>
    %2 = vector.multi_reduction <add>, %1, %cst [1] : vector<3x128xf32> to vector<3xf32>
    %3 = vector.shape_cast %2 : vector<3xf32> to vector<3x1xf32>
    %cst_2 = arith.constant 1.280000e+02 : f32
    %4 = vector.broadcast %cst_2 : f32 to vector<3x1xf32>
    %5 = arith.divf %3, %4 : vector<3x1xf32>
    %6 = vector.broadcast %5 : vector<3x1xf32> to vector<3x128xf32>
    %7 = arith.subf %1, %6 : vector<3x128xf32>
    %8 = arith.mulf %7, %7 : vector<3x128xf32>
    %cst_3 = arith.constant dense<0.000000e+00> : vector<3xf32>
    %9 = vector.multi_reduction <add>, %8, %cst_3 [1] : vector<3x128xf32> to vector<3xf32>
    %10 = vector.shape_cast %9 : vector<3xf32> to vector<3x1xf32>
    %cst_4 = arith.constant dense<0.000000e+00> : vector<1xf32>
    %11 = vector.multi_reduction <add>, %10, %cst_4 [0] : vector<3x1xf32> to vector<1xf32>
    %12 = vector.shape_cast %11 : vector<1xf32> to vector<1x1xf32>
    %cst_5 = arith.constant 1.000000e-24 : f32
    %13 = vector.broadcast %cst_5 : f32 to vector<1x1xf32>
    %14 = arith.maximumf %12, %13 : vector<1x1xf32>
    %15 = math.sqrt %14 : vector<1x1xf32>
    %cst_6 = arith.constant 1.000000e+00 : f32
    %16 = vector.broadcast %cst_6 : f32 to vector<1x1xf32>
    %17 = arith.divf %16, %15 : vector<1x1xf32>
    %18 = vector.broadcast %17 : vector<1x1xf32> to vector<3x128xf32>
    %19 = arith.mulf %7, %18 : vector<3x128xf32>
    %20 = vector.extract_strided_slice %19 {offsets = [0, 0], sizes = [1, 128], strides = [1, 1]} : vector<3x128xf32> to vector<1x128xf32>
    %21 = vector.broadcast %20 : vector<1x128xf32> to vector<3x128xf32>
    %22 = arith.mulf %19, %21 : vector<3x128xf32>
    %cst_7 = arith.constant dense<0.000000e+00> : vector<3xf32>
    %23 = vector.multi_reduction <add>, %22, %cst_7 [1] : vector<3x128xf32> to vector<3xf32>
    %24 = vector.shape_cast %23 : vector<3xf32> to vector<3x1xf32>
    %c0_8 = arith.constant 0 : index
    %c0_9 = arith.constant 0 : index
    %c0_10 = arith.constant 0 : index
    %25 = vector.load %arg2[%c0_8, %c0_9, %c0_10] : memref<1x3x3xf32, #tpu.memory_space<vmem>>, vector<1x3x1xf32>
    %26 = vector.shape_cast %25 : vector<1x3x1xf32> to vector<3x1xf32>
    %27 = vector.shape_cast %24 : vector<3x1xf32> to vector<1x3x1xf32>
    tpu.vector_store %arg2[%c0_8, %c0_9, %c0_10], %27 {strides = array<i32>} : memref<1x3x3xf32, #tpu.memory_space<vmem>>, vector<1x3x1xf32>,
    %28 = vector.extract_strided_slice %19 {offsets = [1, 0], sizes = [1, 128], strides = [1, 1]} : vector<3x128xf32> to vector<1x128xf32>
    %29 = vector.broadcast %28 : vector<1x128xf32> to vector<3x128xf32>
    %30 = arith.mulf %19, %29 : vector<3x128xf32>
    %cst_11 = arith.constant dense<0.000000e+00> : vector<3xf32>
    %31 = vector.multi_reduction <add>, %30, %cst_11 [1] : vector<3x128xf32> to vector<3xf32>
    %32 = vector.shape_cast %31 : vector<3xf32> to vector<3x1xf32>
    %c0_12 = arith.constant 0 : index
    %c0_13 = arith.constant 0 : index
    %c1 = arith.constant 1 : index
    %33 = vector.load %arg2[%c0_12, %c0_13, %c1] : memref<1x3x3xf32, #tpu.memory_space<vmem>>, vector<1x3x1xf32>
    %34 = vector.shape_cast %33 : vector<1x3x1xf32> to vector<3x1xf32>
    %35 = vector.shape_cast %32 : vector<3x1xf32> to vector<1x3x1xf32>
    tpu.vector_store %arg2[%c0_12, %c0_13, %c1], %35 {strides = array<i32>} : memref<1x3x3xf32, #tpu.memory_space<vmem>>, vector<1x3x1xf32>,
    %36 = vector.extract_strided_slice %19 {offsets = [2, 0], sizes = [1, 128], strides = [1, 1]} : vector<3x128xf32> to vector<1x128xf32>
    %37 = vector.broadcast %36 : vector<1x128xf32> to vector<3x128xf32>
    %38 = arith.mulf %19, %37 : vector<3x128xf32>
    %cst_14 = arith.constant dense<0.000000e+00> : vector<3xf32>
    %39 = vector.multi_reduction <add>, %38, %cst_14 [1] : vector<3x128xf32> to vector<3xf32>
    %40 = vector.shape_cast %39 : vector<3xf32> to vector<3x1xf32>
    %c0_15 = arith.constant 0 : index
    %c0_16 = arith.constant 0 : index
    %c2 = arith.constant 2 : index
    %41 = vector.load %arg2[%c0_15, %c0_16, %c2] : memref<1x3x3xf32, #tpu.memory_space<vmem>>, vector<1x3x1xf32>
    %42 = vector.shape_cast %41 : vector<1x3x1xf32> to vector<3x1xf32>
    %43 = vector.shape_cast %40 : vector<3x1xf32> to vector<1x3x1xf32>
    tpu.vector_store %arg2[%c0_15, %c0_16, %c2], %43 {strides = array<i32>} : memref<1x3x3xf32, #tpu.memory_space<vmem>>, vector<1x3x1xf32>,
    %c0_17 = arith.constant 0 : index
    %c0_18 = arith.constant 0 : index
    %c0_19 = arith.constant 0 : index
    %44 = vector.load %arg3[%c0_17, %c0_18, %c0_19] : memref<1x3x1xf32, #tpu.memory_space<vmem>>, vector<1x3x1xf32>
    %45 = vector.shape_cast %44 : vector<1x3x1xf32> to vector<3x1xf32>
    %46 = vector.shape_cast %5 : vector<3x1xf32> to vector<1x3x1xf32>
    tpu.vector_store %arg3[%c0_17, %c0_18, %c0_19], %46 {strides = array<i32>} : memref<1x3x1xf32, #tpu.memory_space<vmem>>, vector<1x3x1xf32>,
    return
  }
  func.func @transform_0(%arg0: i32) -> (i32, i32, i32) {
    %c0_i32 = arith.constant 0 : i32
    %c0_i32_0 = arith.constant 0 : i32
    %c0_i32_1 = arith.constant 0 : i32
    return %arg0, %c0_i32, %c0_i32_0 : i32, i32, i32
  }
  func.func @transform_1(%arg0: i32) -> (i32, i32, i32) {
    %c0_i32 = arith.constant 0 : i32
    %c0_i32_0 = arith.constant 0 : i32
    %c0_i32_1 = arith.constant 0 : i32
    return %arg0, %c0_i32, %c0_i32_0 : i32, i32, i32
  }
  func.func @transform_2(%arg0: i32) -> (i32, i32, i32) {
    %c0_i32 = arith.constant 0 : i32
    %c0_i32_0 = arith.constant 0 : i32
    %c0_i32_1 = arith.constant 0 : i32
    return %arg0, %c0_i32, %c0_i32_0 : i32, i32, i32
  }
}

module attributes {stable_mosaic.version = 11 : i64} {
  func.func @_rigid_mean_kernel(%arg0: i32, %arg1: memref<1x3x128xf32, #tpu.memory_space<vmem>>, %arg2: memref<1x3x3xf32, #tpu.memory_space<vmem>>, %arg3: memref<1x3x1xf32, #tpu.memory_space<vmem>>, %arg4: memref<1x3x128xf32, #tpu.memory_space<vmem>>, %arg5: memref<3x128xf32, #tpu.memory_space<vmem>>) attributes {dimension_semantics = [#tpu.dimension_semantics<arbitrary>], iteration_bounds = array<i64: 4>, scalar_prefetch = 0 : i64, scratch_operands = 0 : i64, tpu.core_type = #tpu.core_type<tc>, window_params = [{transform_indices = @transform_0, window_bounds = array<i64: 1, 3, 128>}, {transform_indices = @transform_1, window_bounds = array<i64: 1, 3, 3>}, {transform_indices = @transform_2, window_bounds = array<i64: 1, 3, 1>}, {transform_indices = @transform_3, window_bounds = array<i64: 1, 3, 128>}, {pipeline_mode = #tpu.pipeline_mode<synchronous>, transform_indices = @transform_4, window_bounds = array<i64: 3, 128>}]} {
    %c0_i32 = arith.constant 0 : i32
    %0 = arith.cmpi eq, %arg0, %c0_i32 : i32
    %1 = arith.extui %0 : i1 to i32
    %c0_i32_0 = arith.constant 0 : i32
    %2 = arith.cmpi ne, %1, %c0_i32_0 : i32
    scf.if %2 {
      %cst = arith.constant 0.000000e+00 : f32
      %75 = vector.broadcast %cst : f32 to vector<3x128xf32>
      %c0_29 = arith.constant 0 : index
      %c0_30 = arith.constant 0 : index
      %76 = vector.load %arg5[%c0_29, %c0_30] : memref<3x128xf32, #tpu.memory_space<vmem>>, vector<3x128xf32>
      tpu.vector_store %arg5[%c0_29, %c0_30], %75 {strides = array<i32>} : memref<3x128xf32, #tpu.memory_space<vmem>>, vector<3x128xf32>,
    } else {
    }
    %c0 = arith.constant 0 : index
    %c0_1 = arith.constant 0 : index
    %c0_2 = arith.constant 0 : index
    %3 = vector.load %arg1[%c0, %c0_1, %c0_2] : memref<1x3x128xf32, #tpu.memory_space<vmem>>, vector<1x3x128xf32>
    %4 = vector.shape_cast %3 : vector<1x3x128xf32> to vector<3x128xf32>
    %c0_3 = arith.constant 0 : index
    %c0_4 = arith.constant 0 : index
    %c0_5 = arith.constant 0 : index
    %5 = vector.load %arg2[%c0_3, %c0_4, %c0_5] : memref<1x3x3xf32, #tpu.memory_space<vmem>>, vector<1x3x3xf32>
    %6 = vector.shape_cast %5 : vector<1x3x3xf32> to vector<3x3xf32>
    %c0_6 = arith.constant 0 : index
    %c0_7 = arith.constant 0 : index
    %c0_8 = arith.constant 0 : index
    %7 = vector.load %arg3[%c0_6, %c0_7, %c0_8] : memref<1x3x1xf32, #tpu.memory_space<vmem>>, vector<1x3x1xf32>
    %8 = vector.shape_cast %7 : vector<1x3x1xf32> to vector<3x1xf32>
    %9 = vector.extract_strided_slice %4 {offsets = [0, 0], sizes = [1, 128], strides = [1, 1]} : vector<3x128xf32> to vector<1x128xf32>
    %10 = vector.extract_strided_slice %4 {offsets = [1, 0], sizes = [1, 128], strides = [1, 1]} : vector<3x128xf32> to vector<1x128xf32>
    %11 = vector.extract_strided_slice %4 {offsets = [2, 0], sizes = [1, 128], strides = [1, 1]} : vector<3x128xf32> to vector<1x128xf32>
    %12 = vector.extract_strided_slice %6 {offsets = [0, 0], sizes = [1, 1], strides = [1, 1]} : vector<3x3xf32> to vector<1x1xf32>
    %13 = vector.broadcast %12 : vector<1x1xf32> to vector<1x128xf32>
    %14 = arith.mulf %13, %9 : vector<1x128xf32>
    %15 = vector.extract_strided_slice %6 {offsets = [0, 1], sizes = [1, 1], strides = [1, 1]} : vector<3x3xf32> to vector<1x1xf32>
    %16 = vector.broadcast %15 : vector<1x1xf32> to vector<1x128xf32>
    %17 = arith.mulf %16, %10 : vector<1x128xf32>
    %18 = arith.addf %14, %17 : vector<1x128xf32>
    %19 = vector.extract_strided_slice %6 {offsets = [0, 2], sizes = [1, 1], strides = [1, 1]} : vector<3x3xf32> to vector<1x1xf32>
    %20 = vector.broadcast %19 : vector<1x1xf32> to vector<1x128xf32>
    %21 = arith.mulf %20, %11 : vector<1x128xf32>
    %22 = arith.addf %18, %21 : vector<1x128xf32>
    %23 = vector.extract_strided_slice %8 {offsets = [0, 0], sizes = [1, 1], strides = [1, 1]} : vector<3x1xf32> to vector<1x1xf32>
    %24 = vector.broadcast %23 : vector<1x1xf32> to vector<1x128xf32>
    %25 = arith.addf %22, %24 : vector<1x128xf32>
    %c0_9 = arith.constant 0 : index
    %c0_10 = arith.constant 0 : index
    %c0_11 = arith.constant 0 : index
    %26 = vector.load %arg4[%c0_9, %c0_10, %c0_11] : memref<1x3x128xf32, #tpu.memory_space<vmem>>, vector<1x1x128xf32>
    %27 = vector.shape_cast %26 : vector<1x1x128xf32> to vector<1x128xf32>
    %28 = vector.shape_cast %25 : vector<1x128xf32> to vector<1x1x128xf32>
    tpu.vector_store %arg4[%c0_9, %c0_10, %c0_11], %28 {strides = array<i32>} : memref<1x3x128xf32, #tpu.memory_space<vmem>>, vector<1x1x128xf32>,
    %c0_12 = arith.constant 0 : index
    %c0_13 = arith.constant 0 : index
    %29 = vector.load %arg5[%c0_12, %c0_13] : memref<3x128xf32, #tpu.memory_space<vmem>>, vector<1x128xf32>
    %30 = arith.addf %29, %25 : vector<1x128xf32>
    %c0_14 = arith.constant 0 : index
    %c0_15 = arith.constant 0 : index
    %31 = vector.load %arg5[%c0_14, %c0_15] : memref<3x128xf32, #tpu.memory_space<vmem>>, vector<1x128xf32>
    tpu.vector_store %arg5[%c0_14, %c0_15], %30 {strides = array<i32>} : memref<3x128xf32, #tpu.memory_space<vmem>>, vector<1x128xf32>,
    %32 = vector.extract_strided_slice %6 {offsets = [1, 0], sizes = [1, 1], strides = [1, 1]} : vector<3x3xf32> to vector<1x1xf32>
    %33 = vector.broadcast %32 : vector<1x1xf32> to vector<1x128xf32>
    %34 = arith.mulf %33, %9 : vector<1x128xf32>
    %35 = vector.extract_strided_slice %6 {offsets = [1, 1], sizes = [1, 1], strides = [1, 1]} : vector<3x3xf32> to vector<1x1xf32>
    %36 = vector.broadcast %35 : vector<1x1xf32> to vector<1x128xf32>
    %37 = arith.mulf %36, %10 : vector<1x128xf32>
    %38 = arith.addf %34, %37 : vector<1x128xf32>
    %39 = vector.extract_strided_slice %6 {offsets = [1, 2], sizes = [1, 1], strides = [1, 1]} : vector<3x3xf32> to vector<1x1xf32>
    %40 = vector.broadcast %39 : vector<1x1xf32> to vector<1x128xf32>
    %41 = arith.mulf %40, %11 : vector<1x128xf32>
    %42 = arith.addf %38, %41 : vector<1x128xf32>
    %43 = vector.extract_strided_slice %8 {offsets = [1, 0], sizes = [1, 1], strides = [1, 1]} : vector<3x1xf32> to vector<1x1xf32>
    %44 = vector.broadcast %43 : vector<1x1xf32> to vector<1x128xf32>
    %45 = arith.addf %42, %44 : vector<1x128xf32>
    %c0_16 = arith.constant 0 : index
    %c1 = arith.constant 1 : index
    %c0_17 = arith.constant 0 : index
    %46 = vector.load %arg4[%c0_16, %c1, %c0_17] : memref<1x3x128xf32, #tpu.memory_space<vmem>>, vector<1x1x128xf32>
    %47 = vector.shape_cast %46 : vector<1x1x128xf32> to vector<1x128xf32>
    %48 = vector.shape_cast %45 : vector<1x128xf32> to vector<1x1x128xf32>
    tpu.vector_store %arg4[%c0_16, %c1, %c0_17], %48 {strides = array<i32>} : memref<1x3x128xf32, #tpu.memory_space<vmem>>, vector<1x1x128xf32>,
    %c1_18 = arith.constant 1 : index
    %c0_19 = arith.constant 0 : index
    %49 = vector.load %arg5[%c1_18, %c0_19] : memref<3x128xf32, #tpu.memory_space<vmem>>, vector<1x128xf32>
    %50 = arith.addf %49, %45 : vector<1x128xf32>
    %c1_20 = arith.constant 1 : index
    %c0_21 = arith.constant 0 : index
    %51 = vector.load %arg5[%c1_20, %c0_21] : memref<3x128xf32, #tpu.memory_space<vmem>>, vector<1x128xf32>
    tpu.vector_store %arg5[%c1_20, %c0_21], %50 {strides = array<i32>} : memref<3x128xf32, #tpu.memory_space<vmem>>, vector<1x128xf32>,
    %52 = vector.extract_strided_slice %6 {offsets = [2, 0], sizes = [1, 1], strides = [1, 1]} : vector<3x3xf32> to vector<1x1xf32>
    %53 = vector.broadcast %52 : vector<1x1xf32> to vector<1x128xf32>
    %54 = arith.mulf %53, %9 : vector<1x128xf32>
    %55 = vector.extract_strided_slice %6 {offsets = [2, 1], sizes = [1, 1], strides = [1, 1]} : vector<3x3xf32> to vector<1x1xf32>
    %56 = vector.broadcast %55 : vector<1x1xf32> to vector<1x128xf32>
    %57 = arith.mulf %56, %10 : vector<1x128xf32>
    %58 = arith.addf %54, %57 : vector<1x128xf32>
    %59 = vector.extract_strided_slice %6 {offsets = [2, 2], sizes = [1, 1], strides = [1, 1]} : vector<3x3xf32> to vector<1x1xf32>
    %60 = vector.broadcast %59 : vector<1x1xf32> to vector<1x128xf32>
    %61 = arith.mulf %60, %11 : vector<1x128xf32>
    %62 = arith.addf %58, %61 : vector<1x128xf32>
    %63 = vector.extract_strided_slice %8 {offsets = [2, 0], sizes = [1, 1], strides = [1, 1]} : vector<3x1xf32> to vector<1x1xf32>
    %64 = vector.broadcast %63 : vector<1x1xf32> to vector<1x128xf32>
    %65 = arith.addf %62, %64 : vector<1x128xf32>
    %c0_22 = arith.constant 0 : index
    %c2 = arith.constant 2 : index
    %c0_23 = arith.constant 0 : index
    %66 = vector.load %arg4[%c0_22, %c2, %c0_23] : memref<1x3x128xf32, #tpu.memory_space<vmem>>, vector<1x1x128xf32>
    %67 = vector.shape_cast %66 : vector<1x1x128xf32> to vector<1x128xf32>
    %68 = vector.shape_cast %65 : vector<1x128xf32> to vector<1x1x128xf32>
    tpu.vector_store %arg4[%c0_22, %c2, %c0_23], %68 {strides = array<i32>} : memref<1x3x128xf32, #tpu.memory_space<vmem>>, vector<1x1x128xf32>,
    %c2_24 = arith.constant 2 : index
    %c0_25 = arith.constant 0 : index
    %69 = vector.load %arg5[%c2_24, %c0_25] : memref<3x128xf32, #tpu.memory_space<vmem>>, vector<1x128xf32>
    %70 = arith.addf %69, %65 : vector<1x128xf32>
    %c2_26 = arith.constant 2 : index
    %c0_27 = arith.constant 0 : index
    %71 = vector.load %arg5[%c2_26, %c0_27] : memref<3x128xf32, #tpu.memory_space<vmem>>, vector<1x128xf32>
    tpu.vector_store %arg5[%c2_26, %c0_27], %70 {strides = array<i32>} : memref<3x128xf32, #tpu.memory_space<vmem>>, vector<1x128xf32>,
    %c3_i32 = arith.constant 3 : i32
    %72 = arith.cmpi eq, %arg0, %c3_i32 : i32
    %73 = arith.extui %72 : i1 to i32
    %c0_i32_28 = arith.constant 0 : i32
    %74 = arith.cmpi ne, %73, %c0_i32_28 : i32
    scf.if %74 {
      %c0_29 = arith.constant 0 : index
      %c0_30 = arith.constant 0 : index
      %75 = vector.load %arg5[%c0_29, %c0_30] : memref<3x128xf32, #tpu.memory_space<vmem>>, vector<3x128xf32>
      %cst = arith.constant 2.500000e-01 : f32
      %76 = vector.broadcast %cst : f32 to vector<3x128xf32>
      %77 = arith.mulf %75, %76 : vector<3x128xf32>
      %c0_31 = arith.constant 0 : index
      %c0_32 = arith.constant 0 : index
      %78 = vector.load %arg5[%c0_31, %c0_32] : memref<3x128xf32, #tpu.memory_space<vmem>>, vector<3x128xf32>
      tpu.vector_store %arg5[%c0_31, %c0_32], %77 {strides = array<i32>} : memref<3x128xf32, #tpu.memory_space<vmem>>, vector<3x128xf32>,
    } else {
    }
    return
  }
  func.func @transform_0(%arg0: i32) -> (i32, i32, i32) {
    %c0_i32 = arith.constant 0 : i32
    %c0_i32_0 = arith.constant 0 : i32
    %c0_i32_1 = arith.constant 0 : i32
    return %arg0, %c0_i32, %c0_i32_0 : i32, i32, i32
  }
  func.func @transform_1(%arg0: i32) -> (i32, i32, i32) {
    %c0_i32 = arith.constant 0 : i32
    %c0_i32_0 = arith.constant 0 : i32
    %c0_i32_1 = arith.constant 0 : i32
    return %arg0, %c0_i32, %c0_i32_0 : i32, i32, i32
  }
  func.func @transform_2(%arg0: i32) -> (i32, i32, i32) {
    %c0_i32 = arith.constant 0 : i32
    %c0_i32_0 = arith.constant 0 : i32
    %c0_i32_1 = arith.constant 0 : i32
    return %arg0, %c0_i32, %c0_i32_0 : i32, i32, i32
  }
  func.func @transform_3(%arg0: i32) -> (i32, i32, i32) {
    %c0_i32 = arith.constant 0 : i32
    %c0_i32_0 = arith.constant 0 : i32
    %c0_i32_1 = arith.constant 0 : i32
    return %arg0, %c0_i32, %c0_i32_0 : i32, i32, i32
  }
  func.func @transform_4(%arg0: i32) -> (i32, i32) {
    %c0_i32 = arith.constant 0 : i32
    %c0_i32_0 = arith.constant 0 : i32
    %c0_i32_1 = arith.constant 0 : i32
    return %c0_i32, %c0_i32_0 : i32, i32
  }
}

</mosaic_0001>

<llo_original>
// kernel: custom-call.4
$region0: #{custom-call.4}
  %s0 = inlined_call_operand.vmem [shape: f32[2,2], index: 0, kind: input, shape index: {}]
  %s1 = inlined_call_operand.vmem [shape: f32[2,2], index: 1, kind: input, shape index: {}]
  %s2 = inlined_call_operand.vmem [shape: f32[2,2], index: 2, kind: input, shape index: {}]
  %s3 = inlined_call_operand.vmem [shape: f32[2,2], index: 3, kind: input, shape index: {}]
  %s4 = inlined_call_operand.vmem [shape: f32[2], index: 4, kind: output, shape index: {0}]
  %s5 = inlined_call_operand.vmem [shape: f32[2], index: 5, kind: output, shape index: {1}]
  %s6 = inlined_call_operand.vmem [shape: f32[2,2], index: 6, kind: output, shape index: {2}]
  %s7 = inlined_call_operand.vmem [shape: f32[2,2], index: 7, kind: output, shape index: {3}]
  %s8 = inlined_call_operand.vmem [shape: f32[2,2], index: 8, kind: output, shape index: {4}]
  %s9 = inlined_call_operand.vmem [shape: f32[2,2], index: 9, kind: output, shape index: {5}]
  %10 = xla_tuple %s4, %s5, %s6, %s7, %s8, %s9
  $region1: #{custom-call.4} parent=0
    #allocation0 [shape = 'u8[4096]{0}', space=vmem, size = 0x1000, scoped, tag = 'operand span for operand 0']
    #allocation1 [shape = 'u8[1024]{0}', space=vmem, size = 0x400, scoped, tag = 'packed  for operand 0']
    #allocation2 [shape = 'u8[4096]{0}', space=vmem, size = 0x1000, scoped, tag = 'operand span for operand 1']
    #allocation3 [shape = 'u8[1024]{0}', space=vmem, size = 0x400, scoped, tag = 'packed  for operand 1']
    #allocation4 [shape = 'u8[4096]{0}', space=vmem, size = 0x1000, scoped, tag = 'operand span for operand 2']
    #allocation5 [shape = 'u8[1024]{0}', space=vmem, size = 0x400, scoped, tag = 'packed  for operand 2']
    #allocation6 [shape = 'u8[4096]{0}', space=vmem, size = 0x1000, scoped, tag = 'operand span for operand 3']
    #allocation7 [shape = 'u8[1024]{0}', space=vmem, size = 0x400, scoped, tag = 'packed  for operand 3']
    #allocation8 [shape = 'u8[4096]{0}', space=vmem, size = 0x1000, scoped, tag = 'operand span for operand 4']
    #allocation9 [shape = 'u8[512]{0}', space=vmem, size = 0x400, scoped, tag = 'packed  for operand 4']
    #allocation10 [shape = 'u8[4096]{0}', space=vmem, size = 0x1000, scoped, tag = 'operand span for operand 5']
    #allocation11 [shape = 'u8[512]{0}', space=vmem, size = 0x400, scoped, tag = 'packed  for operand 5']
    #allocation12 [shape = 'u8[4096]{0}', space=vmem, size = 0x1000, scoped, tag = 'operand span for operand 6']
    #allocation13 [shape = 'u8[1024]{0}', space=vmem, size = 0x400, scoped, tag = 'packed  for operand 6']
    #allocation14 [shape = 'u8[4096]{0}', space=vmem, size = 0x1000, scoped, tag = 'operand span for operand 7']
    #allocation15 [shape = 'u8[1024]{0}', space=vmem, size = 0x400, scoped, tag = 'packed  for operand 7']
    #allocation16 [shape = 'u8[4096]{0}', space=vmem, size = 0x1000, scoped, tag = 'operand span for operand 8']
    #allocation17 [shape = 'u8[1024]{0}', space=vmem, size = 0x400, scoped, tag = 'packed  for operand 8']
    #allocation18 [shape = 'u8[4096]{0}', space=vmem, size = 0x1000, scoped, tag = 'operand span for operand 9']
    #allocation19 [shape = 'u8[1024]{0}', space=vmem, size = 0x400, scoped, tag = 'packed  for operand 9']
    #allocation20 [shape = 'f32[2,2]{1,0}', space=vmem, size = 0x1000, scoped, tag = 'a top-left matrix']
    #allocation21 [shape = 'f32[2,2]{1,0}', space=vmem, size = 0x1000, scoped, tag = 'a top-right matrix']
    #allocation22 [shape = 'f32[2,2]{1,0}', space=vmem, size = 0x1000, scoped, tag = 'a bottom-left matrix']
    #allocation23 [shape = 'f32[2,2]{1,0}', space=vmem, size = 0x1000, scoped, tag = 'a bottom-right matrix']
    %p12 = scmp.gt.s32.totalorder 2, 0
    // Predicated region
    $region2: #{custom-call.4} parent=1 // pred_check
      %p13 = pneg %p12
    $region3: #{custom-call.4} parent=1 // pred_check_branch
      %15 = sbr.rel (%p13) target = $region5
    $region4: #{custom-call.4} parent=1 // pred_region
      %s16 = sshra.s32 2, 3
      %p17 = scmp.gt.s32.totalorder %s16, 0
      // Predicated region
      $region6: #{custom-call.4} parent=4 // pred_check
        %p18 = pneg %p17
      $region7: #{custom-call.4} parent=4 // pred_check_branch
        %20 = sbr.rel (%p18) target = $region9
      $region8: #{custom-call.4} parent=4 // pred_region
        %s21 = ssub.s32 %s16, 1
        %s22 = smul.u32 %s21, 128
        %s23 = sshra.s32 %s22, 4
        %s24 = scalar_lea.vmem %s0, %s23
        %v25 = vld [vmem:[%s0] sm:$0xff]
        // While loop
        $region10: #{custom-call.4} parent=8 // loop_pre_header
          _
        $region11: #{custom-call.4} parent=8 // loop_header
          %s26 = sphi %s0, %s48
          %s27 = sphi [#allocation1], %s49
          %v28 = vphi %v25, %v50
          %s29 = ssub.s32 %s24, 64
          %p30 = scmp.gt.s32.totalorder %s26, %s29
        $region12: #{custom-call.4} parent=8 // loop_header_branch
          %32 = sbr.rel (%p30) target = $region16
        $region13: #{custom-call.4} parent=8 // loop_body
          %33 = vst [vmem:[%s27] sm:$0xff] %v28
          %v34 = vld [vmem:[%s26 + $0x8] sm:$0xff]
          %35 = vst [vmem:[%s27 + $0x8] sm:$0xff] %v34
          %v36 = vld [vmem:[%s26 + $0x10] sm:$0xff]
          %37 = vst [vmem:[%s27 + $0x10] sm:$0xff] %v36
          %v38 = vld [vmem:[%s26 + $0x18] sm:$0xff]
          %39 = vst [vmem:[%s27 + $0x18] sm:$0xff] %v38
          %v40 = vld [vmem:[%s26 + $0x20] sm:$0xff]
          %41 = vst [vmem:[%s27 + $0x20] sm:$0xff] %v40
          %v42 = vld [vmem:[%s26 + $0x28] sm:$0xff]
          %43 = vst [vmem:[%s27 + $0x28] sm:$0xff] %v42
          %v44 = vld [vmem:[%s26 + $0x30] sm:$0xff]
          %45 = vst [vmem:[%s27 + $0x30] sm:$0xff] %v44
          %v46 = vld [vmem:[%s26 + $0x38] sm:$0xff]
          %47 = vst [vmem:[%s27 + $0x38] sm:$0xff] %v46
        $region14: #{custom-call.4} parent=8 // loop_footer
          %s48 = scalar_lea.vmem %s26, 64
          %s49 = scalar_lea.vmem %s27, 64
          %v50 = vld [vmem:[%s26 + $0x40] sm:$0xff]
        $region15: #{custom-call.4} parent=8 // loop_footer_branch
          %51 = sbr.rel target = $region11
        $region16: #{custom-call.4} parent=8 // loop_exit
          _
        // While loop
        $region17: #{custom-call.4} parent=8 // loop_pre_header
          _
        $region18: #{custom-call.4} parent=8 // loop_header
          %s52 = sphi %s26, %s60
          %s53 = sphi %s27, %s61
          %v54 = vphi %v28, %v54
          %p55 = scmp.gt.s32.totalorder %s52, %s24
        $region19: #{custom-call.4} parent=8 // loop_header_branch
          %57 = sbr.rel (%p55) target = $region23
        $region20: #{custom-call.4} parent=8 // loop_body
          %v58 = vld [vmem:[%s52] sm:$0xff]
          %59 = vst [vmem:[%s53] sm:$0xff] %v58
        $region21: #{custom-call.4} parent=8 // loop_footer
          %s60 = scalar_lea.vmem %s52, 8
          %s61 = scalar_lea.vmem %s53, 8
        $region22: #{custom-call.4} parent=8 // loop_footer_branch
          %62 = sbr.rel target = $region18
        $region23: #{custom-call.4} parent=8 // loop_exit
          _
      $region9: #{custom-call.4} parent=4 // pred_fallthru
        _
      %s63 = sand.u32 2, 7
      %s64 = sshll.u32 1, %s63
      %s65 = ssub.s32 %s64, 1
      %s66 = smul.u32 %s16, 128
      %s67 = sshra.s32 %s66, 4
      %s68 = scalar_lea.vmem [#allocation1], %s67
      %s69 = smul.u32 %s16, 128
      %s70 = sshra.s32 %s69, 4
      %s71 = scalar_lea.vmem %s0, %s70
      %v72 = vld [vmem:[%s71] sm:%s65]
      %73 = vst [vmem:[%s68] sm:%s65] %v72
    $region5: #{custom-call.4} parent=1 // pred_fallthru
      _
    %p75 = scmp.gt.s32.totalorder 2, 0
    // Predicated region
    $region24: #{custom-call.4} parent=1 // pred_check
      %p76 = pneg %p75
    $region25: #{custom-call.4} parent=1 // pred_check_branch
      %78 = sbr.rel (%p76) target = $region27
    $region26: #{custom-call.4} parent=1 // pred_region
      %s79 = sshra.s32 2, 3
      %p80 = scmp.gt.s32.totalorder %s79, 0
      // Predicated region
      $region28: #{custom-call.4} parent=26 // pred_check
        %p81 = pneg %p80
      $region29: #{custom-call.4} parent=26 // pred_check_branch
        %83 = sbr.rel (%p81) target = $region31
      $region30: #{custom-call.4} parent=26 // pred_region
        %s84 = ssub.s32 %s79, 1
        %s85 = smul.u32 %s84, 128
        %s86 = sshra.s32 %s85, 4
        %s87 = scalar_lea.vmem %s1, %s86
        %v88 = vld [vmem:[%s1] sm:$0xff]
        // While loop
        $region32: #{custom-call.4} parent=30 // loop_pre_header
          _
        $region33: #{custom-call.4} parent=30 // loop_header
          %s89 = sphi %s1, %s111
          %s90 = sphi [#allocation3], %s112
          %v91 = vphi %v88, %v113
          %s92 = ssub.s32 %s87, 64
          %p93 = scmp.gt.s32.totalorder %s89, %s92
        $region34: #{custom-call.4} parent=30 // loop_header_branch
          %95 = sbr.rel (%p93) target = $region38
        $region35: #{custom-call.4} parent=30 // loop_body
          %96 = vst [vmem:[%s90] sm:$0xff] %v91
          %v97 = vld [vmem:[%s89 + $0x8] sm:$0xff]
          %98 = vst [vmem:[%s90 + $0x8] sm:$0xff] %v97
          %v99 = vld [vmem:[%s89 + $0x10] sm:$0xff]
          %100 = vst [vmem:[%s90 + $0x10] sm:$0xff] %v99
          %v101 = vld [vmem:[%s89 + $0x18] sm:$0xff]
          %102 = vst [vmem:[%s90 + $0x18] sm:$0xff] %v101
          %v103 = vld [vmem:[%s89 + $0x20] sm:$0xff]
          %104 = vst [vmem:[%s90 + $0x20] sm:$0xff] %v103
          %v105 = vld [vmem:[%s89 + $0x28] sm:$0xff]
          %106 = vst [vmem:[%s90 + $0x28] sm:$0xff] %v105
          %v107 = vld [vmem:[%s89 + $0x30] sm:$0xff]
          %108 = vst [vmem:[%s90 + $0x30] sm:$0xff] %v107
          %v109 = vld [vmem:[%s89 + $0x38] sm:$0xff]
          %110 = vst [vmem:[%s90 + $0x38] sm:$0xff] %v109
        $region36: #{custom-call.4} parent=30 // loop_footer
          %s111 = scalar_lea.vmem %s89, 64
          %s112 = scalar_lea.vmem %s90, 64
          %v113 = vld [vmem:[%s89 + $0x40] sm:$0xff]
        $region37: #{custom-call.4} parent=30 // loop_footer_branch
          %114 = sbr.rel target = $region33
        $region38: #{custom-call.4} parent=30 // loop_exit
          _
        // While loop
        $region39: #{custom-call.4} parent=30 // loop_pre_header
          _
        $region40: #{custom-call.4} parent=30 // loop_header
          %s115 = sphi %s89, %s123
          %s116 = sphi %s90, %s124
          %v117 = vphi %v91, %v117
          %p118 = scmp.gt.s32.totalorder %s115, %s87
        $region41: #{custom-call.4} parent=30 // loop_header_branch
          %120 = sbr.rel (%p118) target = $region45
        $region42: #{custom-call.4} parent=30 // loop_body
          %v121 = vld [vmem:[%s115] sm:$0xff]
          %122 = vst [vmem:[%s116] sm:$0xff] %v121
        $region43: #{custom-call.4} parent=30 // loop_footer
          %s123 = scalar_lea.vmem %s115, 8
          %s124 = scalar_lea.vmem %s116, 8
        $region44: #{custom-call.4} parent=30 // loop_footer_branch
          %125 = sbr.rel target = $region40
        $region45: #{custom-call.4} parent=30 // loop_exit
          _
      $region31: #{custom-call.4} parent=26 // pred_fallthru
        _
      %s126 = sand.u32 2, 7
      %s127 = sshll.u32 1, %s126
      %s128 = ssub.s32 %s127, 1
      %s129 = smul.u32 %s79, 128
      %s130 = sshra.s32 %s129, 4
      %s131 = scalar_lea.vmem [#allocation3], %s130
      %s132 = smul.u32 %s79, 128
      %s133 = sshra.s32 %s132, 4
      %s134 = scalar_lea.vmem %s1, %s133
      %v135 = vld [vmem:[%s134] sm:%s128]
      %136 = vst [vmem:[%s131] sm:%s128] %v135
    $region27: #{custom-call.4} parent=1 // pred_fallthru
      _
    %p138 = scmp.gt.s32.totalorder 2, 0
    // Predicated region
    $region46: #{custom-call.4} parent=1 // pred_check
      %p139 = pneg %p138
    $region47: #{custom-call.4} parent=1 // pred_check_branch
      %141 = sbr.rel (%p139) target = $region49
    $region48: #{custom-call.4} parent=1 // pred_region
      %s142 = sshra.s32 2, 3
      %p143 = scmp.gt.s32.totalorder %s142, 0
      // Predicated region
      $region50: #{custom-call.4} parent=48 // pred_check
        %p144 = pneg %p143
      $region51: #{custom-call.4} parent=48 // pred_check_branch
        %146 = sbr.rel (%p144) target = $region53
      $region52: #{custom-call.4} parent=48 // pred_region
        %s147 = ssub.s32 %s142, 1
        %s148 = smul.u32 %s147, 128
        %s149 = sshra.s32 %s148, 4
        %s150 = scalar_lea.vmem %s2, %s149
        %v151 = vld [vmem:[%s2] sm:$0xff]
        // While loop
        $region54: #{custom-call.4} parent=52 // loop_pre_header
          _
        $region55: #{custom-call.4} parent=52 // loop_header
          %s152 = sphi %s2, %s174
          %s153 = sphi [#allocation5], %s175
          %v154 = vphi %v151, %v176
          %s155 = ssub.s32 %s150, 64
          %p156 = scmp.gt.s32.totalorder %s152, %s155
        $region56: #{custom-call.4} parent=52 // loop_header_branch
          %158 = sbr.rel (%p156) target = $region60
        $region57: #{custom-call.4} parent=52 // loop_body
          %159 = vst [vmem:[%s153] sm:$0xff] %v154
          %v160 = vld [vmem:[%s152 + $0x8] sm:$0xff]
          %161 = vst [vmem:[%s153 + $0x8] sm:$0xff] %v160
          %v162 = vld [vmem:[%s152 + $0x10] sm:$0xff]
          %163 = vst [vmem:[%s153 + $0x10] sm:$0xff] %v162
          %v164 = vld [vmem:[%s152 + $0x18] sm:$0xff]
          %165 = vst [vmem:[%s153 + $0x18] sm:$0xff] %v164
          %v166 = vld [vmem:[%s152 + $0x20] sm:$0xff]
          %167 = vst [vmem:[%s153 + $0x20] sm:$0xff] %v166
          %v168 = vld [vmem:[%s152 + $0x28] sm:$0xff]
          %169 = vst [vmem:[%s153 + $0x28] sm:$0xff] %v168
          %v170 = vld [vmem:[%s152 + $0x30] sm:$0xff]
          %171 = vst [vmem:[%s153 + $0x30] sm:$0xff] %v170
          %v172 = vld [vmem:[%s152 + $0x38] sm:$0xff]
          %173 = vst [vmem:[%s153 + $0x38] sm:$0xff] %v172
        $region58: #{custom-call.4} parent=52 // loop_footer
          %s174 = scalar_lea.vmem %s152, 64
          %s175 = scalar_lea.vmem %s153, 64
          %v176 = vld [vmem:[%s152 + $0x40] sm:$0xff]
        $region59: #{custom-call.4} parent=52 // loop_footer_branch
          %177 = sbr.rel target = $region55
        $region60: #{custom-call.4} parent=52 // loop_exit
          _
        // While loop
        $region61: #{custom-call.4} parent=52 // loop_pre_header
          _
        $region62: #{custom-call.4} parent=52 // loop_header
          %s178 = sphi %s152, %s186
          %s179 = sphi %s153, %s187
          %v180 = vphi %v154, %v180
          %p181 = scmp.gt.s32.totalorder %s178, %s150
        $region63: #{custom-call.4} parent=52 // loop_header_branch
          %183 = sbr.rel (%p181) target = $region67
        $region64: #{custom-call.4} parent=52 // loop_body
          %v184 = vld [vmem:[%s178] sm:$0xff]
          %185 = vst [vmem:[%s179] sm:$0xff] %v184
        $region65: #{custom-call.4} parent=52 // loop_footer
          %s186 = scalar_lea.vmem %s178, 8
          %s187 = scalar_lea.vmem %s179, 8
        $region66: #{custom-call.4} parent=52 // loop_footer_branch
          %188 = sbr.rel target = $region62
        $region67: #{custom-call.4} parent=52 // loop_exit
          _
      $region53: #{custom-call.4} parent=48 // pred_fallthru
        _
      %s189 = sand.u32 2, 7
      %s190 = sshll.u32 1, %s189
      %s191 = ssub.s32 %s190, 1
      %s192 = smul.u32 %s142, 128
      %s193 = sshra.s32 %s192, 4
      %s194 = scalar_lea.vmem [#allocation5], %s193
      %s195 = smul.u32 %s142, 128
      %s196 = sshra.s32 %s195, 4
      %s197 = scalar_lea.vmem %s2, %s196
      %v198 = vld [vmem:[%s197] sm:%s191]
      %199 = vst [vmem:[%s194] sm:%s191] %v198
    $region49: #{custom-call.4} parent=1 // pred_fallthru
      _
    %p201 = scmp.gt.s32.totalorder 2, 0
    // Predicated region
    $region68: #{custom-call.4} parent=1 // pred_check
      %p202 = pneg %p201
    $region69: #{custom-call.4} parent=1 // pred_check_branch
      %204 = sbr.rel (%p202) target = $region71
    $region70: #{custom-call.4} parent=1 // pred_region
      %s205 = sshra.s32 2, 3
      %p206 = scmp.gt.s32.totalorder %s205, 0
      // Predicated region
      $region72: #{custom-call.4} parent=70 // pred_check
        %p207 = pneg %p206
      $region73: #{custom-call.4} parent=70 // pred_check_branch
        %209 = sbr.rel (%p207) target = $region75
      $region74: #{custom-call.4} parent=70 // pred_region
        %s210 = ssub.s32 %s205, 1
        %s211 = smul.u32 %s210, 128
        %s212 = sshra.s32 %s211, 4
        %s213 = scalar_lea.vmem %s3, %s212
        %v214 = vld [vmem:[%s3] sm:$0xff]
        // While loop
        $region76: #{custom-call.4} parent=74 // loop_pre_header
          _
        $region77: #{custom-call.4} parent=74 // loop_header
          %s215 = sphi %s3, %s237
          %s216 = sphi [#allocation7], %s238
          %v217 = vphi %v214, %v239
          %s218 = ssub.s32 %s213, 64
          %p219 = scmp.gt.s32.totalorder %s215, %s218
        $region78: #{custom-call.4} parent=74 // loop_header_branch
          %221 = sbr.rel (%p219) target = $region82
        $region79: #{custom-call.4} parent=74 // loop_body
          %222 = vst [vmem:[%s216] sm:$0xff] %v217
          %v223 = vld [vmem:[%s215 + $0x8] sm:$0xff]
          %224 = vst [vmem:[%s216 + $0x8] sm:$0xff] %v223
          %v225 = vld [vmem:[%s215 + $0x10] sm:$0xff]
          %226 = vst [vmem:[%s216 + $0x10] sm:$0xff] %v225
          %v227 = vld [vmem:[%s215 + $0x18] sm:$0xff]
          %228 = vst [vmem:[%s216 + $0x18] sm:$0xff] %v227
          %v229 = vld [vmem:[%s215 + $0x20] sm:$0xff]
          %230 = vst [vmem:[%s216 + $0x20] sm:$0xff] %v229
          %v231 = vld [vmem:[%s215 + $0x28] sm:$0xff]
          %232 = vst [vmem:[%s216 + $0x28] sm:$0xff] %v231
          %v233 = vld [vmem:[%s215 + $0x30] sm:$0xff]
          %234 = vst [vmem:[%s216 + $0x30] sm:$0xff] %v233
          %v235 = vld [vmem:[%s215 + $0x38] sm:$0xff]
          %236 = vst [vmem:[%s216 + $0x38] sm:$0xff] %v235
        $region80: #{custom-call.4} parent=74 // loop_footer
          %s237 = scalar_lea.vmem %s215, 64
          %s238 = scalar_lea.vmem %s216, 64
          %v239 = vld [vmem:[%s215 + $0x40] sm:$0xff]
        $region81: #{custom-call.4} parent=74 // loop_footer_branch
          %240 = sbr.rel target = $region77
        $region82: #{custom-call.4} parent=74 // loop_exit
          _
        // While loop
        $region83: #{custom-call.4} parent=74 // loop_pre_header
          _
        $region84: #{custom-call.4} parent=74 // loop_header
          %s241 = sphi %s215, %s249
          %s242 = sphi %s216, %s250
          %v243 = vphi %v217, %v243
          %p244 = scmp.gt.s32.totalorder %s241, %s213
        $region85: #{custom-call.4} parent=74 // loop_header_branch
          %246 = sbr.rel (%p244) target = $region89
        $region86: #{custom-call.4} parent=74 // loop_body
          %v247 = vld [vmem:[%s241] sm:$0xff]
          %248 = vst [vmem:[%s242] sm:$0xff] %v247
        $region87: #{custom-call.4} parent=74 // loop_footer
          %s249 = scalar_lea.vmem %s241, 8
          %s250 = scalar_lea.vmem %s242, 8
        $region88: #{custom-call.4} parent=74 // loop_footer_branch
          %251 = sbr.rel target = $region84
        $region89: #{custom-call.4} parent=74 // loop_exit
          _
      $region75: #{custom-call.4} parent=70 // pred_fallthru
        _
      %s252 = sand.u32 2, 7
      %s253 = sshll.u32 1, %s252
      %s254 = ssub.s32 %s253, 1
      %s255 = smul.u32 %s205, 128
      %s256 = sshra.s32 %s255, 4
      %s257 = scalar_lea.vmem [#allocation7], %s256
      %s258 = smul.u32 %s205, 128
      %s259 = sshra.s32 %s258, 4
      %s260 = scalar_lea.vmem %s3, %s259
      %v261 = vld [vmem:[%s260] sm:%s254]
      %262 = vst [vmem:[%s257] sm:%s254] %v261
    $region71: #{custom-call.4} parent=1 // pred_fallthru
      _
    %s264 = sshll.u32 1, 2
    %s265 = ssub.s32 %s264, 1
    %v266 = vld [vmem:[#allocation1] sm:%s265]
    %267 = vst [vmem:[#allocation0] sm:%s265] %v266
    %s269 = sshll.u32 1, 2
    %s270 = ssub.s32 %s269, 1
    %v271 = vld [vmem:[#allocation3] sm:%s270]
    %272 = vst [vmem:[#allocation2] sm:%s270] %v271
    %s274 = sshll.u32 1, 2
    %s275 = ssub.s32 %s274, 1
    %v276 = vld [vmem:[#allocation5] sm:%s275]
    %277 = vst [vmem:[#allocation4] sm:%s275] %v276
    %s279 = sshll.u32 1, 2
    %s280 = ssub.s32 %s279, 1
    %v281 = vld [vmem:[#allocation7] sm:%s280]
    %282 = vst [vmem:[#allocation6] sm:%s280] %v281
    %s283 = smov [#allocation20]
    %v284 = vld [vmem:[#allocation0] sm:$0xff]
    %285 = vst [vmem:[%s283] sm:$0xff] %v284
    %s286 = smov [#allocation21]
    %v287 = vld [vmem:[#allocation2] sm:$0xff]
    %288 = vst [vmem:[%s286] sm:$0xff] %v287
    %s289 = smov [#allocation22]
    %v290 = vld [vmem:[#allocation4] sm:$0xff]
    %291 = vst [vmem:[%s289] sm:$0xff] %v290
    %s292 = smov [#allocation23]
    %v293 = vld [vmem:[#allocation6] sm:$0xff]
    %294 = vst [vmem:[%s292] sm:$0xff] %v293
    %295 = vst [vmem:[#allocation12] sm:$0xff] 0.0
    %296 = vst [vmem:[#allocation14] sm:$0xff] 0.0
    %297 = vst [vmem:[#allocation16] sm:$0xff] 0.0
    %298 = vst [vmem:[#allocation18] sm:$0xff] 0.0
    %s299 = smov [#allocation12]
    %v300 = vlaneseq
    %v301 = vand.u32 %v300, 127
    %v302 = vmov %v301
    %v303 = vlaneseq
    %v304 = vshrl.u32 %v303, 7
    %v305 = vmov %v304
    %v306 = vld [vmem:[%s299] sm:$0x3]
    %vm309 = vcmp.eq.s32.totalorder %v305, %v302
    %v310 = vsel %vm309, 1.0, %v306
    %311 = vst [vmem:[%s299] sm:$0x3] %v310
    %s312 = smov [#allocation18]
    %v313 = vlaneseq
    %v314 = vand.u32 %v313, 127
    %v315 = vmov %v314
    %v316 = vlaneseq
    %v317 = vshrl.u32 %v316, 7
    %v318 = vmov %v317
    %v319 = vld [vmem:[%s312] sm:$0x3]
    %vm322 = vcmp.eq.s32.totalorder %v318, %v315
    %v323 = vsel %vm322, 1.0, %v319
    %324 = vst [vmem:[%s312] sm:$0x3] %v323
    // While loop
    $region90: #{custom-call.4} parent=1 // loop_pre_header
      _
    $region91: #{custom-call.4} parent=1 // loop_header
      %s326 = sphi 0, %s868
      %v327 = vlaneseq
      %v328 = vand.u32 %v327, 127
      %v329 = vmov %v328
      %v330 = vlaneseq
      %v331 = vshrl.u32 %v330, 7
      %v332 = vmov %v331
      %s333 = smov [#allocation20]
      %v334 = vlaneseq
      %v335 = vand.u32 %v334, 127
      %vm336 = vcmp.ge.s32.totalorder %v335, 0
      %vm337 = vcmp.lt.s32.totalorder %v335, 2
      %vm338 = vmand %vm336, %vm337
      %v339 = vld [vmem:[%s333] sm:$0x3]
      %v340 = vsel %vm338, %v339, 0.0
      %v341 = vmul.f32 %v340, %v340
      %vm344 = vcmp.eq.s32.totalorder %v332, %v329
      %v345 = vsel %vm344, 0.0, %v341
      %v346 = vlaneseq
      %v347 = vand.u32 %v346, 127
      %v348 = vmov %v347
      %v349 = vlaneseq
      %v350 = vshrl.u32 %v349, 7
      %v351 = vmov %v350
      %s352 = smov [#allocation21]
      %v353 = vlaneseq
      %v354 = vand.u32 %v353, 127
      %vm355 = vcmp.ge.s32.totalorder %v354, 0
      %vm356 = vcmp.lt.s32.totalorder %v354, 2
      %vm357 = vmand %vm355, %vm356
      %v358 = vld [vmem:[%s352] sm:$0x3]
      %v359 = vsel %vm357, %v358, 0.0
      %v360 = vmul.f32 %v359, %v359
      %v361 = vadd.f32 %v345, %v360
      %v362 = vadd.f32 %v341, %v360
      %v363 = vlaneseq
      %v364 = vand.u32 %v363, 127
      %v365 = vmov %v364
      %v366 = vlaneseq
      %v367 = vshrl.u32 %v366, 7
      %v368 = vmov %v367
      %s369 = smov [#allocation22]
      %v370 = vlaneseq
      %v371 = vand.u32 %v370, 127
      %vm372 = vcmp.ge.s32.totalorder %v371, 0
      %vm373 = vcmp.lt.s32.totalorder %v371, 2
      %vm374 = vmand %vm372, %vm373
      %v375 = vld [vmem:[%s369] sm:$0x3]
      %v376 = vsel %vm374, %v375, 0.0
      %v377 = vmul.f32 %v376, %v376
      %v378 = vadd.f32 %v361, %v377
      %v379 = vadd.f32 %v362, %v377
      %v380 = vlaneseq
      %v381 = vand.u32 %v380, 127
      %v382 = vmov %v381
      %v383 = vlaneseq
      %v384 = vshrl.u32 %v383, 7
      %v385 = vmov %v384
      %s386 = smov [#allocation23]
      %v387 = vlaneseq
      %v388 = vand.u32 %v387, 127
      %vm389 = vcmp.ge.s32.totalorder %v388, 0
      %vm390 = vcmp.lt.s32.totalorder %v388, 2
      %vm391 = vmand %vm389, %vm390
      %v392 = vld [vmem:[%s386] sm:$0x3]
      %v393 = vsel %vm391, %v392, 0.0
      %v394 = vmul.f32 %v393, %v393
      %vm397 = vcmp.eq.s32.totalorder %v385, %v382
      %v398 = vsel %vm397, 0.0, %v394
      %v399 = vadd.f32 %v378, %v398
      %v400 = vadd.f32 %v379, %v394
      %401 = vadd.xlane.f32.xlu0 %v400
      %v402 = vpop.xlane.xlu0 %401
      %v403 = vrot.slane %v402, 4
      %v404 = vadd.f32 %v402, %v403
      %v405 = vrot.slane %v404, 2
      %v406 = vadd.f32 %v404, %v405
      %v407 = vrot.slane %v406, 1
      %v408 = vadd.f32 %v406, %v407
      %409 = vadd.xlane.f32.xlu0 %v399
      %v410 = vpop.xlane.xlu0 %409
      %v411 = vrot.slane %v410, 4
      %v412 = vadd.f32 %v410, %v411
      %v413 = vrot.slane %v412, 2
      %v414 = vadd.f32 %v412, %v413
      %v415 = vrot.slane %v414, 1
      %v416 = vadd.f32 %v414, %v415
      %s417 = vtos %v416
      %s418 = vtos %v408
      %s419 = smul.f32 1e-10, %s418
      %p420 = scmp.le.f32.partialorder %s417, %s419
      %p421 = scmp.ge.s32.totalorder %s326, 15
      %p422 = por %p420, %p421
    $region92: #{custom-call.4} parent=1 // loop_header_branch
      %870 = sbr.rel (%p422) target = $region96
    $region93: #{custom-call.4} parent=1 // loop_body
      loop: start=0, step=1, limit=3
      $region97: #{custom-call.4} parent=93 // loop_pre_header
        _
      $region98: #{custom-call.4} parent=93 // loop_header
        %s424 = sphi 0, %s428
        %p425 = scmp.ge.s32.totalorder %s424, 3
      $region99: #{custom-call.4} parent=93 // loop_header_branch
        %427 = sbr.rel (%p425) target = $region103
      $region100: #{custom-call.4} parent=93 // loop_body
        #allocation24 [shape = 'f32[1024]{0}', space=vmem, size = 0x1000, scoped, tag = 'a_tl_diag vmem']
        #allocation25 [shape = 'f32[1024]{0}', space=vmem, size = 0x1000, scoped, tag = 'a_tr_diag vmem']
        #allocation26 [shape = 'f32[1024]{0}', space=vmem, size = 0x1000, scoped, tag = 'a_br_diag vmem']
        #allocation27 [shape = 'f32[1024]{0}', space=vmem, size = 0x1000, scoped, tag = 'rt1 vmem']
        #allocation28 [shape = 'f32[1024]{0}', space=vmem, size = 0x1000, scoped, tag = 'rt2 vmem']
        #allocation29 [shape = 'f32[1024]{0}', space=vmem, size = 0x1000, scoped, tag = 'c vmem']
        #allocation30 [shape = 'f32[1024]{0}', space=vmem, size = 0x1000, scoped, tag = 's vmem']
        #allocation31 [shape = 'f32[4096]{0}', space=vmem, size = 0x4000, scoped, tag = 'c broadcast']
        #allocation32 [shape = 'f32[4096]{0}', space=vmem, size = 0x4000, scoped, tag = 's broadcast']
        %s429 = smov [#allocation20]
        %s430 = smov [#allocation24]
        %v431 = vlaneseq
        %v432 = vand.u32 %v431, 127
        %v433 = vmov %v432
        %v434 = vlaneseq
        %v435 = vshrl.u32 %v434, 7
        %v436 = vmov %v435
        %v437 = vld [vmem:[%s429] sm:$0x3]
        %vm440 = vcmp.eq.s32.totalorder %v436, %v433
        %v441 = vsel %vm440, %v437, 0.0
        %v442 = vrot.slane %v441, 4
        %v443 = vadd.f32 %v441, %v442
        %v444 = vrot.slane %v443, 2
        %v445 = vadd.f32 %v443, %v444
        %v446 = vrot.slane %v445, 1
        %v447 = vadd.f32 %v445, %v446
        %448 = vst [vmem:[%s430] sm:$0x1] %v447
        %s449 = smov [#allocation21]
        %s450 = smov [#allocation25]
        %v451 = vlaneseq
        %v452 = vand.u32 %v451, 127
        %v453 = vmov %v452
        %v454 = vlaneseq
        %v455 = vshrl.u32 %v454, 7
        %v456 = vmov %v455
        %v457 = vld [vmem:[%s449] sm:$0x3]
        %vm460 = vcmp.eq.s32.totalorder %v456, %v453
        %v461 = vsel %vm460, %v457, 0.0
        %v462 = vrot.slane %v461, 4
        %v463 = vadd.f32 %v461, %v462
        %v464 = vrot.slane %v463, 2
        %v465 = vadd.f32 %v463, %v464
        %v466 = vrot.slane %v465, 1
        %v467 = vadd.f32 %v465, %v466
        %468 = vst [vmem:[%s450] sm:$0x1] %v467
        %s469 = smov [#allocation23]
        %s470 = smov [#allocation26]
        %v471 = vlaneseq
        %v472 = vand.u32 %v471, 127
        %v473 = vmov %v472
        %v474 = vlaneseq
        %v475 = vshrl.u32 %v474, 7
        %v476 = vmov %v475
        %v477 = vld [vmem:[%s469] sm:$0x3]
        %vm480 = vcmp.eq.s32.totalorder %v476, %v473
        %v481 = vsel %vm480, %v477, 0.0
        %v482 = vrot.slane %v481, 4
        %v483 = vadd.f32 %v481, %v482
        %v484 = vrot.slane %v483, 2
        %v485 = vadd.f32 %v483, %v484
        %v486 = vrot.slane %v485, 1
        %v487 = vadd.f32 %v485, %v486
        %488 = vst [vmem:[%s470] sm:$0x1] %v487
        %s489 = smov [#allocation29]
        %s490 = smov [#allocation30]
        %s491 = smov [#allocation24]
        %v492 = vld [vmem:[%s491] sm:$0xff]
        %s493 = smov [#allocation25]
        %v494 = vld [vmem:[%s493] sm:$0xff]
        %s495 = smov [#allocation26]
        %v496 = vld [vmem:[%s495] sm:$0xff]
        %v497 = vsub.f32 %v496, %v492
        %v498 = vmul.f32 2.0, %v494
        %v499 = vrcp.pop %v498
        %v500 = vmul.f32 %v497, %v499
        %vm501 = vcmp.ge.f32.partialorder %v500, 0.0
        %v502 = vmul.f32 %v500, %v500
        %v503 = vadd.f32 1.0, %v502
        %v504 = vrsqrt.pop %v503
        %v505 = vmul.f32 %v503, %v504
        %vm506 = vcmp.eq.f32.partialorder %v503, inf
        %v507 = vsel %vm506, %v503, %v505
        %vm508 = vcmp.eq.f32.partialorder %v503, 0.0
        %v509 = vand.u32 %v503, 2147483648
        %v510 = vsel %vm508, %v509, %v507
        %v511 = vxor.u32 %v510, 2147483648
        %v512 = vsel %vm501, %v510, %v511
        %v513 = vadd.f32 %v500, %v512
        %v514 = vrcp.pop %v513
        %v515 = vand.u32 2147483647, %v492
        %v516 = vand.u32 2147483647, %v494
        %v517 = vand.u32 2147483647, %v496
        %v518 = vmin.f32 %v515, %v517
        %v519 = vmul.f32 1.1920929e-08, %v518
        %vm520 = vcmp.le.f32.partialorder %v516, %v519
        %v521 = vsel %vm520, 0.0, %v514
        %v522 = vmul.f32 %v521, %v521
        %v523 = vadd.f32 1.0, %v522
        %v524 = vrsqrt.pop %v523
        %v525 = vmul.f32 %v521, %v524
        %v526 = vmul.f32 %v521, %v494
        %v527 = vsub.f32 %v492, %v526
        %v528 = vmul.f32 %v521, %v494
        %v529 = vadd.f32 %v496, %v528
        %s530 = smov [#allocation27]
        %531 = vst [vmem:[%s530] sm:$0xff] %v527
        %s532 = smov [#allocation28]
        %533 = vst [vmem:[%s532] sm:$0xff] %v529
        %s534 = smov %s489
        %535 = vst [vmem:[%s534] sm:$0xff] %v524
        %s536 = smov %s490
        %537 = vst [vmem:[%s536] sm:$0xff] %v525
        %s538 = smov [#allocation29]
        %v539 = vld [vmem:[%s538] ss:$0 sm:$0xff]
        %v540 = vlaneseq
        %v541 = vand.u32 %v540, 127
        %v542 = vmov %v541
        %v543 = vlaneseq
        %v544 = vshrl.u32 %v543, 7
        %v545 = vmov %v544
        %vm547 = vcmp.eq.s32.totalorder %v545, %v542
        %v548 = vsel %vm547, %v539, 0.0
        %549 = vadd.xlane.f32.xlu0 %v548
        %v550 = vpop.xlane.xlu0 %549
        %s551 = smov [#allocation31]
        %552 = vst [vmem:[%s551] sm:$0xff] %v550
        %s553 = smov [#allocation30]
        %v554 = vld [vmem:[%s553] ss:$0 sm:$0xff]
        %v555 = vlaneseq
        %v556 = vand.u32 %v555, 127
        %v557 = vmov %v556
        %v558 = vlaneseq
        %v559 = vshrl.u32 %v558, 7
        %v560 = vmov %v559
        %vm562 = vcmp.eq.s32.totalorder %v560, %v557
        %v563 = vsel %vm562, %v554, 0.0
        %564 = vadd.xlane.f32.xlu0 %v563
        %v565 = vpop.xlane.xlu0 %564
        %s566 = smov [#allocation32]
        %567 = vst [vmem:[%s566] sm:$0xff] %v565
        %s568 = smov [#allocation31]
        %v569 = vld [vmem:[%s568] sm:$0xff]
        %s570 = smov [#allocation32]
        %v571 = vld [vmem:[%s570] sm:$0xff]
        %s572 = smov [#allocation20]
        %s573 = smov [#allocation21]
        %s574 = smov [#allocation22]
        %s575 = smov [#allocation23]
        %v576 = vld [vmem:[%s572] sm:$0x3]
        %v577 = vld [vmem:[%s573] sm:$0x3]
        %v578 = vld [vmem:[%s574] sm:$0x3]
        %v579 = vld [vmem:[%s575] sm:$0x3]
        %v580 = vmul.f32 %v569, %v576
        %v581 = vmul.f32 %v571, %v578
        %v582 = vsub.f32 %v580, %v581
        %v583 = vmul.f32 %v569, %v577
        %v584 = vmul.f32 %v571, %v579
        %v585 = vsub.f32 %v583, %v584
        %v586 = vmul.f32 %v571, %v576
        %v587 = vmul.f32 %v569, %v578
        %v588 = vadd.f32 %v586, %v587
        %v589 = vmul.f32 %v571, %v577
        %v590 = vmul.f32 %v569, %v579
        %v591 = vadd.f32 %v589, %v590
        %592 = vst [vmem:[%s572] sm:$0x3] %v582
        %593 = vst [vmem:[%s573] sm:$0x3] %v585
        %594 = vst [vmem:[%s574] sm:$0x3] %v588
        %595 = vst [vmem:[%s575] sm:$0x3] %v591
        %s596 = smov [#allocation29]
        %v597 = vld [vmem:[%s596] ss:$0 sm:$0xff]
        %s598 = smov [#allocation30]
        %v599 = vld [vmem:[%s598] ss:$0 sm:$0xff]
        %s600 = smov [#allocation20]
        %s601 = smov [#allocation21]
        %s602 = smov [#allocation22]
        %s603 = smov [#allocation23]
        %v604 = vld [vmem:[%s600] sm:$0x3]
        %v605 = vld [vmem:[%s601] sm:$0x3]
        %v606 = vld [vmem:[%s602] sm:$0x3]
        %v607 = vld [vmem:[%s603] sm:$0x3]
        %v608 = vmul.f32 %v597, %v604
        %v609 = vmul.f32 %v599, %v605
        %v610 = vsub.f32 %v608, %v609
        %v611 = vmul.f32 %v599, %v604
        %v612 = vmul.f32 %v597, %v605
        %v613 = vadd.f32 %v611, %v612
        %v614 = vmul.f32 %v597, %v606
        %v615 = vmul.f32 %v599, %v607
        %v616 = vsub.f32 %v614, %v615
        %v617 = vmul.f32 %v599, %v606
        %v618 = vmul.f32 %v597, %v607
        %v619 = vadd.f32 %v617, %v618
        %620 = vst [vmem:[%s600] sm:$0x3] %v610
        %621 = vst [vmem:[%s601] sm:$0x3] %v613
        %622 = vst [vmem:[%s602] sm:$0x3] %v616
        %623 = vst [vmem:[%s603] sm:$0x3] %v619
        %s624 = smov [#allocation20]
        %s625 = smov [#allocation27]
        %v626 = vlaneseq
        %v627 = vand.u32 %v626, 127
        %v628 = vmov %v627
        %v629 = vlaneseq
        %v630 = vshrl.u32 %v629, 7
        %v631 = vmov %v630
        %v632 = vld [vmem:[%s625] ss:$0 sm:$0xff]
        %v633 = vld [vmem:[%s624] sm:$0x3]
        %vm636 = vcmp.eq.s32.totalorder %v631, %v628
        %v637 = vsel %vm636, %v632, %v633
        %638 = vst [vmem:[%s624] sm:$0x3] %v637
        %s639 = smov [#allocation21]
        %v640 = vlaneseq
        %v641 = vand.u32 %v640, 127
        %v642 = vmov %v641
        %v643 = vlaneseq
        %v644 = vshrl.u32 %v643, 7
        %v645 = vmov %v644
        %v646 = vld [vmem:[%s639] sm:$0x3]
        %vm649 = vcmp.eq.s32.totalorder %v645, %v642
        %v650 = vsel %vm649, 0.0, %v646
        %651 = vst [vmem:[%s639] sm:$0x3] %v650
        %s652 = smov [#allocation22]
        %v653 = vlaneseq
        %v654 = vand.u32 %v653, 127
        %v655 = vmov %v654
        %v656 = vlaneseq
        %v657 = vshrl.u32 %v656, 7
        %v658 = vmov %v657
        %v659 = vld [vmem:[%s652] sm:$0x3]
        %vm662 = vcmp.eq.s32.totalorder %v658, %v655
        %v663 = vsel %vm662, 0.0, %v659
        %664 = vst [vmem:[%s652] sm:$0x3] %v663
        %s665 = smov [#allocation23]
        %s666 = smov [#allocation28]
        %v667 = vlaneseq
        %v668 = vand.u32 %v667, 127
        %v669 = vmov %v668
        %v670 = vlaneseq
        %v671 = vshrl.u32 %v670, 7
        %v672 = vmov %v671
        %v673 = vld [vmem:[%s666] ss:$0 sm:$0xff]
        %v674 = vld [vmem:[%s665] sm:$0x3]
        %vm677 = vcmp.eq.s32.totalorder %v672, %v669
        %v678 = vsel %vm677, %v673, %v674
        %679 = vst [vmem:[%s665] sm:$0x3] %v678
        %s680 = smov [#allocation20]
        %s681 = smov [#allocation21]
        %v682 = vld [vmem:[%s681] sm:$0x3]
        %683 = vrot.lane.b32.xlu0 %v682, 1
        %v684 = vpop.permute.xlu0 %683
        %v685 = vld [vmem:[%s680] sm:$0x3]
        %v686 = vld [vmem:[%s680] sm:$0x3]
        %687 = vrot.lane.b32.xlu0 %v686, 1
        %v688 = vpop.permute.xlu0 %687
        %v689 = vlaneseq
        %v690 = vand.u32 %v689, 127
        %vm691 = vcmp.eq.s32.totalorder %v690, 0
        %v692 = vsel %vm691, %v686, %v688
        %v693 = vlaneseq
        %v694 = vand.u32 %v693, 127
        %vm695 = vcmp.eq.s32.totalorder %v694, 1
        %v696 = vsel %vm695, %v684, %v692
        %v697 = vlaneseq
        %v698 = vand.u32 %v697, 127
        %vm699 = vcmp.ge.s32.totalorder %v698, 0
        %vm700 = vcmp.lt.s32.totalorder %v698, 2
        %vm701 = vmand %vm699, %vm700
        %v702 = vsel %vm701, %v696, 0.0
        %v703 = vld [vmem:[%s681] sm:$0x3]
        %704 = vrot.lane.b32.xlu0 %v703, 127
        %v705 = vpop.permute.xlu0 %704
        %v706 = vlaneseq
        %v707 = vand.u32 %v706, 127
        %vm708 = vcmp.eq.s32.totalorder %v707, 1
        %v709 = vsel %vm708, %v685, %v705
        %710 = vst [vmem:[%s680] sm:$0x3] %v702
        %711 = vst [vmem:[%s681] sm:$0x3] %v709
        %s712 = smov [#allocation22]
        %s713 = smov [#allocation23]
        %v714 = vld [vmem:[%s713] sm:$0x3]
        %715 = vrot.lane.b32.xlu0 %v714, 1
        %v716 = vpop.permute.xlu0 %715
        %v717 = vld [vmem:[%s712] sm:$0x3]
        %v718 = vld [vmem:[%s712] sm:$0x3]
        %719 = vrot.lane.b32.xlu0 %v718, 1
        %v720 = vpop.permute.xlu0 %719
        %v721 = vlaneseq
        %v722 = vand.u32 %v721, 127
        %vm723 = vcmp.eq.s32.totalorder %v722, 0
        %v724 = vsel %vm723, %v718, %v720
        %v725 = vlaneseq
        %v726 = vand.u32 %v725, 127
        %vm727 = vcmp.eq.s32.totalorder %v726, 1
        %v728 = vsel %vm727, %v716, %v724
        %v729 = vlaneseq
        %v730 = vand.u32 %v729, 127
        %vm731 = vcmp.ge.s32.totalorder %v730, 0
        %vm732 = vcmp.lt.s32.totalorder %v730, 2
        %vm733 = vmand %vm731, %vm732
        %v734 = vsel %vm733, %v728, 0.0
        %v735 = vld [vmem:[%s713] sm:$0x3]
        %736 = vrot.lane.b32.xlu0 %v735, 127
        %v737 = vpop.permute.xlu0 %736
        %v738 = vlaneseq
        %v739 = vand.u32 %v738, 127
        %vm740 = vcmp.eq.s32.totalorder %v739, 1
        %v741 = vsel %vm740, %v717, %v737
        %742 = vst [vmem:[%s712] sm:$0x3] %v734
        %743 = vst [vmem:[%s713] sm:$0x3] %v741
        %s744 = smov [#allocation20]
        %s745 = smov [#allocation22]
        %v746 = vld [vmem:[%s744] ss:$0 sm:$0xff]
        %s748 = scalar_lea.vmem %s744, 4294967295
        %v749 = vld [vmem:[%s748] sm:$0x2]
        %v750 = vlaneseq
        %v751 = vshrl.u32 %v750, 7
        %vm752 = vcmp.eq.s32.totalorder %v751, 0
        %v753 = vsel %vm752, %v746, %v749
        %s754 = scalar_lea.vmem %s744, 1
        %v755 = vld [vmem:[%s754] ss:$0 sm:$0xff]
        %756 = vst [vmem:[%s744] sm:$0x3] %v753
        %v757 = vld [vmem:[%s745] ss:$0 sm:$0xff]
        %s758 = scalar_lea.vmem %s744, 1
        %759 = vst [vmem:[%s758] sm:$0x1] %v757
        %s760 = scalar_lea.vmem %s745, 1
        %v761 = vld [vmem:[%s760] sm:$0x1]
        %v762 = vlaneseq
        %v763 = vshrl.u32 %v762, 7
        %vm764 = vcmp.eq.s32.totalorder %v763, 1
        %v765 = vsel %vm764, %v755, %v761
        %v766 = vld [vmem:[%s745] ss:$0 sm:$0xff]
        %767 = vst [vmem:[%s745] sm:$0x3] %v765
        %s768 = smov [#allocation21]
        %s769 = smov [#allocation23]
        %v770 = vld [vmem:[%s768] ss:$0 sm:$0xff]
        %s772 = scalar_lea.vmem %s768, 4294967295
        %v773 = vld [vmem:[%s772] sm:$0x2]
        %v774 = vlaneseq
        %v775 = vshrl.u32 %v774, 7
        %vm776 = vcmp.eq.s32.totalorder %v775, 0
        %v777 = vsel %vm776, %v770, %v773
        %s778 = scalar_lea.vmem %s768, 1
        %v779 = vld [vmem:[%s778] ss:$0 sm:$0xff]
        %780 = vst [vmem:[%s768] sm:$0x3] %v777
        %v781 = vld [vmem:[%s769] ss:$0 sm:$0xff]
        %s782 = scalar_lea.vmem %s768, 1
        %783 = vst [vmem:[%s782] sm:$0x1] %v781
        %s784 = scalar_lea.vmem %s769, 1
        %v785 = vld [vmem:[%s784] sm:$0x1]
        %v786 = vlaneseq
        %v787 = vshrl.u32 %v786, 7
        %vm788 = vcmp.eq.s32.totalorder %v787, 1
        %v789 = vsel %vm788, %v779, %v785
        %v790 = vld [vmem:[%s769] ss:$0 sm:$0xff]
        %791 = vst [vmem:[%s769] sm:$0x3] %v789
        %s792 = smov [#allocation31]
        %v793 = vld [vmem:[%s792] sm:$0xff]
        %s794 = smov [#allocation32]
        %v795 = vld [vmem:[%s794] sm:$0xff]
        %s796 = smov [#allocation12]
        %s797 = smov [#allocation14]
        %s798 = smov [#allocation16]
        %s799 = smov [#allocation18]
        %v800 = vld [vmem:[%s796] sm:$0x3]
        %v801 = vld [vmem:[%s797] sm:$0x3]
        %v802 = vld [vmem:[%s798] sm:$0x3]
        %v803 = vld [vmem:[%s799] sm:$0x3]
        %v804 = vmul.f32 %v793, %v800
        %v805 = vmul.f32 %v795, %v802
        %v806 = vsub.f32 %v804, %v805
        %v807 = vmul.f32 %v793, %v801
        %v808 = vmul.f32 %v795, %v803
        %v809 = vsub.f32 %v807, %v808
        %v810 = vmul.f32 %v795, %v800
        %v811 = vmul.f32 %v793, %v802
        %v812 = vadd.f32 %v810, %v811
        %v813 = vmul.f32 %v795, %v801
        %v814 = vmul.f32 %v793, %v803
        %v815 = vadd.f32 %v813, %v814
        %816 = vst [vmem:[%s796] sm:$0x3] %v806
        %817 = vst [vmem:[%s797] sm:$0x3] %v809
        %818 = vst [vmem:[%s798] sm:$0x3] %v812
        %819 = vst [vmem:[%s799] sm:$0x3] %v815
        %s820 = smov [#allocation12]
        %s821 = smov [#allocation16]
        %v822 = vld [vmem:[%s820] ss:$0 sm:$0xff]
        %s824 = scalar_lea.vmem %s820, 4294967295
        %v825 = vld [vmem:[%s824] sm:$0x2]
        %v826 = vlaneseq
        %v827 = vshrl.u32 %v826, 7
        %vm828 = vcmp.eq.s32.totalorder %v827, 0
        %v829 = vsel %vm828, %v822, %v825
        %s830 = scalar_lea.vmem %s820, 1
        %v831 = vld [vmem:[%s830] ss:$0 sm:$0xff]
        %832 = vst [vmem:[%s820] sm:$0x3] %v829
        %v833 = vld [vmem:[%s821] ss:$0 sm:$0xff]
        %s834 = scalar_lea.vmem %s820, 1
        %835 = vst [vmem:[%s834] sm:$0x1] %v833
        %s836 = scalar_lea.vmem %s821, 1
        %v837 = vld [vmem:[%s836] sm:$0x1]
        %v838 = vlaneseq
        %v839 = vshrl.u32 %v838, 7
        %vm840 = vcmp.eq.s32.totalorder %v839, 1
        %v841 = vsel %vm840, %v831, %v837
        %v842 = vld [vmem:[%s821] ss:$0 sm:$0xff]
        %843 = vst [vmem:[%s821] sm:$0x3] %v841
        %s844 = smov [#allocation14]
        %s845 = smov [#allocation18]
        %v846 = vld [vmem:[%s844] ss:$0 sm:$0xff]
        %s848 = scalar_lea.vmem %s844, 4294967295
        %v849 = vld [vmem:[%s848] sm:$0x2]
        %v850 = vlaneseq
        %v851 = vshrl.u32 %v850, 7
        %vm852 = vcmp.eq.s32.totalorder %v851, 0
        %v853 = vsel %vm852, %v846, %v849
        %s854 = scalar_lea.vmem %s844, 1
        %v855 = vld [vmem:[%s854] ss:$0 sm:$0xff]
        %856 = vst [vmem:[%s844] sm:$0x3] %v853
        %v857 = vld [vmem:[%s845] ss:$0 sm:$0xff]
        %s858 = scalar_lea.vmem %s844, 1
        %859 = vst [vmem:[%s858] sm:$0x1] %v857
        %s860 = scalar_lea.vmem %s845, 1
        %v861 = vld [vmem:[%s860] sm:$0x1]
        %v862 = vlaneseq
        %v863 = vshrl.u32 %v862, 7
        %vm864 = vcmp.eq.s32.totalorder %v863, 1
        %v865 = vsel %vm864, %v855, %v861
        %v866 = vld [vmem:[%s845] ss:$0 sm:$0xff]
        %867 = vst [vmem:[%s845] sm:$0x3] %v865
      $region101: #{custom-call.4} parent=93 // loop_footer
        %s428 = sadd.s32 1, %s424
      $region102: #{custom-call.4} parent=93 // loop_footer_branch
        %423 = sbr.rel target = $region98
      $region103: #{custom-call.4} parent=93 // loop_exit
        _
      %s868 = sadd.s32 %s326, 1
    $region94: #{custom-call.4} parent=1 // loop_footer
      _
    $region95: #{custom-call.4} parent=1 // loop_footer_branch
      %325 = sbr.rel target = $region91
    $region96: #{custom-call.4} parent=1 // loop_exit
      _
    %s871 = smov [#allocation20]
    %s872 = smov [#allocation8]
    %v873 = vlaneseq
    %v874 = vand.u32 %v873, 127
    %v875 = vmov %v874
    %v876 = vlaneseq
    %v877 = vshrl.u32 %v876, 7
    %v878 = vmov %v877
    %v879 = vld [vmem:[%s871] sm:$0x3]
    %vm882 = vcmp.eq.s32.totalorder %v878, %v875
    %v883 = vsel %vm882, %v879, 0.0
    %v884 = vrot.slane %v883, 4
    %v885 = vadd.f32 %v883, %v884
    %v886 = vrot.slane %v885, 2
    %v887 = vadd.f32 %v885, %v886
    %v888 = vrot.slane %v887, 1
    %v889 = vadd.f32 %v887, %v888
    %890 = vst [vmem:[%s872] sm:$0x1] %v889
    %s891 = smov [#allocation23]
    %s892 = smov [#allocation10]
    %v893 = vlaneseq
    %v894 = vand.u32 %v893, 127
    %v895 = vmov %v894
    %v896 = vlaneseq
    %v897 = vshrl.u32 %v896, 7
    %v898 = vmov %v897
    %v899 = vld [vmem:[%s891] sm:$0x3]
    %vm902 = vcmp.eq.s32.totalorder %v898, %v895
    %v903 = vsel %vm902, %v899, 0.0
    %v904 = vrot.slane %v903, 4
    %v905 = vadd.f32 %v903, %v904
    %v906 = vrot.slane %v905, 2
    %v907 = vadd.f32 %v905, %v906
    %v908 = vrot.slane %v907, 1
    %v909 = vadd.f32 %v907, %v908
    %910 = vst [vmem:[%s892] sm:$0x1] %v909
    %s912 = sshll.u32 1, 1
    %s913 = ssub.s32 %s912, 1
    %v915 = vld [vmem:[#allocation8] sm:%s913]
    %s916 = sshll.u32 1, 1
    %s917 = ssub.s32 %s916, 1
    %918 = vst [vmem:[#allocation9] sm:%s917] %v915
    %s920 = sshll.u32 1, 1
    %s921 = ssub.s32 %s920, 1
    %v923 = vld [vmem:[#allocation10] sm:%s921]
    %s924 = sshll.u32 1, 1
    %s925 = ssub.s32 %s924, 1
    %926 = vst [vmem:[#allocation11] sm:%s925] %v923
    %s928 = sshll.u32 1, 2
    %s929 = ssub.s32 %s928, 1
    %v931 = vld [vmem:[#allocation12] sm:%s929]
    %s932 = sshll.u32 1, 2
    %s933 = ssub.s32 %s932, 1
    %934 = vst [vmem:[#allocation13] sm:%s933] %v931
    %s936 = sshll.u32 1, 2
    %s937 = ssub.s32 %s936, 1
    %v939 = vld [vmem:[#allocation14] sm:%s937]
    %s940 = sshll.u32 1, 2
    %s941 = ssub.s32 %s940, 1
    %942 = vst [vmem:[#allocation15] sm:%s941] %v939
    %s944 = sshll.u32 1, 2
    %s945 = ssub.s32 %s944, 1
    %v947 = vld [vmem:[#allocation16] sm:%s945]
    %s948 = sshll.u32 1, 2
    %s949 = ssub.s32 %s948, 1
    %950 = vst [vmem:[#allocation17] sm:%s949] %v947
    %s952 = sshll.u32 1, 2
    %s953 = ssub.s32 %s952, 1
    %v955 = vld [vmem:[#allocation18] sm:%s953]
    %s956 = sshll.u32 1, 2
    %s957 = ssub.s32 %s956, 1
    %958 = vst [vmem:[#allocation19] sm:%s957] %v955
    // Predicated region
    $region104: #{custom-call.4} parent=1 // pred_check
      _
    $region105: #{custom-call.4} parent=1 // pred_check_branch
      %960 = sbr.rel (0) target = $region107
    $region106: #{custom-call.4} parent=1 // pred_region
      %p962 = scmp.gt.s32.totalorder 1, 0
      // Predicated region
      $region108: #{custom-call.4} parent=106 // pred_check
        %p963 = pneg %p962
      $region109: #{custom-call.4} parent=106 // pred_check_branch
        %965 = sbr.rel (%p963) target = $region111
      $region110: #{custom-call.4} parent=106 // pred_region
        %s966 = sshra.s32 1, 3
        %p967 = scmp.gt.s32.totalorder %s966, 0
        // Predicated region
        $region112: #{custom-call.4} parent=110 // pred_check
          %p968 = pneg %p967
        $region113: #{custom-call.4} parent=110 // pred_check_branch
          %970 = sbr.rel (%p968) target = $region115
        $region114: #{custom-call.4} parent=110 // pred_region
          %s971 = ssub.s32 %s966, 1
          %s972 = smul.u32 %s971, 128
          %s973 = sshra.s32 %s972, 4
          %s974 = scalar_lea.vmem [#allocation9], %s973
          %v975 = vld [vmem:[#allocation9] sm:$0xff]
          // While loop
          $region116: #{custom-call.4} parent=114 // loop_pre_header
            _
          $region117: #{custom-call.4} parent=114 // loop_header
            %s976 = sphi [#allocation9], %s998
            %s977 = sphi %s4, %s999
            %v978 = vphi %v975, %v1000
            %s979 = ssub.s32 %s974, 64
            %p980 = scmp.gt.s32.totalorder %s976, %s979
          $region118: #{custom-call.4} parent=114 // loop_header_branch
            %982 = sbr.rel (%p980) target = $region122
          $region119: #{custom-call.4} parent=114 // loop_body
            %983 = vst [vmem:[%s977] sm:$0xff] %v978
            %v984 = vld [vmem:[%s976 + $0x8] sm:$0xff]
            %985 = vst [vmem:[%s977 + $0x8] sm:$0xff] %v984
            %v986 = vld [vmem:[%s976 + $0x10] sm:$0xff]
            %987 = vst [vmem:[%s977 + $0x10] sm:$0xff] %v986
            %v988 = vld [vmem:[%s976 + $0x18] sm:$0xff]
            %989 = vst [vmem:[%s977 + $0x18] sm:$0xff] %v988
            %v990 = vld [vmem:[%s976 + $0x20] sm:$0xff]
            %991 = vst [vmem:[%s977 + $0x20] sm:$0xff] %v990
            %v992 = vld [vmem:[%s976 + $0x28] sm:$0xff]
            %993 = vst [vmem:[%s977 + $0x28] sm:$0xff] %v992
            %v994 = vld [vmem:[%s976 + $0x30] sm:$0xff]
            %995 = vst [vmem:[%s977 + $0x30] sm:$0xff] %v994
            %v996 = vld [vmem:[%s976 + $0x38] sm:$0xff]
            %997 = vst [vmem:[%s977 + $0x38] sm:$0xff] %v996
          $region120: #{custom-call.4} parent=114 // loop_footer
            %s998 = scalar_lea.vmem %s976, 64
            %s999 = scalar_lea.vmem %s977, 64
            %v1000 = vld [vmem:[%s976 + $0x40] sm:$0xff]
          $region121: #{custom-call.4} parent=114 // loop_footer_branch
            %1001 = sbr.rel target = $region117
          $region122: #{custom-call.4} parent=114 // loop_exit
            _
          // While loop
          $region123: #{custom-call.4} parent=114 // loop_pre_header
            _
          $region124: #{custom-call.4} parent=114 // loop_header
            %s1002 = sphi %s976, %s1010
            %s1003 = sphi %s977, %s1011
            %v1004 = vphi %v978, %v1004
            %p1005 = scmp.gt.s32.totalorder %s1002, %s974
          $region125: #{custom-call.4} parent=114 // loop_header_branch
            %1007 = sbr.rel (%p1005) target = $region129
          $region126: #{custom-call.4} parent=114 // loop_body
            %v1008 = vld [vmem:[%s1002] sm:$0xff]
            %1009 = vst [vmem:[%s1003] sm:$0xff] %v1008
          $region127: #{custom-call.4} parent=114 // loop_footer
            %s1010 = scalar_lea.vmem %s1002, 8
            %s1011 = scalar_lea.vmem %s1003, 8
          $region128: #{custom-call.4} parent=114 // loop_footer_branch
            %1012 = sbr.rel target = $region124
          $region129: #{custom-call.4} parent=114 // loop_exit
            _
        $region115: #{custom-call.4} parent=110 // pred_fallthru
          _
        %s1013 = sand.u32 1, 7
        %s1014 = sshll.u32 1, %s1013
        %s1015 = ssub.s32 %s1014, 1
        %s1016 = smul.u32 %s966, 128
        %s1017 = sshra.s32 %s1016, 4
        %s1018 = scalar_lea.vmem %s4, %s1017
        %s1019 = smul.u32 %s966, 128
        %s1020 = sshra.s32 %s1019, 4
        %s1021 = scalar_lea.vmem [#allocation9], %s1020
        %v1022 = vld [vmem:[%s1021] sm:%s1015]
        %1023 = vst [vmem:[%s1018] sm:%s1015] %v1022
      $region111: #{custom-call.4} parent=106 // pred_fallthru
        _
    $region107: #{custom-call.4} parent=1 // pred_fallthru
      _
    // Predicated region
    $region130: #{custom-call.4} parent=1 // pred_check
      _
    $region131: #{custom-call.4} parent=1 // pred_check_branch
      %1025 = sbr.rel (0) target = $region133
    $region132: #{custom-call.4} parent=1 // pred_region
      %p1027 = scmp.gt.s32.totalorder 1, 0
      // Predicated region
      $region134: #{custom-call.4} parent=132 // pred_check
        %p1028 = pneg %p1027
      $region135: #{custom-call.4} parent=132 // pred_check_branch
        %1030 = sbr.rel (%p1028) target = $region137
      $region136: #{custom-call.4} parent=132 // pred_region
        %s1031 = sshra.s32 1, 3
        %p1032 = scmp.gt.s32.totalorder %s1031, 0
        // Predicated region
        $region138: #{custom-call.4} parent=136 // pred_check
          %p1033 = pneg %p1032
        $region139: #{custom-call.4} parent=136 // pred_check_branch
          %1035 = sbr.rel (%p1033) target = $region141
        $region140: #{custom-call.4} parent=136 // pred_region
          %s1036 = ssub.s32 %s1031, 1
          %s1037 = smul.u32 %s1036, 128
          %s1038 = sshra.s32 %s1037, 4
          %s1039 = scalar_lea.vmem [#allocation11], %s1038
          %v1040 = vld [vmem:[#allocation11] sm:$0xff]
          // While loop
          $region142: #{custom-call.4} parent=140 // loop_pre_header
            _
          $region143: #{custom-call.4} parent=140 // loop_header
            %s1041 = sphi [#allocation11], %s1063
            %s1042 = sphi %s5, %s1064
            %v1043 = vphi %v1040, %v1065
            %s1044 = ssub.s32 %s1039, 64
            %p1045 = scmp.gt.s32.totalorder %s1041, %s1044
          $region144: #{custom-call.4} parent=140 // loop_header_branch
            %1047 = sbr.rel (%p1045) target = $region148
          $region145: #{custom-call.4} parent=140 // loop_body
            %1048 = vst [vmem:[%s1042] sm:$0xff] %v1043
            %v1049 = vld [vmem:[%s1041 + $0x8] sm:$0xff]
            %1050 = vst [vmem:[%s1042 + $0x8] sm:$0xff] %v1049
            %v1051 = vld [vmem:[%s1041 + $0x10] sm:$0xff]
            %1052 = vst [vmem:[%s1042 + $0x10] sm:$0xff] %v1051
            %v1053 = vld [vmem:[%s1041 + $0x18] sm:$0xff]
            %1054 = vst [vmem:[%s1042 + $0x18] sm:$0xff] %v1053
            %v1055 = vld [vmem:[%s1041 + $0x20] sm:$0xff]
            %1056 = vst [vmem:[%s1042 + $0x20] sm:$0xff] %v1055
            %v1057 = vld [vmem:[%s1041 + $0x28] sm:$0xff]
            %1058 = vst [vmem:[%s1042 + $0x28] sm:$0xff] %v1057
            %v1059 = vld [vmem:[%s1041 + $0x30] sm:$0xff]
            %1060 = vst [vmem:[%s1042 + $0x30] sm:$0xff] %v1059
            %v1061 = vld [vmem:[%s1041 + $0x38] sm:$0xff]
            %1062 = vst [vmem:[%s1042 + $0x38] sm:$0xff] %v1061
          $region146: #{custom-call.4} parent=140 // loop_footer
            %s1063 = scalar_lea.vmem %s1041, 64
            %s1064 = scalar_lea.vmem %s1042, 64
            %v1065 = vld [vmem:[%s1041 + $0x40] sm:$0xff]
          $region147: #{custom-call.4} parent=140 // loop_footer_branch
            %1066 = sbr.rel target = $region143
          $region148: #{custom-call.4} parent=140 // loop_exit
            _
          // While loop
          $region149: #{custom-call.4} parent=140 // loop_pre_header
            _
          $region150: #{custom-call.4} parent=140 // loop_header
            %s1067 = sphi %s1041, %s1075
            %s1068 = sphi %s1042, %s1076
            %v1069 = vphi %v1043, %v1069
            %p1070 = scmp.gt.s32.totalorder %s1067, %s1039
          $region151: #{custom-call.4} parent=140 // loop_header_branch
            %1072 = sbr.rel (%p1070) target = $region155
          $region152: #{custom-call.4} parent=140 // loop_body
            %v1073 = vld [vmem:[%s1067] sm:$0xff]
            %1074 = vst [vmem:[%s1068] sm:$0xff] %v1073
          $region153: #{custom-call.4} parent=140 // loop_footer
            %s1075 = scalar_lea.vmem %s1067, 8
            %s1076 = scalar_lea.vmem %s1068, 8
          $region154: #{custom-call.4} parent=140 // loop_footer_branch
            %1077 = sbr.rel target = $region150
          $region155: #{custom-call.4} parent=140 // loop_exit
            _
        $region141: #{custom-call.4} parent=136 // pred_fallthru
          _
        %s1078 = sand.u32 1, 7
        %s1079 = sshll.u32 1, %s1078
        %s1080 = ssub.s32 %s1079, 1
        %s1081 = smul.u32 %s1031, 128
        %s1082 = sshra.s32 %s1081, 4
        %s1083 = scalar_lea.vmem %s5, %s1082
        %s1084 = smul.u32 %s1031, 128
        %s1085 = sshra.s32 %s1084, 4
        %s1086 = scalar_lea.vmem [#allocation11], %s1085
        %v1087 = vld [vmem:[%s1086] sm:%s1080]
        %1088 = vst [vmem:[%s1083] sm:%s1080] %v1087
      $region137: #{custom-call.4} parent=132 // pred_fallthru
        _
    $region133: #{custom-call.4} parent=1 // pred_fallthru
      _
    %p1090 = scmp.gt.s32.totalorder 2, 0
    // Predicated region
    $region156: #{custom-call.4} parent=1 // pred_check
      %p1091 = pneg %p1090
    $region157: #{custom-call.4} parent=1 // pred_check_branch
      %1093 = sbr.rel (%p1091) target = $region159
    $region158: #{custom-call.4} parent=1 // pred_region
      %s1094 = sshra.s32 2, 3
      %p1095 = scmp.gt.s32.totalorder %s1094, 0
      // Predicated region
      $region160: #{custom-call.4} parent=158 // pred_check
        %p1096 = pneg %p1095
      $region161: #{custom-call.4} parent=158 // pred_check_branch
        %1098 = sbr.rel (%p1096) target = $region163
      $region162: #{custom-call.4} parent=158 // pred_region
        %s1099 = ssub.s32 %s1094, 1
        %s1100 = smul.u32 %s1099, 128
        %s1101 = sshra.s32 %s1100, 4
        %s1102 = scalar_lea.vmem [#allocation13], %s1101
        %v1103 = vld [vmem:[#allocation13] sm:$0xff]
        // While loop
        $region164: #{custom-call.4} parent=162 // loop_pre_header
          _
        $region165: #{custom-call.4} parent=162 // loop_header
          %s1104 = sphi [#allocation13], %s1126
          %s1105 = sphi %s6, %s1127
          %v1106 = vphi %v1103, %v1128
          %s1107 = ssub.s32 %s1102, 64
          %p1108 = scmp.gt.s32.totalorder %s1104, %s1107
        $region166: #{custom-call.4} parent=162 // loop_header_branch
          %1110 = sbr.rel (%p1108) target = $region170
        $region167: #{custom-call.4} parent=162 // loop_body
          %1111 = vst [vmem:[%s1105] sm:$0xff] %v1106
          %v1112 = vld [vmem:[%s1104 + $0x8] sm:$0xff]
          %1113 = vst [vmem:[%s1105 + $0x8] sm:$0xff] %v1112
          %v1114 = vld [vmem:[%s1104 + $0x10] sm:$0xff]
          %1115 = vst [vmem:[%s1105 + $0x10] sm:$0xff] %v1114
          %v1116 = vld [vmem:[%s1104 + $0x18] sm:$0xff]
          %1117 = vst [vmem:[%s1105 + $0x18] sm:$0xff] %v1116
          %v1118 = vld [vmem:[%s1104 + $0x20] sm:$0xff]
          %1119 = vst [vmem:[%s1105 + $0x20] sm:$0xff] %v1118
          %v1120 = vld [vmem:[%s1104 + $0x28] sm:$0xff]
          %1121 = vst [vmem:[%s1105 + $0x28] sm:$0xff] %v1120
          %v1122 = vld [vmem:[%s1104 + $0x30] sm:$0xff]
          %1123 = vst [vmem:[%s1105 + $0x30] sm:$0xff] %v1122
          %v1124 = vld [vmem:[%s1104 + $0x38] sm:$0xff]
          %1125 = vst [vmem:[%s1105 + $0x38] sm:$0xff] %v1124
        $region168: #{custom-call.4} parent=162 // loop_footer
          %s1126 = scalar_lea.vmem %s1104, 64
          %s1127 = scalar_lea.vmem %s1105, 64
          %v1128 = vld [vmem:[%s1104 + $0x40] sm:$0xff]
        $region169: #{custom-call.4} parent=162 // loop_footer_branch
          %1129 = sbr.rel target = $region165
        $region170: #{custom-call.4} parent=162 // loop_exit
          _
        // While loop
        $region171: #{custom-call.4} parent=162 // loop_pre_header
          _
        $region172: #{custom-call.4} parent=162 // loop_header
          %s1130 = sphi %s1104, %s1138
          %s1131 = sphi %s1105, %s1139
          %v1132 = vphi %v1106, %v1132
          %p1133 = scmp.gt.s32.totalorder %s1130, %s1102
        $region173: #{custom-call.4} parent=162 // loop_header_branch
          %1135 = sbr.rel (%p1133) target = $region177
        $region174: #{custom-call.4} parent=162 // loop_body
          %v1136 = vld [vmem:[%s1130] sm:$0xff]
          %1137 = vst [vmem:[%s1131] sm:$0xff] %v1136
        $region175: #{custom-call.4} parent=162 // loop_footer
          %s1138 = scalar_lea.vmem %s1130, 8
          %s1139 = scalar_lea.vmem %s1131, 8
        $region176: #{custom-call.4} parent=162 // loop_footer_branch
          %1140 = sbr.rel target = $region172
        $region177: #{custom-call.4} parent=162 // loop_exit
          _
      $region163: #{custom-call.4} parent=158 // pred_fallthru
        _
      %s1141 = sand.u32 2, 7
      %s1142 = sshll.u32 1, %s1141
      %s1143 = ssub.s32 %s1142, 1
      %s1144 = smul.u32 %s1094, 128
      %s1145 = sshra.s32 %s1144, 4
      %s1146 = scalar_lea.vmem %s6, %s1145
      %s1147 = smul.u32 %s1094, 128
      %s1148 = sshra.s32 %s1147, 4
      %s1149 = scalar_lea.vmem [#allocation13], %s1148
      %v1150 = vld [vmem:[%s1149] sm:%s1143]
      %1151 = vst [vmem:[%s1146] sm:%s1143] %v1150
    $region159: #{custom-call.4} parent=1 // pred_fallthru
      _
    %p1153 = scmp.gt.s32.totalorder 2, 0
    // Predicated region
    $region178: #{custom-call.4} parent=1 // pred_check
      %p1154 = pneg %p1153
    $region179: #{custom-call.4} parent=1 // pred_check_branch
      %1156 = sbr.rel (%p1154) target = $region181
    $region180: #{custom-call.4} parent=1 // pred_region
      %s1157 = sshra.s32 2, 3
      %p1158 = scmp.gt.s32.totalorder %s1157, 0
      // Predicated region
      $region182: #{custom-call.4} parent=180 // pred_check
        %p1159 = pneg %p1158
      $region183: #{custom-call.4} parent=180 // pred_check_branch
        %1161 = sbr.rel (%p1159) target = $region185
      $region184: #{custom-call.4} parent=180 // pred_region
        %s1162 = ssub.s32 %s1157, 1
        %s1163 = smul.u32 %s1162, 128
        %s1164 = sshra.s32 %s1163, 4
        %s1165 = scalar_lea.vmem [#allocation15], %s1164
        %v1166 = vld [vmem:[#allocation15] sm:$0xff]
        // While loop
        $region186: #{custom-call.4} parent=184 // loop_pre_header
          _
        $region187: #{custom-call.4} parent=184 // loop_header
          %s1167 = sphi [#allocation15], %s1189
          %s1168 = sphi %s7, %s1190
          %v1169 = vphi %v1166, %v1191
          %s1170 = ssub.s32 %s1165, 64
          %p1171 = scmp.gt.s32.totalorder %s1167, %s1170
        $region188: #{custom-call.4} parent=184 // loop_header_branch
          %1173 = sbr.rel (%p1171) target = $region192
        $region189: #{custom-call.4} parent=184 // loop_body
          %1174 = vst [vmem:[%s1168] sm:$0xff] %v1169
          %v1175 = vld [vmem:[%s1167 + $0x8] sm:$0xff]
          %1176 = vst [vmem:[%s1168 + $0x8] sm:$0xff] %v1175
          %v1177 = vld [vmem:[%s1167 + $0x10] sm:$0xff]
          %1178 = vst [vmem:[%s1168 + $0x10] sm:$0xff] %v1177
          %v1179 = vld [vmem:[%s1167 + $0x18] sm:$0xff]
          %1180 = vst [vmem:[%s1168 + $0x18] sm:$0xff] %v1179
          %v1181 = vld [vmem:[%s1167 + $0x20] sm:$0xff]
          %1182 = vst [vmem:[%s1168 + $0x20] sm:$0xff] %v1181
          %v1183 = vld [vmem:[%s1167 + $0x28] sm:$0xff]
          %1184 = vst [vmem:[%s1168 + $0x28] sm:$0xff] %v1183
          %v1185 = vld [vmem:[%s1167 + $0x30] sm:$0xff]
          %1186 = vst [vmem:[%s1168 + $0x30] sm:$0xff] %v1185
          %v1187 = vld [vmem:[%s1167 + $0x38] sm:$0xff]
          %1188 = vst [vmem:[%s1168 + $0x38] sm:$0xff] %v1187
        $region190: #{custom-call.4} parent=184 // loop_footer
          %s1189 = scalar_lea.vmem %s1167, 64
          %s1190 = scalar_lea.vmem %s1168, 64
          %v1191 = vld [vmem:[%s1167 + $0x40] sm:$0xff]
        $region191: #{custom-call.4} parent=184 // loop_footer_branch
          %1192 = sbr.rel target = $region187
        $region192: #{custom-call.4} parent=184 // loop_exit
          _
        // While loop
        $region193: #{custom-call.4} parent=184 // loop_pre_header
          _
        $region194: #{custom-call.4} parent=184 // loop_header
          %s1193 = sphi %s1167, %s1201
          %s1194 = sphi %s1168, %s1202
          %v1195 = vphi %v1169, %v1195
          %p1196 = scmp.gt.s32.totalorder %s1193, %s1165
        $region195: #{custom-call.4} parent=184 // loop_header_branch
          %1198 = sbr.rel (%p1196) target = $region199
        $region196: #{custom-call.4} parent=184 // loop_body
          %v1199 = vld [vmem:[%s1193] sm:$0xff]
          %1200 = vst [vmem:[%s1194] sm:$0xff] %v1199
        $region197: #{custom-call.4} parent=184 // loop_footer
          %s1201 = scalar_lea.vmem %s1193, 8
          %s1202 = scalar_lea.vmem %s1194, 8
        $region198: #{custom-call.4} parent=184 // loop_footer_branch
          %1203 = sbr.rel target = $region194
        $region199: #{custom-call.4} parent=184 // loop_exit
          _
      $region185: #{custom-call.4} parent=180 // pred_fallthru
        _
      %s1204 = sand.u32 2, 7
      %s1205 = sshll.u32 1, %s1204
      %s1206 = ssub.s32 %s1205, 1
      %s1207 = smul.u32 %s1157, 128
      %s1208 = sshra.s32 %s1207, 4
      %s1209 = scalar_lea.vmem %s7, %s1208
      %s1210 = smul.u32 %s1157, 128
      %s1211 = sshra.s32 %s1210, 4
      %s1212 = scalar_lea.vmem [#allocation15], %s1211
      %v1213 = vld [vmem:[%s1212] sm:%s1206]
      %1214 = vst [vmem:[%s1209] sm:%s1206] %v1213
    $region181: #{custom-call.4} parent=1 // pred_fallthru
      _
    %p1216 = scmp.gt.s32.totalorder 2, 0
    // Predicated region
    $region200: #{custom-call.4} parent=1 // pred_check
      %p1217 = pneg %p1216
    $region201: #{custom-call.4} parent=1 // pred_check_branch
      %1219 = sbr.rel (%p1217) target = $region203
    $region202: #{custom-call.4} parent=1 // pred_region
      %s1220 = sshra.s32 2, 3
      %p1221 = scmp.gt.s32.totalorder %s1220, 0
      // Predicated region
      $region204: #{custom-call.4} parent=202 // pred_check
        %p1222 = pneg %p1221
      $region205: #{custom-call.4} parent=202 // pred_check_branch
        %1224 = sbr.rel (%p1222) target = $region207
      $region206: #{custom-call.4} parent=202 // pred_region
        %s1225 = ssub.s32 %s1220, 1
        %s1226 = smul.u32 %s1225, 128
        %s1227 = sshra.s32 %s1226, 4
        %s1228 = scalar_lea.vmem [#allocation17], %s1227
        %v1229 = vld [vmem:[#allocation17] sm:$0xff]
        // While loop
        $region208: #{custom-call.4} parent=206 // loop_pre_header
          _
        $region209: #{custom-call.4} parent=206 // loop_header
          %s1230 = sphi [#allocation17], %s1252
          %s1231 = sphi %s8, %s1253
          %v1232 = vphi %v1229, %v1254
          %s1233 = ssub.s32 %s1228, 64
          %p1234 = scmp.gt.s32.totalorder %s1230, %s1233
        $region210: #{custom-call.4} parent=206 // loop_header_branch
          %1236 = sbr.rel (%p1234) target = $region214
        $region211: #{custom-call.4} parent=206 // loop_body
          %1237 = vst [vmem:[%s1231] sm:$0xff] %v1232
          %v1238 = vld [vmem:[%s1230 + $0x8] sm:$0xff]
          %1239 = vst [vmem:[%s1231 + $0x8] sm:$0xff] %v1238
          %v1240 = vld [vmem:[%s1230 + $0x10] sm:$0xff]
          %1241 = vst [vmem:[%s1231 + $0x10] sm:$0xff] %v1240
          %v1242 = vld [vmem:[%s1230 + $0x18] sm:$0xff]
          %1243 = vst [vmem:[%s1231 + $0x18] sm:$0xff] %v1242
          %v1244 = vld [vmem:[%s1230 + $0x20] sm:$0xff]
          %1245 = vst [vmem:[%s1231 + $0x20] sm:$0xff] %v1244
          %v1246 = vld [vmem:[%s1230 + $0x28] sm:$0xff]
          %1247 = vst [vmem:[%s1231 + $0x28] sm:$0xff] %v1246
          %v1248 = vld [vmem:[%s1230 + $0x30] sm:$0xff]
          %1249 = vst [vmem:[%s1231 + $0x30] sm:$0xff] %v1248
          %v1250 = vld [vmem:[%s1230 + $0x38] sm:$0xff]
          %1251 = vst [vmem:[%s1231 + $0x38] sm:$0xff] %v1250
        $region212: #{custom-call.4} parent=206 // loop_footer
          %s1252 = scalar_lea.vmem %s1230, 64
          %s1253 = scalar_lea.vmem %s1231, 64
          %v1254 = vld [vmem:[%s1230 + $0x40] sm:$0xff]
        $region213: #{custom-call.4} parent=206 // loop_footer_branch
          %1255 = sbr.rel target = $region209
        $region214: #{custom-call.4} parent=206 // loop_exit
          _
        // While loop
        $region215: #{custom-call.4} parent=206 // loop_pre_header
          _
        $region216: #{custom-call.4} parent=206 // loop_header
          %s1256 = sphi %s1230, %s1264
          %s1257 = sphi %s1231, %s1265
          %v1258 = vphi %v1232, %v1258
          %p1259 = scmp.gt.s32.totalorder %s1256, %s1228
        $region217: #{custom-call.4} parent=206 // loop_header_branch
          %1261 = sbr.rel (%p1259) target = $region221
        $region218: #{custom-call.4} parent=206 // loop_body
          %v1262 = vld [vmem:[%s1256] sm:$0xff]
          %1263 = vst [vmem:[%s1257] sm:$0xff] %v1262
        $region219: #{custom-call.4} parent=206 // loop_footer
          %s1264 = scalar_lea.vmem %s1256, 8
          %s1265 = scalar_lea.vmem %s1257, 8
        $region220: #{custom-call.4} parent=206 // loop_footer_branch
          %1266 = sbr.rel target = $region216
        $region221: #{custom-call.4} parent=206 // loop_exit
          _
      $region207: #{custom-call.4} parent=202 // pred_fallthru
        _
      %s1267 = sand.u32 2, 7
      %s1268 = sshll.u32 1, %s1267
      %s1269 = ssub.s32 %s1268, 1
      %s1270 = smul.u32 %s1220, 128
      %s1271 = sshra.s32 %s1270, 4
      %s1272 = scalar_lea.vmem %s8, %s1271
      %s1273 = smul.u32 %s1220, 128
      %s1274 = sshra.s32 %s1273, 4
      %s1275 = scalar_lea.vmem [#allocation17], %s1274
      %v1276 = vld [vmem:[%s1275] sm:%s1269]
      %1277 = vst [vmem:[%s1272] sm:%s1269] %v1276
    $region203: #{custom-call.4} parent=1 // pred_fallthru
      _
    %p1279 = scmp.gt.s32.totalorder 2, 0
    // Predicated region
    $region222: #{custom-call.4} parent=1 // pred_check
      %p1280 = pneg %p1279
    $region223: #{custom-call.4} parent=1 // pred_check_branch
      %1282 = sbr.rel (%p1280) target = $region225
    $region224: #{custom-call.4} parent=1 // pred_region
      %s1283 = sshra.s32 2, 3
      %p1284 = scmp.gt.s32.totalorder %s1283, 0
      // Predicated region
      $region226: #{custom-call.4} parent=224 // pred_check
        %p1285 = pneg %p1284
      $region227: #{custom-call.4} parent=224 // pred_check_branch
        %1287 = sbr.rel (%p1285) target = $region229
      $region228: #{custom-call.4} parent=224 // pred_region
        %s1288 = ssub.s32 %s1283, 1
        %s1289 = smul.u32 %s1288, 128
        %s1290 = sshra.s32 %s1289, 4
        %s1291 = scalar_lea.vmem [#allocation19], %s1290
        %v1292 = vld [vmem:[#allocation19] sm:$0xff]
        // While loop
        $region230: #{custom-call.4} parent=228 // loop_pre_header
          _
        $region231: #{custom-call.4} parent=228 // loop_header
          %s1293 = sphi [#allocation19], %s1315
          %s1294 = sphi %s9, %s1316
          %v1295 = vphi %v1292, %v1317
          %s1296 = ssub.s32 %s1291, 64
          %p1297 = scmp.gt.s32.totalorder %s1293, %s1296
        $region232: #{custom-call.4} parent=228 // loop_header_branch
          %1299 = sbr.rel (%p1297) target = $region236
        $region233: #{custom-call.4} parent=228 // loop_body
          %1300 = vst [vmem:[%s1294] sm:$0xff] %v1295
          %v1301 = vld [vmem:[%s1293 + $0x8] sm:$0xff]
          %1302 = vst [vmem:[%s1294 + $0x8] sm:$0xff] %v1301
          %v1303 = vld [vmem:[%s1293 + $0x10] sm:$0xff]
          %1304 = vst [vmem:[%s1294 + $0x10] sm:$0xff] %v1303
          %v1305 = vld [vmem:[%s1293 + $0x18] sm:$0xff]
          %1306 = vst [vmem:[%s1294 + $0x18] sm:$0xff] %v1305
          %v1307 = vld [vmem:[%s1293 + $0x20] sm:$0xff]
          %1308 = vst [vmem:[%s1294 + $0x20] sm:$0xff] %v1307
          %v1309 = vld [vmem:[%s1293 + $0x28] sm:$0xff]
          %1310 = vst [vmem:[%s1294 + $0x28] sm:$0xff] %v1309
          %v1311 = vld [vmem:[%s1293 + $0x30] sm:$0xff]
          %1312 = vst [vmem:[%s1294 + $0x30] sm:$0xff] %v1311
          %v1313 = vld [vmem:[%s1293 + $0x38] sm:$0xff]
          %1314 = vst [vmem:[%s1294 + $0x38] sm:$0xff] %v1313
        $region234: #{custom-call.4} parent=228 // loop_footer
          %s1315 = scalar_lea.vmem %s1293, 64
          %s1316 = scalar_lea.vmem %s1294, 64
          %v1317 = vld [vmem:[%s1293 + $0x40] sm:$0xff]
        $region235: #{custom-call.4} parent=228 // loop_footer_branch
          %1318 = sbr.rel target = $region231
        $region236: #{custom-call.4} parent=228 // loop_exit
          _
        // While loop
        $region237: #{custom-call.4} parent=228 // loop_pre_header
          _
        $region238: #{custom-call.4} parent=228 // loop_header
          %s1319 = sphi %s1293, %s1327
          %s1320 = sphi %s1294, %s1328
          %v1321 = vphi %v1295, %v1321
          %p1322 = scmp.gt.s32.totalorder %s1319, %s1291
        $region239: #{custom-call.4} parent=228 // loop_header_branch
          %1324 = sbr.rel (%p1322) target = $region243
        $region240: #{custom-call.4} parent=228 // loop_body
          %v1325 = vld [vmem:[%s1319] sm:$0xff]
          %1326 = vst [vmem:[%s1320] sm:$0xff] %v1325
        $region241: #{custom-call.4} parent=228 // loop_footer
          %s1327 = scalar_lea.vmem %s1319, 8
          %s1328 = scalar_lea.vmem %s1320, 8
        $region242: #{custom-call.4} parent=228 // loop_footer_branch
          %1329 = sbr.rel target = $region238
        $region243: #{custom-call.4} parent=228 // loop_exit
          _
      $region229: #{custom-call.4} parent=224 // pred_fallthru
        _
      %s1330 = sand.u32 2, 7
      %s1331 = sshll.u32 1, %s1330
      %s1332 = ssub.s32 %s1331, 1
      %s1333 = smul.u32 %s1283, 128
      %s1334 = sshra.s32 %s1333, 4
      %s1335 = scalar_lea.vmem %s9, %s1334
      %s1336 = smul.u32 %s1283, 128
      %s1337 = sshra.s32 %s1336, 4
      %s1338 = scalar_lea.vmem [#allocation19], %s1337
      %v1339 = vld [vmem:[%s1338] sm:%s1332]
      %1340 = vst [vmem:[%s1335] sm:%s1332] %v1339
    $region225: #{custom-call.4} parent=1 // pred_fallthru
      _
    // Predicated region
    $region244: #{custom-call.4} parent=1 // pred_check
      _
    $region245: #{custom-call.4} parent=1 // pred_check_branch
      %1342 = sbr.rel (0) target = $region247
    $region246: #{custom-call.4} parent=1 // pred_region
      _
    $region247: #{custom-call.4} parent=1 // pred_fallthru
      _
    // Predicated region
    $region248: #{custom-call.4} parent=1 // pred_check
      _
    $region249: #{custom-call.4} parent=1 // pred_check_branch
      %1344 = sbr.rel (0) target = $region251
    $region250: #{custom-call.4} parent=1 // pred_region
      _
    $region251: #{custom-call.4} parent=1 // pred_fallthru
      _

// kernel: shape_model_forward.6
$region0: #{shape_model_forward.6}
  #allocation0 [shape = 'u32[]', space=smem, size = 0x4, offset = 0x4, fixed_abs, tag = 'smem constant byte address 0x4 - core index']
  #allocation1 [shape = 'u32[144,128]{1,0:T(1,128)}', space=vmem, size = 0x12000, scoped, tag = 'internal scratch']
  %s0 = inlined_call_operand.vmem [shape: f32[4,384], index: 0, kind: input, shape index: {}]
  %s1 = inlined_call_operand.vmem [shape: f32[1,384], index: 1, kind: output, shape index: {0}]
  %s2 = inlined_call_operand.vmem [shape: f32[4,384], index: 2, kind: output, shape index: {1}]
  %s3 = inlined_call_operand.vmem [shape: f32[4,4], index: 3, kind: output, shape index: {2}]
  %4 = xla_tuple %s1, %s2, %s3
  %s5 = sld [smem:[#allocation0]]
  $region57: #{shape_model_forward.6} parent=0
    _
  %s7 = ssub.s32 1, %s5
  %s8 = scalar_select 0, %s7, %s5
  loop: start=0, step=1, limit=5
  $region2: #{shape_model_forward.6} parent=0 // loop_pre_header
    _
  $region3: #{shape_model_forward.6} parent=0 // loop_header
    %s10 = sphi 0, %s14
    %p11 = scmp.ge.s32.totalorder %s10, 5
    %s20 = sphi 0, %s22
    %s23 = sphi 0, %s20
    %s24 = sphi 0, %s23
    %s40 = sphi 0, %s24
    %s46 = sphi 0, %s48
    %s49 = sphi 0, %s46
    %s50 = sphi 0, %s49
    %s66 = sphi 0, %s50
    %s72 = sphi 0, %s74
    %s75 = sphi 0, %s72
    %s76 = sphi 0, %s75
    %s92 = sphi 0, %s76
    %s96 = sphi 0, %s96
    %s98 = sphi 0, %s96
    %s99 = sphi 0, %s98
    %s113 = sphi 0, %s99
  $region4: #{shape_model_forward.6} parent=0 // loop_header_branch
    %13 = sbr.rel (%p11) target = $region8
  $region5: #{shape_model_forward.6} parent=0 // loop_body
    %s15 = ssub.s32 %s10, 1
    %s16 = ssub.s32 %s10, 2
    %s17 = sadd.s32 %s10, 1
    %s18 = ssub.s32 %s10, %s17
    %p19 = scmp.eq.s32.totalorder %s18, 0
    %s21 = sadd.s32 %s20, 1
    %s22 = scalar_select %p19, %s20, %s21
    %p25 = pneg %p19
    %p26 = scmp.eq.s32.totalorder %s10, 2
    %p27 = por %p25, %p26
    %p28 = scmp.ne.s32.totalorder %s20, %s23
    %p29 = scmp.eq.s32.totalorder %s10, 0
    %p30 = por %p28, %p29
    %p31 = scmp.ne.s32.totalorder %s20, %s23
    %p32 = scmp.eq.s32.totalorder %s15, 2
    %p33 = por %p31, %p32
    %p34 = scmp.ne.s32.totalorder %s23, %s24
    %p35 = scmp.eq.s32.totalorder %s15, 0
    %p36 = por %p34, %p35
    %p37 = scmp.ne.s32.totalorder %s23, %s24
    %p38 = scmp.eq.s32.totalorder %s16, 2
    %p39 = por %p37, %p38
    %p41 = scmp.ne.s32.totalorder %s24, %s40
    %p42 = scmp.eq.s32.totalorder %s16, 0
    %p43 = por %p41, %p42
    %s44 = ssub.s32 %s10, %s17
    %p45 = scmp.eq.s32.totalorder %s44, 0
    %s47 = sadd.s32 %s46, 1
    %s48 = scalar_select %p45, %s46, %s47
    %p51 = pneg %p45
    %p52 = scmp.eq.s32.totalorder %s10, 2
    %p53 = por %p51, %p52
    %p54 = scmp.ne.s32.totalorder %s46, %s49
    %p55 = scmp.eq.s32.totalorder %s10, 0
    %p56 = por %p54, %p55
    %p57 = scmp.ne.s32.totalorder %s46, %s49
    %p58 = scmp.eq.s32.totalorder %s15, 2
    %p59 = por %p57, %p58
    %p60 = scmp.ne.s32.totalorder %s49, %s50
    %p61 = scmp.eq.s32.totalorder %s15, 0
    %p62 = por %p60, %p61
    %p63 = scmp.ne.s32.totalorder %s49, %s50
    %p64 = scmp.eq.s32.totalorder %s16, 2
    %p65 = por %p63, %p64
    %p67 = scmp.ne.s32.totalorder %s50, %s66
    %p68 = scmp.eq.s32.totalorder %s16, 0
    %p69 = por %p67, %p68
    %s70 = ssub.s32 %s10, %s17
    %p71 = scmp.eq.s32.totalorder %s70, 0
    %s73 = sadd.s32 %s72, 1
    %s74 = scalar_select %p71, %s72, %s73
    %p77 = pneg %p71
    %p78 = scmp.eq.s32.totalorder %s10, 2
    %p79 = por %p77, %p78
    %p80 = scmp.ne.s32.totalorder %s72, %s75
    %p81 = scmp.eq.s32.totalorder %s10, 0
    %p82 = por %p80, %p81
    %p83 = scmp.ne.s32.totalorder %s72, %s75
    %p84 = scmp.eq.s32.totalorder %s15, 2
    %p85 = por %p83, %p84
    %p86 = scmp.ne.s32.totalorder %s75, %s76
    %p87 = scmp.eq.s32.totalorder %s15, 0
    %p88 = por %p86, %p87
    %p89 = scmp.ne.s32.totalorder %s75, %s76
    %p90 = scmp.eq.s32.totalorder %s16, 2
    %p91 = por %p89, %p90
    %p93 = scmp.ne.s32.totalorder %s76, %s92
    %p94 = scmp.eq.s32.totalorder %s16, 0
    %p95 = por %p93, %p94
    %s97 = sadd.s32 %s96, 1
    %p100 = scmp.eq.s32.totalorder %s10, 2
    %p101 = scmp.ne.s32.totalorder %s96, %s98
    %p102 = scmp.eq.s32.totalorder %s10, 0
    %p103 = por %p101, %p102
    %p104 = scmp.ne.s32.totalorder %s96, %s98
    %p105 = scmp.eq.s32.totalorder %s15, 2
    %p106 = por %p104, %p105
    %p107 = scmp.ne.s32.totalorder %s98, %s99
    %p108 = scmp.eq.s32.totalorder %s15, 0
    %p109 = por %p107, %p108
    %p110 = scmp.ne.s32.totalorder %s98, %s99
    %p111 = scmp.eq.s32.totalorder %s16, 2
    %p112 = por %p110, %p111
    %p114 = scmp.ne.s32.totalorder %s99, %s113
    %p115 = scmp.eq.s32.totalorder %s16, 0
    %p116 = por %p114, %p115
    %p117 = scmp.le.s32.totalorder 1, %s10
    %p118 = scmp.lt.s32.totalorder %s10, 4
    %p119 = pnand %p117, %p118
    %p120 = pneg %p119
    // Predicated region
    $region9: #{shape_model_forward.6} parent=5 // pred_check
      _
    $region10: #{shape_model_forward.6} parent=5 // pred_check_branch
      %122 = sbr.rel (%p119) target = $region12
    $region11: #{shape_model_forward.6} parent=5 // pred_region
      %s123 = ssub.s32 %s10, 1
    $region12: #{shape_model_forward.6} parent=5 // pred_fallthru
      _
    %p124 = scmp.lt.s32.totalorder %s10, 3
    // Predicated region
    $region13: #{shape_model_forward.6} parent=5 // pred_check
      %p125 = pneg %p124
    $region14: #{shape_model_forward.6} parent=5 // pred_check_branch
      %127 = sbr.rel (%p125) target = $region16
    $region15: #{shape_model_forward.6} parent=5 // pred_region
      // Predicated region
      $region17: #{shape_model_forward.6} parent=15 // pred_check
        %p128 = pneg %p30
      $region18: #{shape_model_forward.6} parent=15 // pred_check_branch
        %130 = sbr.rel (%p128) target = $region20
      $region19: #{shape_model_forward.6} parent=15 // pred_region
        %p131 = scmp.lt.s32.totalorder %s10, 2
        %s132 = scalar_select %p131, %s10, 2
        %s133 = smul.addr %s132, 4
        %s134 = scalar_lea.vmem %s0, %s133
      $region20: #{shape_model_forward.6} parent=15 // pred_fallthru
        _
    $region16: #{shape_model_forward.6} parent=5 // pred_fallthru
      _
    %p135 = scmp.le.s32.totalorder 1, %s10
    %p136 = scmp.lt.s32.totalorder %s10, 4
    %p137 = pnand %p135, %p136
    %p138 = pneg %p137
    // Predicated region
    $region21: #{shape_model_forward.6} parent=5 // pred_check
      _
    $region22: #{shape_model_forward.6} parent=5 // pred_check_branch
      %140 = sbr.rel (%p137) target = $region24
    $region23: #{shape_model_forward.6} parent=5 // pred_region
      %s141 = ssub.s32 %s10, 1
      %p142 = scmp.lt.s32.totalorder %s15, 2
      %s143 = scalar_select %p142, %s15, 2
      %s144 = smul.addr %s143, 4
      %s145 = scalar_lea.vmem %s0, %s144
      %p146 = pneg %p36
      %p147 = pneg %p33
      %p148 = pneg %p62
      %p149 = pneg %p59
      %p150 = scmp.lt.s32.totalorder %s15, 2
      %s151 = scalar_select %p150, %s15, 2
      %s152 = scalar_lea.vmem %s1, %s151
      %p153 = pneg %p88
      %p154 = pneg %p85
      %p155 = scmp.lt.s32.totalorder %s15, 2
      %s156 = scalar_select %p155, %s15, 2
      %s157 = smul.addr %s156, 4
      %s158 = scalar_lea.vmem %s2, %s157
      %p159 = pneg %p109
      %p160 = pneg %p106
      %p161 = scmp.lt.s32.totalorder %s15, 2
      %s162 = scalar_select %p161, %s15, 2
      %s163 = smul.addr %s162, 4
      %s164 = scalar_lea.vmem %s0, %s163
      %p165 = scmp.lt.s32.totalorder %s15, 2
      %s166 = scalar_select %p165, %s15, 2
      %s167 = scalar_lea.vmem %s1, %s166
      %p168 = scmp.lt.s32.totalorder %s15, 2
      %s169 = scalar_select %p168, %s15, 2
      %s170 = smul.addr %s169, 4
      %s171 = scalar_lea.vmem %s2, %s170
      %v172 = vld [vmem:[%s164] sm:$0xf]
      %vm173 = vcmask 1043456
      %v174 = vsel %vm173, %v172, 0.0
      %v175 = vrot.slane %v174, 4
      %v176 = vadd.f32 %v174, %v175
      %v177 = vrot.slane %v176, 2
      %v178 = vadd.f32 %v176, %v177
      %v179 = vrot.slane %v178, 1
      %v180 = vadd.f32 %v178, %v179
      %v181 = vrcp.pop 4.0
      %v182 = vmul.f32 %v180, %v181
      %v183 = vsub.f32 %v172, %v182
      %184 = vst [vmem:[%s167] sm:$0x1] %v182
      %185 = vst [vmem:[%s171] sm:$0xf] %v183
      %p186 = scmp.eq.s32.totalorder %s15, 0
      // Predicated region
      $region25: #{shape_model_forward.6} parent=23 // pred_check
        %p187 = pneg %p186
      $region26: #{shape_model_forward.6} parent=23 // pred_check_branch
        %189 = sbr.rel (%p187) target = $region28
      $region27: #{shape_model_forward.6} parent=23 // pred_region
        %vm190 = vcmask 27648
        %191 = vst.msk [vmem:[%s3] sm:$0xf] %vm190, 0.0
      $region28: #{shape_model_forward.6} parent=23 // pred_fallthru
        _
      %v192 = vld [vmem:[%s3] sm:$0xf]
      %193 = vmatprep.subr.mxu0 0.0
      %194 = vmatpush1.xpose.msra.mxu0 0.0
      %195 = vmatprep.subr.mxu0 0.0
      %196 = vmatpush1.xpose.msra.mxu0 0.0
      %197 = vmatprep.subr.mxu0 0.0
      %198 = vmatpush1.xpose.msra.mxu0 0.0
      %199 = vmatprep.subr.mxu0 0.0
      %200 = vmatpush1.xpose.msra.mxu0 0.0
      %201 = vmatprep.subr.mxu0 0.0
      %202 = vmatpush1.xpose.msra.mxu0 0.0
      %203 = vmatprep.subr.mxu0 0.0
      %204 = vmatpush1.xpose.msra.mxu0 0.0
      %205 = vmatprep.subr.mxu0 0.0
      %206 = vmatpush1.xpose.msra.mxu0 0.0
      %207 = vmatprep.subr.mxu0 0.0
      %208 = vmatpush1.xpose.msra.mxu0 0.0
      %209 = vmatprep.subr.mxu0 0.0
      %210 = vmatpush1.xpose.msra.mxu0 0.0
      %211 = vmatprep.subr.mxu0 0.0
      %212 = vmatpush1.xpose.msra.mxu0 0.0
      %213 = vmatprep.subr.mxu0 0.0
      %214 = vmatpush1.xpose.msra.mxu0 0.0
      %215 = vmatprep.subr.mxu0 0.0
      %216 = vmatpush1.xpose.msra.mxu0 0.0
      %217 = vmatprep.subr.mxu0 0.0
      %218 = vmatpush1.xpose.msra.mxu0 0.0
      %219 = vmatprep.subr.mxu0 0.0
      %220 = vmatpush1.xpose.msra.mxu0 0.0
      %221 = vmatprep.subr.mxu0 0.0
      %222 = vmatpush1.xpose.msra.mxu0 0.0
      %223 = vmatprep.subr.mxu0 0.0
      %224 = vmatpush1.xpose.msra.mxu0 %v183
      %225 = vmatprep.subr.mxu0 0.0
      %226 = vmatpush2.xpose.msra.mxu0 0.0
      %227 = vmatprep.subr.mxu0 0.0
      %228 = vmatpush2.xpose.msra.mxu0 0.0
      %229 = vmatprep.subr.mxu0 0.0
      %230 = vmatpush2.xpose.msra.mxu0 0.0
      %231 = vmatprep.subr.mxu0 0.0
      %232 = vmatpush2.xpose.msra.mxu0 0.0
      %233 = vmatprep.subr.mxu0 0.0
      %234 = vmatpush2.xpose.msra.mxu0 0.0
      %235 = vmatprep.subr.mxu0 0.0
      %236 = vmatpush2.xpose.msra.mxu0 0.0
      %237 = vmatprep.subr.mxu0 0.0
      %238 = vmatpush2.xpose.msra.mxu0 0.0
      %239 = vmatprep.subr.mxu0 0.0
      %240 = vmatpush2.xpose.msra.mxu0 0.0
      %241 = vmatprep.subr.mxu0 0.0
      %242 = vmatpush2.xpose.msra.mxu0 0.0
      %243 = vmatprep.subr.mxu0 0.0
      %244 = vmatpush2.xpose.msra.mxu0 0.0
      %245 = vmatprep.subr.mxu0 0.0
      %246 = vmatpush2.xpose.msra.mxu0 0.0
      %247 = vmatprep.subr.mxu0 0.0
      %248 = vmatpush2.xpose.msra.mxu0 0.0
      %249 = vmatprep.subr.mxu0 0.0
      %250 = vmatpush2.xpose.msra.mxu0 0.0
      %251 = vmatprep.subr.mxu0 0.0
      %252 = vmatpush2.xpose.msra.mxu0 0.0
      %253 = vmatprep.subr.mxu0 0.0
      %254 = vmatpush2.xpose.msra.mxu0 0.0
      %255 = vmatprep.subr.mxu0 0.0
      %256 = vmatpush2.xpose.msra.mxu0 0.0
      %257 = vmatprep.mubr.f32.mxu0 0.0
      %258 = vmatmul.mubr.f32.gmra.mxu0 %v183
      %v259 = vpop.f32.mrf.mxu0
      %v260 = vadd.f32 0.0, %v259
      %v261 = vpop.f32.mrf.mxu0
      %262 = vdwg.mxu0
      %v263 = vadd.f32 %v192, %v260
      %vm264 = vcmask 27648
      %265 = vst.msk [vmem:[%s3] sm:$0xf] %vm264, %v263
      %p266 = scmp.lt.s32.totalorder %s15, 2
      %s267 = scalar_select %p266, %s15, 2
      %s268 = scalar_lea.vmem %s1, %s267
      %p269 = scmp.lt.s32.totalorder %s15, 2
      %s270 = scalar_select %p269, %s15, 2
      %s271 = smul.addr %s270, 4
      %s272 = scalar_lea.vmem %s2, %s271
      // Predicated region
      $region29: #{shape_model_forward.6} parent=23 // pred_check
        %p273 = pneg %p59
      $region30: #{shape_model_forward.6} parent=23 // pred_check_branch
        %275 = sbr.rel (%p273) target = $region32
      $region31: #{shape_model_forward.6} parent=23 // pred_region
        _
      $region32: #{shape_model_forward.6} parent=23 // pred_fallthru
        _
      // Predicated region
      $region33: #{shape_model_forward.6} parent=23 // pred_check
        %p276 = pneg %p85
      $region34: #{shape_model_forward.6} parent=23 // pred_check_branch
        %278 = sbr.rel (%p276) target = $region36
      $region35: #{shape_model_forward.6} parent=23 // pred_region
        _
      $region36: #{shape_model_forward.6} parent=23 // pred_fallthru
        _
      // Predicated region
      $region37: #{shape_model_forward.6} parent=23 // pred_check
        %p279 = pneg %p106
      $region38: #{shape_model_forward.6} parent=23 // pred_check_branch
        %281 = sbr.rel (%p279) target = $region40
      $region39: #{shape_model_forward.6} parent=23 // pred_region
        _
      $region40: #{shape_model_forward.6} parent=23 // pred_fallthru
        _
      // Predicated region
      $region41: #{shape_model_forward.6} parent=23 // pred_check
        %p282 = pneg %p106
      $region42: #{shape_model_forward.6} parent=23 // pred_check_branch
        %284 = sbr.rel (%p282) target = $region44
      $region43: #{shape_model_forward.6} parent=23 // pred_region
        _
      $region44: #{shape_model_forward.6} parent=23 // pred_fallthru
        _
    $region24: #{shape_model_forward.6} parent=5 // pred_fallthru
      _
    %p285 = scmp.le.s32.totalorder 2, %s10
    // Predicated region
    $region45: #{shape_model_forward.6} parent=5 // pred_check
      %p286 = pneg %p285
    $region46: #{shape_model_forward.6} parent=5 // pred_check_branch
      %288 = sbr.rel (%p286) target = $region48
    $region47: #{shape_model_forward.6} parent=5 // pred_region
      %s289 = ssub.s32 %s10, 2
      // Predicated region
      $region49: #{shape_model_forward.6} parent=47 // pred_check
        %p290 = pneg %p65
      $region50: #{shape_model_forward.6} parent=47 // pred_check_branch
        %292 = sbr.rel (%p290) target = $region52
      $region51: #{shape_model_forward.6} parent=47 // pred_region
        %p293 = scmp.lt.s32.totalorder %s16, 2
        %s294 = scalar_select %p293, %s16, 2
        %s295 = scalar_lea.vmem %s1, %s294
      $region52: #{shape_model_forward.6} parent=47 // pred_fallthru
        _
      // Predicated region
      $region53: #{shape_model_forward.6} parent=47 // pred_check
        %p296 = pneg %p91
      $region54: #{shape_model_forward.6} parent=47 // pred_check_branch
        %298 = sbr.rel (%p296) target = $region56
      $region55: #{shape_model_forward.6} parent=47 // pred_region
        %p299 = scmp.lt.s32.totalorder %s16, 2
        %s300 = scalar_select %p299, %s16, 2
        %s301 = smul.addr %s300, 4
        %s302 = scalar_lea.vmem %s2, %s301
      $region56: #{shape_model_forward.6} parent=47 // pred_fallthru
        _
    $region48: #{shape_model_forward.6} parent=5 // pred_fallthru
      _
  $region6: #{shape_model_forward.6} parent=0 // loop_footer
    %s14 = sadd.s32 1, %s10
  $region7: #{shape_model_forward.6} parent=0 // loop_footer_branch
    %9 = sbr.rel target = $region3
  $region8: #{shape_model_forward.6} parent=0 // loop_exit
    _

// kernel: shape_model_forward.7
$region0: #{shape_model_forward.7}
  #allocation0 [shape = 'u32[]', space=smem, size = 0x4, offset = 0x4, fixed_abs, tag = 'smem constant byte address 0x4 - core index']
  #allocation1 [shape = 'u32[144,128]{1,0:T(1,128)}', space=vmem, size = 0x12000, scoped, tag = 'internal scratch']
  %s0 = inlined_call_operand.vmem [shape: f32[4,4], index: 0, kind: input, shape index: {}]
  %s1 = inlined_call_operand.vmem [shape: f32[4,384], index: 1, kind: input, shape index: {}]
  %s2 = inlined_call_operand.hbm [shape: f32[4,384], index: 2, kind: output, shape index: {}]
  %s3 = sld [smem:[#allocation0]]
  $region41: #{shape_model_forward.7} parent=0
    _
  %s5 = ssub.s32 1, %s3
  %s6 = scalar_select 0, %s5, %s3
  $region1: #{shape_model_forward.7} parent=0
    #allocation2 [shape = 'u8[4096]{0}', space=vmem, size = 0x1000, scoped, tag = 'output window, operand 0']
    #allocation3 [shape = 's32[2]{0}', space=sflag, size = 0x8, scoped, tag = 'scoped memory for shape_model_forward.7']
    %7 = vsyncpa [#allocation3], 0
    %s8 = scalar_lea.sflag [#allocation3], 1
    %9 = vsyncpa %s8, 0
    loop: start=0, step=1, limit=5
    $region2: #{shape_model_forward.7} parent=1 // loop_pre_header
      _
    $region3: #{shape_model_forward.7} parent=1 // loop_header
      %s11 = sphi 0, %s15
      %p12 = scmp.ge.s32.totalorder %s11, 5
      %s19 = sphi 0, %s19
      %s21 = sphi 0, %s19
      %s22 = sphi 0, %s21
      %s36 = sphi 0, %s22
      %s42 = sphi 0, %s44
      %s45 = sphi 0, %s42
      %s46 = sphi 0, %s45
      %s62 = sphi 0, %s46
      %s68 = sphi 0, %s70
      %s71 = sphi 0, %s68
      %s72 = sphi 0, %s71
      %s88 = sphi 0, %s72
    $region4: #{shape_model_forward.7} parent=1 // loop_header_branch
      %14 = sbr.rel (%p12) target = $region8
    $region5: #{shape_model_forward.7} parent=1 // loop_body
      %s16 = ssub.s32 %s11, 1
      %s17 = ssub.s32 %s11, 2
      %s18 = sadd.s32 %s11, 1
      %s20 = sadd.s32 %s19, 1
      %p23 = scmp.eq.s32.totalorder %s11, 2
      %p24 = scmp.ne.s32.totalorder %s19, %s21
      %p25 = scmp.eq.s32.totalorder %s11, 0
      %p26 = por %p24, %p25
      %p27 = scmp.ne.s32.totalorder %s19, %s21
      %p28 = scmp.eq.s32.totalorder %s16, 2
      %p29 = por %p27, %p28
      %p30 = scmp.ne.s32.totalorder %s21, %s22
      %p31 = scmp.eq.s32.totalorder %s16, 0
      %p32 = por %p30, %p31
      %p33 = scmp.ne.s32.totalorder %s21, %s22
      %p34 = scmp.eq.s32.totalorder %s17, 2
      %p35 = por %p33, %p34
      %p37 = scmp.ne.s32.totalorder %s22, %s36
      %p38 = scmp.eq.s32.totalorder %s17, 0
      %p39 = por %p37, %p38
      %s40 = ssub.s32 %s11, %s18
      %p41 = scmp.eq.s32.totalorder %s40, 0
      %s43 = sadd.s32 %s42, 1
      %s44 = scalar_select %p41, %s42, %s43
      %p47 = pneg %p41
      %p48 = scmp.eq.s32.totalorder %s11, 2
      %p49 = por %p47, %p48
      %p50 = scmp.ne.s32.totalorder %s42, %s45
      %p51 = scmp.eq.s32.totalorder %s11, 0
      %p52 = por %p50, %p51
      %p53 = scmp.ne.s32.totalorder %s42, %s45
      %p54 = scmp.eq.s32.totalorder %s16, 2
      %p55 = por %p53, %p54
      %p56 = scmp.ne.s32.totalorder %s45, %s46
      %p57 = scmp.eq.s32.totalorder %s16, 0
      %p58 = por %p56, %p57
      %p59 = scmp.ne.s32.totalorder %s45, %s46
      %p60 = scmp.eq.s32.totalorder %s17, 2
      %p61 = por %p59, %p60
      %p63 = scmp.ne.s32.totalorder %s46, %s62
      %p64 = scmp.eq.s32.totalorder %s17, 0
      %p65 = por %p63, %p64
      %s66 = ssub.s32 %s11, %s18
      %p67 = scmp.eq.s32.totalorder %s66, 0
      %s69 = sadd.s32 %s68, 1
      %s70 = scalar_select %p67, %s68, %s69
      %p73 = pneg %p67
      %p74 = scmp.eq.s32.totalorder %s11, 2
      %p75 = por %p73, %p74
      %p76 = scmp.ne.s32.totalorder %s68, %s71
      %p77 = scmp.eq.s32.totalorder %s11, 0
      %p78 = por %p76, %p77
      %p79 = scmp.ne.s32.totalorder %s68, %s71
      %p80 = scmp.eq.s32.totalorder %s16, 2
      %p81 = por %p79, %p80
      %p82 = scmp.ne.s32.totalorder %s71, %s72
      %p83 = scmp.eq.s32.totalorder %s16, 0
      %p84 = por %p82, %p83
      %p85 = scmp.ne.s32.totalorder %s71, %s72
      %p86 = scmp.eq.s32.totalorder %s17, 2
      %p87 = por %p85, %p86
      %p89 = scmp.ne.s32.totalorder %s72, %s88
      %p90 = scmp.eq.s32.totalorder %s17, 0
      %p91 = por %p89, %p90
      %p92 = scmp.le.s32.totalorder 1, %s11
      %p93 = scmp.lt.s32.totalorder %s11, 4
      %p94 = pnand %p92, %p93
      %p95 = pneg %p94
      // Predicated region
      $region9: #{shape_model_forward.7} parent=5 // pred_check
        _
      $region10: #{shape_model_forward.7} parent=5 // pred_check_branch
        %97 = sbr.rel (%p94) target = $region12
      $region11: #{shape_model_forward.7} parent=5 // pred_region
        %s98 = ssub.s32 %s11, 1
        // Predicated region
        $region13: #{shape_model_forward.7} parent=11 // pred_check
          %p99 = pneg %p32
        $region14: #{shape_model_forward.7} parent=11 // pred_check_branch
          %101 = sbr.rel (%p99) target = $region16
        $region15: #{shape_model_forward.7} parent=11 // pred_region
          _
        $region16: #{shape_model_forward.7} parent=11 // pred_fallthru
          _
      $region12: #{shape_model_forward.7} parent=5 // pred_fallthru
        _
      %p102 = scmp.lt.s32.totalorder %s11, 3
      // Predicated region
      $region17: #{shape_model_forward.7} parent=5 // pred_check
        %p103 = pneg %p102
      $region18: #{shape_model_forward.7} parent=5 // pred_check_branch
        %105 = sbr.rel (%p103) target = $region20
      $region19: #{shape_model_forward.7} parent=5 // pred_region
        // Predicated region
        $region21: #{shape_model_forward.7} parent=19 // pred_check
          %p106 = pneg %p52
        $region22: #{shape_model_forward.7} parent=19 // pred_check_branch
          %108 = sbr.rel (%p106) target = $region24
        $region23: #{shape_model_forward.7} parent=19 // pred_region
          %p109 = scmp.lt.s32.totalorder %s11, 2
          %s110 = scalar_select %p109, %s11, 2
          %s111 = smul.addr %s110, 4
          %s112 = scalar_lea.vmem %s1, %s111
        $region24: #{shape_model_forward.7} parent=19 // pred_fallthru
          _
      $region20: #{shape_model_forward.7} parent=5 // pred_fallthru
        _
      %p113 = scmp.le.s32.totalorder 1, %s11
      %p114 = scmp.lt.s32.totalorder %s11, 4
      %p115 = pnand %p113, %p114
      %p116 = pneg %p115
      // Predicated region
      $region25: #{shape_model_forward.7} parent=5 // pred_check
        _
      $region26: #{shape_model_forward.7} parent=5 // pred_check_branch
        %118 = sbr.rel (%p115) target = $region28
      $region27: #{shape_model_forward.7} parent=5 // pred_region
        %s119 = ssub.s32 %s11, 1
        %p120 = pneg %p32
        %p121 = pneg %p29
        %p122 = scmp.lt.s32.totalorder %s16, 2
        %s123 = scalar_select %p122, %s16, 2
        %s124 = smul.addr %s123, 4
        %s125 = scalar_lea.vmem %s1, %s124
        %p126 = pneg %p58
        %p127 = pneg %p55
        %p128 = pneg %p84
        %p129 = pneg %p81
        %s130 = sand.u32 %s71, 1
        %s131 = scalar_lea.sflag [#allocation3], %s130
        %s132 = sand.u32 %s71, 1
        %s133 = smul.addr %s132, 4
        %s134 = scalar_lea.vmem [#allocation2], %s133
        %p135 = scmp.lt.s32.totalorder %s16, 2
        %s136 = scalar_select %p135, %s16, 2
        %s137 = smul.addr %s136, 4
        %s138 = scalar_lea.vmem %s1, %s137
        %v139 = vld [vmem:[%s0] sm:$0xf]
        %v140 = vld [vmem:[%s138] sm:$0xf]
        %vm141 = vcmask 31744
        %v143 = vsel %vm141, %v139, 0
        %vm145 = vcmask 1043456
        %v147 = vsel %vm145, %v140, 0
        %149 = vmatprep.subr.mxu0 0.0
        %150 = vmatpush1.msra.mxu0 0.0
        %151 = vmatprep.subr.mxu0 0.0
        %152 = vmatpush1.msra.mxu0 0.0
        %153 = vmatprep.subr.mxu0 0.0
        %154 = vmatpush1.msra.mxu0 0.0
        %155 = vmatprep.subr.mxu0 0.0
        %156 = vmatpush1.msra.mxu0 0.0
        %157 = vmatprep.subr.mxu0 0.0
        %158 = vmatpush1.msra.mxu0 0.0
        %159 = vmatprep.subr.mxu0 0.0
        %160 = vmatpush1.msra.mxu0 0.0
        %161 = vmatprep.subr.mxu0 0.0
        %162 = vmatpush1.msra.mxu0 0.0
        %163 = vmatprep.subr.mxu0 0.0
        %164 = vmatpush1.msra.mxu0 0.0
        %165 = vmatprep.subr.mxu0 0.0
        %166 = vmatpush1.msra.mxu0 0.0
        %167 = vmatprep.subr.mxu0 0.0
        %168 = vmatpush1.msra.mxu0 0.0
        %169 = vmatprep.subr.mxu0 0.0
        %170 = vmatpush1.msra.mxu0 0.0
        %171 = vmatprep.subr.mxu0 0.0
        %172 = vmatpush1.msra.mxu0 0.0
        %173 = vmatprep.subr.mxu0 0.0
        %174 = vmatpush1.msra.mxu0 0.0
        %175 = vmatprep.subr.mxu0 0.0
        %176 = vmatpush1.msra.mxu0 0.0
        %177 = vmatprep.subr.mxu0 0.0
        %178 = vmatpush1.msra.mxu0 0.0
        %179 = vmatprep.subr.mxu0 0.0
        %180 = vmatpush1.msra.mxu0 %v147
        %181 = vmatprep.subr.mxu0 0.0
        %182 = vmatpush2.msra.mxu0 0.0
        %183 = vmatprep.subr.mxu0 0.0
        %184 = vmatpush2.msra.mxu0 0.0
        %185 = vmatprep.subr.mxu0 0.0
        %186 = vmatpush2.msra.mxu0 0.0
        %187 = vmatprep.subr.mxu0 0.0
        %188 = vmatpush2.msra.mxu0 0.0
        %189 = vmatprep.subr.mxu0 0.0
        %190 = vmatpush2.msra.mxu0 0.0
        %191 = vmatprep.subr.mxu0 0.0
        %192 = vmatpush2.msra.mxu0 0.0
        %193 = vmatprep.subr.mxu0 0.0
        %194 = vmatpush2.msra.mxu0 0.0
        %195 = vmatprep.subr.mxu0 0.0
        %196 = vmatpush2.msra.mxu0 0.0
        %197 = vmatprep.subr.mxu0 0.0
        %198 = vmatpush2.msra.mxu0 0.0
        %199 = vmatprep.subr.mxu0 0.0
        %200 = vmatpush2.msra.mxu0 0.0
        %201 = vmatprep.subr.mxu0 0.0
        %202 = vmatpush2.msra.mxu0 0.0
        %203 = vmatprep.subr.mxu0 0.0
        %204 = vmatpush2.msra.mxu0 0.0
        %205 = vmatprep.subr.mxu0 0.0
        %206 = vmatpush2.msra.mxu0 0.0
        %207 = vmatprep.subr.mxu0 0.0
        %208 = vmatpush2.msra.mxu0 0.0
        %209 = vmatprep.subr.mxu0 0.0
        %210 = vmatpush2.msra.mxu0 0.0
        %211 = vmatprep.subr.mxu0 0.0
        %212 = vmatpush2.msra.mxu0 0.0
        %213 = vmatprep.mubr.f32.mxu0 0.0
        %214 = vmatmul.mubr.f32.gmra.mxu0 %v143
        %v215 = vpop.f32.mrf.mxu0
        %v216 = vadd.f32 0.0, %v215
        %v217 = vpop.f32.mrf.mxu0
        %218 = vdwg.mxu0
        %219 = vst [vmem:[%s134] sm:$0xf] %v216
        %s220 = sand.u32 %s71, 1
        %s221 = scalar_lea.sflag [#allocation3], %s220
        %s222 = sand.u32 %s71, 1
        %s223 = smul.addr %s222, 4
        %s224 = scalar_lea.vmem [#allocation2], %s223
        // Predicated region
        $region29: #{shape_model_forward.7} parent=27 // pred_check
          %p225 = pneg %p81
        $region30: #{shape_model_forward.7} parent=27 // pred_check_branch
          %227 = sbr.rel (%p225) target = $region32
        $region31: #{shape_model_forward.7} parent=27 // pred_region
          %s229 = ssub.s32 64, 64
          %230 = vsyncadd %s221, %s229
          %s231 = smul.addr %s16, 64
          %s232 = scalar_lea.hbm %s2, %s231
          %s234 = sshll.u32 %s224, 4
          %s235 = int_to_ptr.vmem [resolvable:$true] %s234
          %237 = dma.vmem_to_hbm [thread:$0]  %s235, 64, %s232, %s221
        $region32: #{shape_model_forward.7} parent=27 // pred_fallthru
          _
      $region28: #{shape_model_forward.7} parent=5 // pred_fallthru
        _
      %p238 = scmp.le.s32.totalorder 2, %s11
      // Predicated region
      $region33: #{shape_model_forward.7} parent=5 // pred_check
        %p239 = pneg %p238
      $region34: #{shape_model_forward.7} parent=5 // pred_check_branch
        %241 = sbr.rel (%p239) target = $region36
      $region35: #{shape_model_forward.7} parent=5 // pred_region
        %s242 = ssub.s32 %s11, 2
        // Predicated region
        $region37: #{shape_model_forward.7} parent=35 // pred_check
          %p243 = pneg %p87
        $region38: #{shape_model_forward.7} parent=35 // pred_check_branch
          %245 = sbr.rel (%p243) target = $region40
        $region39: #{shape_model_forward.7} parent=35 // pred_region
          %s246 = sand.u32 %s72, 1
          %s247 = scalar_lea.sflag [#allocation3], %s246
          %s248 = sand.u32 %s72, 1
          %s249 = smul.addr %s248, 4
          %s250 = scalar_lea.vmem [#allocation2], %s249
          %251 = dma.done %s247, 64
        $region40: #{shape_model_forward.7} parent=35 // pred_fallthru
          _
      $region36: #{shape_model_forward.7} parent=5 // pred_fallthru
        _
    $region6: #{shape_model_forward.7} parent=1 // loop_footer
      %s15 = sadd.s32 1, %s11
    $region7: #{shape_model_forward.7} parent=1 // loop_footer_branch
      %10 = sbr.rel target = $region3
    $region8: #{shape_model_forward.7} parent=1 // loop_exit
      _
    %252 = vsyncpa [#allocation3], 1
    %s253 = scalar_lea.sflag [#allocation3], 1
    %254 = vsyncpa %s253, 1

// kernel: custom-call.5
$region0: #{custom-call.5}
  %s0 = inlined_call_operand.vmem [shape: f32[4,2,2], index: 0, kind: input, shape index: {}]
  %s1 = inlined_call_operand.vmem [shape: f32[4,2,2], index: 1, kind: input, shape index: {}]
  %s2 = inlined_call_operand.vmem [shape: f32[4,2,2], index: 2, kind: input, shape index: {}]
  %s3 = inlined_call_operand.vmem [shape: f32[4,2,2], index: 3, kind: input, shape index: {}]
  %s4 = inlined_call_operand.vmem [shape: f32[4,2], index: 4, kind: output, shape index: {0}]
  %s5 = inlined_call_operand.vmem [shape: f32[4,2], index: 5, kind: output, shape index: {1}]
  %s6 = inlined_call_operand.vmem [shape: f32[4,2,2], index: 6, kind: output, shape index: {2}]
  %s7 = inlined_call_operand.vmem [shape: f32[4,2,2], index: 7, kind: output, shape index: {3}]
  %s8 = inlined_call_operand.vmem [shape: f32[4,2,2], index: 8, kind: output, shape index: {4}]
  %s9 = inlined_call_operand.vmem [shape: f32[4,2,2], index: 9, kind: output, shape index: {5}]
  %10 = xla_tuple %s4, %s5, %s6, %s7, %s8, %s9
  $region1: #{custom-call.5} parent=0
    #allocation0 [shape = 'u8[4096]{0}', space=vmem, size = 0x1000, scoped, tag = 'operand span for operand 0']
    #allocation1 [shape = 'u8[2048]{0}', space=vmem, size = 0x800, scoped, tag = 'packed  for operand 0']
    #allocation2 [shape = 'u8[4096]{0}', space=vmem, size = 0x1000, scoped, tag = 'operand span for operand 1']
    #allocation3 [shape = 'u8[2048]{0}', space=vmem, size = 0x800, scoped, tag = 'packed  for operand 1']
    #allocation4 [shape = 'u8[4096]{0}', space=vmem, size = 0x1000, scoped, tag = 'operand span for operand 2']
    #allocation5 [shape = 'u8[2048]{0}', space=vmem, size = 0x800, scoped, tag = 'packed  for operand 2']
    #allocation6 [shape = 'u8[4096]{0}', space=vmem, size = 0x1000, scoped, tag = 'operand span for operand 3']
    #allocation7 [shape = 'u8[2048]{0}', space=vmem, size = 0x800, scoped, tag = 'packed  for operand 3']
    #allocation8 [shape = 'u8[4096]{0}', space=vmem, size = 0x1000, scoped, tag = 'operand span for operand 4']
    #allocation9 [shape = 'u8[4096]{0}', space=vmem, size = 0x1000, scoped, tag = 'packed  for operand 4']
    #allocation10 [shape = 'u8[4096]{0}', space=vmem, size = 0x1000, scoped, tag = 'operand span for operand 5']
    #allocation11 [shape = 'u8[4096]{0}', space=vmem, size = 0x1000, scoped, tag = 'packed  for operand 5']
    #allocation12 [shape = 'u8[4096]{0}', space=vmem, size = 0x1000, scoped, tag = 'operand span for operand 6']
    #allocation13 [shape = 'u8[2048]{0}', space=vmem, size = 0x800, scoped, tag = 'packed  for operand 6']
    #allocation14 [shape = 'u8[4096]{0}', space=vmem, size = 0x1000, scoped, tag = 'operand span for operand 7']
    #allocation15 [shape = 'u8[2048]{0}', space=vmem, size = 0x800, scoped, tag = 'packed  for operand 7']
    #allocation16 [shape = 'u8[4096]{0}', space=vmem, size = 0x1000, scoped, tag = 'operand span for operand 8']
    #allocation17 [shape = 'u8[2048]{0}', space=vmem, size = 0x800, scoped, tag = 'packed  for operand 8']
    #allocation18 [shape = 'u8[4096]{0}', space=vmem, size = 0x1000, scoped, tag = 'operand span for operand 9']
    #allocation19 [shape = 'u8[2048]{0}', space=vmem, size = 0x800, scoped, tag = 'packed  for operand 9']
    loop: start=0, step=1, limit=6
    $region2: #{custom-call.5} parent=1 // loop_pre_header
      _
    $region3: #{custom-call.5} parent=1 // loop_header
      %s12 = sphi 0, %s16
      %p13 = scmp.ge.s32.totalorder %s12, 6
      %s24 = sphi 0, %s26
      %s27 = sphi 0, %s24
      %s28 = sphi 0, %s27
      %s44 = sphi 0, %s28
      %s52 = sphi 0, %s54
      %s55 = sphi 0, %s52
      %s56 = sphi 0, %s55
      %s72 = sphi 0, %s56
    $region4: #{custom-call.5} parent=1 // loop_header_branch
      %15 = sbr.rel (%p13) target = $region8
    $region5: #{custom-call.5} parent=1 // loop_body
      %s17 = ssub.s32 %s12, 1
      %s18 = ssub.s32 %s12, 2
      %s19 = sadd.s32 %s12, 1
      %s20 = sshrl.u32 %s12, 3
      %s21 = sshrl.u32 %s19, 3
      %s22 = ssub.s32 %s20, %s21
      %p23 = scmp.eq.s32.totalorder %s22, 0
      %s25 = sadd.s32 %s24, 1
      %s26 = scalar_select %p23, %s24, %s25
      %p29 = pneg %p23
      %p30 = scmp.eq.s32.totalorder %s12, 3
      %p31 = por %p29, %p30
      %p32 = scmp.ne.s32.totalorder %s24, %s27
      %p33 = scmp.eq.s32.totalorder %s12, 0
      %p34 = por %p32, %p33
      %p35 = scmp.ne.s32.totalorder %s24, %s27
      %p36 = scmp.eq.s32.totalorder %s17, 3
      %p37 = por %p35, %p36
      %p38 = scmp.ne.s32.totalorder %s27, %s28
      %p39 = scmp.eq.s32.totalorder %s17, 0
      %p40 = por %p38, %p39
      %p41 = scmp.ne.s32.totalorder %s27, %s28
      %p42 = scmp.eq.s32.totalorder %s18, 3
      %p43 = por %p41, %p42
      %p45 = scmp.ne.s32.totalorder %s28, %s44
      %p46 = scmp.eq.s32.totalorder %s18, 0
      %p47 = por %p45, %p46
      %s48 = sshrl.u32 %s12, 3
      %s49 = sshrl.u32 %s19, 3
      %s50 = ssub.s32 %s48, %s49
      %p51 = scmp.eq.s32.totalorder %s50, 0
      %s53 = sadd.s32 %s52, 1
      %s54 = scalar_select %p51, %s52, %s53
      %p57 = pneg %p51
      %p58 = scmp.eq.s32.totalorder %s12, 3
      %p59 = por %p57, %p58
      %p60 = scmp.ne.s32.totalorder %s52, %s55
      %p61 = scmp.eq.s32.totalorder %s12, 0
      %p62 = por %p60, %p61
      %p63 = scmp.ne.s32.totalorder %s52, %s55
      %p64 = scmp.eq.s32.totalorder %s17, 3
      %p65 = por %p63, %p64
      %p66 = scmp.ne.s32.totalorder %s55, %s56
      %p67 = scmp.eq.s32.totalorder %s17, 0
      %p68 = por %p66, %p67
      %p69 = scmp.ne.s32.totalorder %s55, %s56
      %p70 = scmp.eq.s32.totalorder %s18, 3
      %p71 = por %p69, %p70
      %p73 = scmp.ne.s32.totalorder %s56, %s72
      %p74 = scmp.eq.s32.totalorder %s18, 0
      %p75 = por %p73, %p74
      %p76 = scmp.le.s32.totalorder 1, %s12
      %p77 = scmp.lt.s32.totalorder %s12, 5
      %p78 = pnand %p76, %p77
      %p79 = pneg %p78
      // Predicated region
      $region9: #{custom-call.5} parent=5 // pred_check
        _
      $region10: #{custom-call.5} parent=5 // pred_check_branch
        %81 = sbr.rel (%p78) target = $region12
      $region11: #{custom-call.5} parent=5 // pred_region
        %s82 = ssub.s32 %s12, 1
      $region12: #{custom-call.5} parent=5 // pred_fallthru
        _
      %p83 = scmp.lt.s32.totalorder %s12, 4
      // Predicated region
      $region13: #{custom-call.5} parent=5 // pred_check
        %p84 = pneg %p83
      $region14: #{custom-call.5} parent=5 // pred_check_branch
        %86 = sbr.rel (%p84) target = $region16
      $region15: #{custom-call.5} parent=5 // pred_region
        %s87 = sand.u32 %s12, 1
        %s88 = sand.u32 %s12, 1
        %s89 = smul.addr %s88, 2
        %s90 = scalar_lea.vmem [#allocation1], %s89
        %s91 = smul.addr %s12, 2
        %s92 = scalar_lea.vmem %s0, %s91
        // Predicated region
        $region17: #{custom-call.5} parent=15 // pred_check
          _
        $region18: #{custom-call.5} parent=15 // pred_check_branch
          %94 = sbr.rel (0) target = $region20
        $region19: #{custom-call.5} parent=15 // pred_region
          // Predicated region
          $region21: #{custom-call.5} parent=19 // pred_check
            _
          $region22: #{custom-call.5} parent=19 // pred_check_branch
            %96 = sbr.rel target = $region24
          $region23: #{custom-call.5} parent=19 // pred_region
            // Predicated region
            $region36: #{custom-call.5} parent=23 // pred_check
              _
            $region37: #{custom-call.5} parent=23 // pred_check_branch
              %112 = sbr.rel (0) target = $region39
            $region38: #{custom-call.5} parent=23 // pred_region
              %s114 = ssub.s32 4, 1
              loop: start=0, step=1, limit=1
              $region40: #{custom-call.5} parent=38 // loop_pre_header
                _
              $region41: #{custom-call.5} parent=38 // loop_header
                %s116 = sphi 0, %s120
                %p117 = scmp.ge.s32.totalorder %s116, 1
                %s121 = sphi %s92, %s92
                %s122 = sphi %s90, %s90
              $region42: #{custom-call.5} parent=38 // loop_header_branch
                %119 = sbr.rel (%p117) target = $region46
              $region43: #{custom-call.5} parent=38 // loop_body
                %v123 = vld [vmem:[%s121] sm:%s114]
                %124 = vst [vmem:[%s122] sm:%s114] %v123
              $region44: #{custom-call.5} parent=38 // loop_footer
                %s120 = sadd.s32 1, %s116
              $region45: #{custom-call.5} parent=38 // loop_footer_branch
                %115 = sbr.rel target = $region41
              $region46: #{custom-call.5} parent=38 // loop_exit
                _
            $region39: #{custom-call.5} parent=23 // pred_fallthru
              _
          $region24: #{custom-call.5} parent=19 // pred_fallthru
            _
          // Predicated region
          $region25: #{custom-call.5} parent=19 // pred_check
            _
          $region26: #{custom-call.5} parent=19 // pred_check_branch
            %98 = sbr.rel (0) target = $region28
          $region27: #{custom-call.5} parent=19 // pred_region
            %s100 = ssub.s32 4, 1
            loop: start=0, step=1, limit=1
            $region29: #{custom-call.5} parent=27 // loop_pre_header
              _
            $region30: #{custom-call.5} parent=27 // loop_header
              %s102 = sphi 0, %s106
              %p103 = scmp.ge.s32.totalorder %s102, 1
              %s107 = sphi %s92, %s92
              %s108 = sphi %s90, %s90
            $region31: #{custom-call.5} parent=27 // loop_header_branch
              %105 = sbr.rel (%p103) target = $region35
            $region32: #{custom-call.5} parent=27 // loop_body
              %v109 = vld [vmem:[%s107] sm:%s100]
              %110 = vst [vmem:[%s108] sm:%s100] %v109
            $region33: #{custom-call.5} parent=27 // loop_footer
              %s106 = sadd.s32 1, %s102
            $region34: #{custom-call.5} parent=27 // loop_footer_branch
              %101 = sbr.rel target = $region30
            $region35: #{custom-call.5} parent=27 // loop_exit
              _
          $region28: #{custom-call.5} parent=19 // pred_fallthru
            _
        $region20: #{custom-call.5} parent=15 // pred_fallthru
          _
        %125 = vnop
        %s126 = sand.u32 %s12, 1
        %s127 = sand.u32 %s12, 1
        %s128 = smul.addr %s127, 2
        %s129 = scalar_lea.vmem [#allocation3], %s128
        %s130 = smul.addr %s12, 2
        %s131 = scalar_lea.vmem %s1, %s130
        // Predicated region
        $region47: #{custom-call.5} parent=15 // pred_check
          _
        $region48: #{custom-call.5} parent=15 // pred_check_branch
          %133 = sbr.rel (0) target = $region50
        $region49: #{custom-call.5} parent=15 // pred_region
          // Predicated region
          $region51: #{custom-call.5} parent=49 // pred_check
            _
          $region52: #{custom-call.5} parent=49 // pred_check_branch
            %135 = sbr.rel target = $region54
          $region53: #{custom-call.5} parent=49 // pred_region
            // Predicated region
            $region66: #{custom-call.5} parent=53 // pred_check
              _
            $region67: #{custom-call.5} parent=53 // pred_check_branch
              %151 = sbr.rel (0) target = $region69
            $region68: #{custom-call.5} parent=53 // pred_region
              %s153 = ssub.s32 4, 1
              loop: start=0, step=1, limit=1
              $region70: #{custom-call.5} parent=68 // loop_pre_header
                _
              $region71: #{custom-call.5} parent=68 // loop_header
                %s155 = sphi 0, %s159
                %p156 = scmp.ge.s32.totalorder %s155, 1
                %s160 = sphi %s131, %s131
                %s161 = sphi %s129, %s129
              $region72: #{custom-call.5} parent=68 // loop_header_branch
                %158 = sbr.rel (%p156) target = $region76
              $region73: #{custom-call.5} parent=68 // loop_body
                %v162 = vld [vmem:[%s160] sm:%s153]
                %163 = vst [vmem:[%s161] sm:%s153] %v162
              $region74: #{custom-call.5} parent=68 // loop_footer
                %s159 = sadd.s32 1, %s155
              $region75: #{custom-call.5} parent=68 // loop_footer_branch
                %154 = sbr.rel target = $region71
              $region76: #{custom-call.5} parent=68 // loop_exit
                _
            $region69: #{custom-call.5} parent=53 // pred_fallthru
              _
          $region54: #{custom-call.5} parent=49 // pred_fallthru
            _
          // Predicated region
          $region55: #{custom-call.5} parent=49 // pred_check
            _
          $region56: #{custom-call.5} parent=49 // pred_check_branch
            %137 = sbr.rel (0) target = $region58
          $region57: #{custom-call.5} parent=49 // pred_region
            %s139 = ssub.s32 4, 1
            loop: start=0, step=1, limit=1
            $region59: #{custom-call.5} parent=57 // loop_pre_header
              _
            $region60: #{custom-call.5} parent=57 // loop_header
              %s141 = sphi 0, %s145
              %p142 = scmp.ge.s32.totalorder %s141, 1
              %s146 = sphi %s131, %s131
              %s147 = sphi %s129, %s129
            $region61: #{custom-call.5} parent=57 // loop_header_branch
              %144 = sbr.rel (%p142) target = $region65
            $region62: #{custom-call.5} parent=57 // loop_body
              %v148 = vld [vmem:[%s146] sm:%s139]
              %149 = vst [vmem:[%s147] sm:%s139] %v148
            $region63: #{custom-call.5} parent=57 // loop_footer
              %s145 = sadd.s32 1, %s141
            $region64: #{custom-call.5} parent=57 // loop_footer_branch
              %140 = sbr.rel target = $region60
            $region65: #{custom-call.5} parent=57 // loop_exit
              _
          $region58: #{custom-call.5} parent=49 // pred_fallthru
            _
        $region50: #{custom-call.5} parent=15 // pred_fallthru
          _
        %164 = vnop
        %s165 = sand.u32 %s12, 1
        %s166 = sand.u32 %s12, 1
        %s167 = smul.addr %s166, 2
        %s168 = scalar_lea.vmem [#allocation5], %s167
        %s169 = smul.addr %s12, 2
        %s170 = scalar_lea.vmem %s2, %s169
        // Predicated region
        $region77: #{custom-call.5} parent=15 // pred_check
          _
        $region78: #{custom-call.5} parent=15 // pred_check_branch
          %172 = sbr.rel (0) target = $region80
        $region79: #{custom-call.5} parent=15 // pred_region
          // Predicated region
          $region81: #{custom-call.5} parent=79 // pred_check
            _
          $region82: #{custom-call.5} parent=79 // pred_check_branch
            %174 = sbr.rel target = $region84
          $region83: #{custom-call.5} parent=79 // pred_region
            // Predicated region
            $region96: #{custom-call.5} parent=83 // pred_check
              _
            $region97: #{custom-call.5} parent=83 // pred_check_branch
              %190 = sbr.rel (0) target = $region99
            $region98: #{custom-call.5} parent=83 // pred_region
              %s192 = ssub.s32 4, 1
              loop: start=0, step=1, limit=1
              $region100: #{custom-call.5} parent=98 // loop_pre_header
                _
              $region101: #{custom-call.5} parent=98 // loop_header
                %s194 = sphi 0, %s198
                %p195 = scmp.ge.s32.totalorder %s194, 1
                %s199 = sphi %s170, %s170
                %s200 = sphi %s168, %s168
              $region102: #{custom-call.5} parent=98 // loop_header_branch
                %197 = sbr.rel (%p195) target = $region106
              $region103: #{custom-call.5} parent=98 // loop_body
                %v201 = vld [vmem:[%s199] sm:%s192]
                %202 = vst [vmem:[%s200] sm:%s192] %v201
              $region104: #{custom-call.5} parent=98 // loop_footer
                %s198 = sadd.s32 1, %s194
              $region105: #{custom-call.5} parent=98 // loop_footer_branch
                %193 = sbr.rel target = $region101
              $region106: #{custom-call.5} parent=98 // loop_exit
                _
            $region99: #{custom-call.5} parent=83 // pred_fallthru
              _
          $region84: #{custom-call.5} parent=79 // pred_fallthru
            _
          // Predicated region
          $region85: #{custom-call.5} parent=79 // pred_check
            _
          $region86: #{custom-call.5} parent=79 // pred_check_branch
            %176 = sbr.rel (0) target = $region88
          $region87: #{custom-call.5} parent=79 // pred_region
            %s178 = ssub.s32 4, 1
            loop: start=0, step=1, limit=1
            $region89: #{custom-call.5} parent=87 // loop_pre_header
              _
            $region90: #{custom-call.5} parent=87 // loop_header
              %s180 = sphi 0, %s184
              %p181 = scmp.ge.s32.totalorder %s180, 1
              %s185 = sphi %s170, %s170
              %s186 = sphi %s168, %s168
            $region91: #{custom-call.5} parent=87 // loop_header_branch
              %183 = sbr.rel (%p181) target = $region95
            $region92: #{custom-call.5} parent=87 // loop_body
              %v187 = vld [vmem:[%s185] sm:%s178]
              %188 = vst [vmem:[%s186] sm:%s178] %v187
            $region93: #{custom-call.5} parent=87 // loop_footer
              %s184 = sadd.s32 1, %s180
            $region94: #{custom-call.5} parent=87 // loop_footer_branch
              %179 = sbr.rel target = $region90
            $region95: #{custom-call.5} parent=87 // loop_exit
              _
          $region88: #{custom-call.5} parent=79 // pred_fallthru
            _
        $region80: #{custom-call.5} parent=15 // pred_fallthru
          _
        %203 = vnop
        %s204 = sand.u32 %s12, 1
        %s205 = sand.u32 %s12, 1
        %s206 = smul.addr %s205, 2
        %s207 = scalar_lea.vmem [#allocation7], %s206
        %s208 = smul.addr %s12, 2
        %s209 = scalar_lea.vmem %s3, %s208
        // Predicated region
        $region107: #{custom-call.5} parent=15 // pred_check
          _
        $region108: #{custom-call.5} parent=15 // pred_check_branch
          %211 = sbr.rel (0) target = $region110
        $region109: #{custom-call.5} parent=15 // pred_region
          // Predicated region
          $region111: #{custom-call.5} parent=109 // pred_check
            _
          $region112: #{custom-call.5} parent=109 // pred_check_branch
            %213 = sbr.rel target = $region114
          $region113: #{custom-call.5} parent=109 // pred_region
            // Predicated region
            $region126: #{custom-call.5} parent=113 // pred_check
              _
            $region127: #{custom-call.5} parent=113 // pred_check_branch
              %229 = sbr.rel (0) target = $region129
            $region128: #{custom-call.5} parent=113 // pred_region
              %s231 = ssub.s32 4, 1
              loop: start=0, step=1, limit=1
              $region130: #{custom-call.5} parent=128 // loop_pre_header
                _
              $region131: #{custom-call.5} parent=128 // loop_header
                %s233 = sphi 0, %s237
                %p234 = scmp.ge.s32.totalorder %s233, 1
                %s238 = sphi %s209, %s209
                %s239 = sphi %s207, %s207
              $region132: #{custom-call.5} parent=128 // loop_header_branch
                %236 = sbr.rel (%p234) target = $region136
              $region133: #{custom-call.5} parent=128 // loop_body
                %v240 = vld [vmem:[%s238] sm:%s231]
                %241 = vst [vmem:[%s239] sm:%s231] %v240
              $region134: #{custom-call.5} parent=128 // loop_footer
                %s237 = sadd.s32 1, %s233
              $region135: #{custom-call.5} parent=128 // loop_footer_branch
                %232 = sbr.rel target = $region131
              $region136: #{custom-call.5} parent=128 // loop_exit
                _
            $region129: #{custom-call.5} parent=113 // pred_fallthru
              _
          $region114: #{custom-call.5} parent=109 // pred_fallthru
            _
          // Predicated region
          $region115: #{custom-call.5} parent=109 // pred_check
            _
          $region116: #{custom-call.5} parent=109 // pred_check_branch
            %215 = sbr.rel (0) target = $region118
          $region117: #{custom-call.5} parent=109 // pred_region
            %s217 = ssub.s32 4, 1
            loop: start=0, step=1, limit=1
            $region119: #{custom-call.5} parent=117 // loop_pre_header
              _
            $region120: #{custom-call.5} parent=117 // loop_header
              %s219 = sphi 0, %s223
              %p220 = scmp.ge.s32.totalorder %s219, 1
              %s224 = sphi %s209, %s209
              %s225 = sphi %s207, %s207
            $region121: #{custom-call.5} parent=117 // loop_header_branch
              %222 = sbr.rel (%p220) target = $region125
            $region122: #{custom-call.5} parent=117 // loop_body
              %v226 = vld [vmem:[%s224] sm:%s217]
              %227 = vst [vmem:[%s225] sm:%s217] %v226
            $region123: #{custom-call.5} parent=117 // loop_footer
              %s223 = sadd.s32 1, %s219
            $region124: #{custom-call.5} parent=117 // loop_footer_branch
              %218 = sbr.rel target = $region120
            $region125: #{custom-call.5} parent=117 // loop_exit
              _
          $region118: #{custom-call.5} parent=109 // pred_fallthru
            _
        $region110: #{custom-call.5} parent=15 // pred_fallthru
          _
        %242 = vnop
      $region16: #{custom-call.5} parent=5 // pred_fallthru
        _
      %p243 = scmp.le.s32.totalorder 1, %s12
      %p244 = scmp.lt.s32.totalorder %s12, 5
      %p245 = pnand %p243, %p244
      %p246 = pneg %p245
      // Predicated region
      $region137: #{custom-call.5} parent=5 // pred_check
        _
      $region138: #{custom-call.5} parent=5 // pred_check_branch
        %248 = sbr.rel (%p245) target = $region140
      $region139: #{custom-call.5} parent=5 // pred_region
        #allocation20 [shape = 'f32[2,2]{1,0}', space=vmem, size = 0x1000, scoped, tag = 'a top-left matrix']
        #allocation21 [shape = 'f32[2,2]{1,0}', space=vmem, size = 0x1000, scoped, tag = 'a top-right matrix']
        #allocation22 [shape = 'f32[2,2]{1,0}', space=vmem, size = 0x1000, scoped, tag = 'a bottom-left matrix']
        #allocation23 [shape = 'f32[2,2]{1,0}', space=vmem, size = 0x1000, scoped, tag = 'a bottom-right matrix']
        %s249 = ssub.s32 %s12, 1
        %s250 = sand.u32 %s17, 1
        %s251 = sand.u32 %s17, 1
        %s252 = smul.addr %s251, 2
        %s253 = scalar_lea.vmem [#allocation1], %s252
        %s254 = sand.u32 %s17, 1
        %s255 = sand.u32 %s17, 1
        %s256 = smul.addr %s255, 2
        %s257 = scalar_lea.vmem [#allocation3], %s256
        %s258 = sand.u32 %s17, 1
        %s259 = sand.u32 %s17, 1
        %s260 = smul.addr %s259, 2
        %s261 = scalar_lea.vmem [#allocation5], %s260
        %s262 = sand.u32 %s17, 1
        %s263 = sand.u32 %s17, 1
        %s264 = smul.addr %s263, 2
        %s265 = scalar_lea.vmem [#allocation7], %s264
        %s266 = sand.u32 %s17, 1
        %s267 = sand.u32 %s17, 1
        %s268 = smul.addr %s267, 2
        %s269 = scalar_lea.vmem [#allocation1], %s268
        %s270 = sand.u32 %s17, 1
        %s271 = sand.u32 %s17, 1
        %s272 = smul.addr %s271, 2
        %s273 = scalar_lea.vmem [#allocation3], %s272
        %s274 = sand.u32 %s17, 1
        %s275 = sand.u32 %s17, 1
        %s276 = smul.addr %s275, 2
        %s277 = scalar_lea.vmem [#allocation5], %s276
        %s278 = sand.u32 %s17, 1
        %s279 = sand.u32 %s17, 1
        %s280 = smul.addr %s279, 2
        %s281 = scalar_lea.vmem [#allocation7], %s280
        %p282 = pneg %p40
        %p283 = pneg %p37
        %s284 = sand.u32 %s27, 1
        %s285 = sand.u32 %s27, 1
        %s286 = smul.addr %s285, 4
        %s287 = scalar_lea.vmem [#allocation9], %s286
        %p288 = pneg %p68
        %p289 = pneg %p65
        %s290 = sand.u32 %s55, 1
        %s291 = sand.u32 %s55, 1
        %s292 = smul.addr %s291, 4
        %s293 = scalar_lea.vmem [#allocation11], %s292
        %s294 = sand.u32 %s17, 1
        %s295 = sand.u32 %s17, 1
        %s296 = smul.addr %s295, 2
        %s297 = scalar_lea.vmem [#allocation13], %s296
        %s298 = sand.u32 %s17, 1
        %s299 = sand.u32 %s17, 1
        %s300 = smul.addr %s299, 2
        %s301 = scalar_lea.vmem [#allocation15], %s300
        %s302 = sand.u32 %s17, 1
        %s303 = sand.u32 %s17, 1
        %s304 = smul.addr %s303, 2
        %s305 = scalar_lea.vmem [#allocation17], %s304
        %s306 = sand.u32 %s17, 1
        %s307 = sand.u32 %s17, 1
        %s308 = smul.addr %s307, 2
        %s309 = scalar_lea.vmem [#allocation19], %s308
        %s311 = sshll.u32 1, 2
        %s312 = ssub.s32 %s311, 1
        %v313 = vld [vmem:[%s269] sm:%s312]
        %314 = vst [vmem:[#allocation0] sm:%s312] %v313
        %s316 = sshll.u32 1, 2
        %s317 = ssub.s32 %s316, 1
        %v318 = vld [vmem:[%s273] sm:%s317]
        %319 = vst [vmem:[#allocation2] sm:%s317] %v318
        %s321 = sshll.u32 1, 2
        %s322 = ssub.s32 %s321, 1
        %v323 = vld [vmem:[%s277] sm:%s322]
        %324 = vst [vmem:[#allocation4] sm:%s322] %v323
        %s326 = sshll.u32 1, 2
        %s327 = ssub.s32 %s326, 1
        %v328 = vld [vmem:[%s281] sm:%s327]
        %329 = vst [vmem:[#allocation6] sm:%s327] %v328
        %s330 = sshrl.u32 %s17, 3
        %s331 = sshrl.u32 %s17, 3
        %s332 = smov [#allocation20]
        %v333 = vld [vmem:[#allocation0] sm:$0xff]
        %334 = vst [vmem:[%s332] sm:$0xff] %v333
        %s335 = smov [#allocation21]
        %v336 = vld [vmem:[#allocation2] sm:$0xff]
        %337 = vst [vmem:[%s335] sm:$0xff] %v336
        %s338 = smov [#allocation22]
        %v339 = vld [vmem:[#allocation4] sm:$0xff]
        %340 = vst [vmem:[%s338] sm:$0xff] %v339
        %s341 = smov [#allocation23]
        %v342 = vld [vmem:[#allocation6] sm:$0xff]
        %343 = vst [vmem:[%s341] sm:$0xff] %v342
        %344 = vst [vmem:[#allocation12] sm:$0xff] 0.0
        %345 = vst [vmem:[#allocation14] sm:$0xff] 0.0
        %346 = vst [vmem:[#allocation16] sm:$0xff] 0.0
        %347 = vst [vmem:[#allocation18] sm:$0xff] 0.0
        %s348 = smov [#allocation12]
        %v349 = vlaneseq
        %v350 = vand.u32 %v349, 127
        %v351 = vmov %v350
        %v352 = vlaneseq
        %v353 = vshrl.u32 %v352, 7
        %v354 = vmov %v353
        %v355 = vld [vmem:[%s348] sm:$0x3]
        %vm358 = vcmp.eq.s32.totalorder %v354, %v351
        %v359 = vsel %vm358, 1.0, %v355
        %360 = vst [vmem:[%s348] sm:$0x3] %v359
        %s361 = smov [#allocation18]
        %v362 = vlaneseq
        %v363 = vand.u32 %v362, 127
        %v364 = vmov %v363
        %v365 = vlaneseq
        %v366 = vshrl.u32 %v365, 7
        %v367 = vmov %v366
        %v368 = vld [vmem:[%s361] sm:$0x3]
        %vm371 = vcmp.eq.s32.totalorder %v367, %v364
        %v372 = vsel %vm371, 1.0, %v368
        %373 = vst [vmem:[%s361] sm:$0x3] %v372
        // While loop
        $region141: #{custom-call.5} parent=139 // loop_pre_header
          _
        $region142: #{custom-call.5} parent=139 // loop_header
          %s375 = sphi 0, %s917
          %v376 = vlaneseq
          %v377 = vand.u32 %v376, 127
          %v378 = vmov %v377
          %v379 = vlaneseq
          %v380 = vshrl.u32 %v379, 7
          %v381 = vmov %v380
          %s382 = smov [#allocation20]
          %v383 = vlaneseq
          %v384 = vand.u32 %v383, 127
          %vm385 = vcmp.ge.s32.totalorder %v384, 0
          %vm386 = vcmp.lt.s32.totalorder %v384, 2
          %vm387 = vmand %vm385, %vm386
          %v388 = vld [vmem:[%s382] sm:$0x3]
          %v389 = vsel %vm387, %v388, 0.0
          %v390 = vmul.f32 %v389, %v389
          %vm393 = vcmp.eq.s32.totalorder %v381, %v378
          %v394 = vsel %vm393, 0.0, %v390
          %v395 = vlaneseq
          %v396 = vand.u32 %v395, 127
          %v397 = vmov %v396
          %v398 = vlaneseq
          %v399 = vshrl.u32 %v398, 7
          %v400 = vmov %v399
          %s401 = smov [#allocation21]
          %v402 = vlaneseq
          %v403 = vand.u32 %v402, 127
          %vm404 = vcmp.ge.s32.totalorder %v403, 0
          %vm405 = vcmp.lt.s32.totalorder %v403, 2
          %vm406 = vmand %vm404, %vm405
          %v407 = vld [vmem:[%s401] sm:$0x3]
          %v408 = vsel %vm406, %v407, 0.0
          %v409 = vmul.f32 %v408, %v408
          %v410 = vadd.f32 %v394, %v409
          %v411 = vadd.f32 %v390, %v409
          %v412 = vlaneseq
          %v413 = vand.u32 %v412, 127
          %v414 = vmov %v413
          %v415 = vlaneseq
          %v416 = vshrl.u32 %v415, 7
          %v417 = vmov %v416
          %s418 = smov [#allocation22]
          %v419 = vlaneseq
          %v420 = vand.u32 %v419, 127
          %vm421 = vcmp.ge.s32.totalorder %v420, 0
          %vm422 = vcmp.lt.s32.totalorder %v420, 2
          %vm423 = vmand %vm421, %vm422
          %v424 = vld [vmem:[%s418] sm:$0x3]
          %v425 = vsel %vm423, %v424, 0.0
          %v426 = vmul.f32 %v425, %v425
          %v427 = vadd.f32 %v410, %v426
          %v428 = vadd.f32 %v411, %v426
          %v429 = vlaneseq
          %v430 = vand.u32 %v429, 127
          %v431 = vmov %v430
          %v432 = vlaneseq
          %v433 = vshrl.u32 %v432, 7
          %v434 = vmov %v433
          %s435 = smov [#allocation23]
          %v436 = vlaneseq
          %v437 = vand.u32 %v436, 127
          %vm438 = vcmp.ge.s32.totalorder %v437, 0
          %vm439 = vcmp.lt.s32.totalorder %v437, 2
          %vm440 = vmand %vm438, %vm439
          %v441 = vld [vmem:[%s435] sm:$0x3]
          %v442 = vsel %vm440, %v441, 0.0
          %v443 = vmul.f32 %v442, %v442
          %vm446 = vcmp.eq.s32.totalorder %v434, %v431
          %v447 = vsel %vm446, 0.0, %v443
          %v448 = vadd.f32 %v427, %v447
          %v449 = vadd.f32 %v428, %v443
          %450 = vadd.xlane.f32.xlu0 %v449
          %v451 = vpop.xlane.xlu0 %450
          %v452 = vrot.slane %v451, 4
          %v453 = vadd.f32 %v451, %v452
          %v454 = vrot.slane %v453, 2
          %v455 = vadd.f32 %v453, %v454
          %v456 = vrot.slane %v455, 1
          %v457 = vadd.f32 %v455, %v456
          %458 = vadd.xlane.f32.xlu0 %v448
          %v459 = vpop.xlane.xlu0 %458
          %v460 = vrot.slane %v459, 4
          %v461 = vadd.f32 %v459, %v460
          %v462 = vrot.slane %v461, 2
          %v463 = vadd.f32 %v461, %v462
          %v464 = vrot.slane %v463, 1
          %v465 = vadd.f32 %v463, %v464
          %s466 = vtos %v465
          %s467 = vtos %v457
          %s468 = smul.f32 1e-10, %s467
          %p469 = scmp.le.f32.partialorder %s466, %s468
          %p470 = scmp.ge.s32.totalorder %s375, 15
          %p471 = por %p469, %p470
        $region143: #{custom-call.5} parent=139 // loop_header_branch
          %919 = sbr.rel (%p471) target = $region147
        $region144: #{custom-call.5} parent=139 // loop_body
          loop: start=0, step=1, limit=3
          $region148: #{custom-call.5} parent=144 // loop_pre_header
            _
          $region149: #{custom-call.5} parent=144 // loop_header
            %s473 = sphi 0, %s477
            %p474 = scmp.ge.s32.totalorder %s473, 3
          $region150: #{custom-call.5} parent=144 // loop_header_branch
            %476 = sbr.rel (%p474) target = $region154
          $region151: #{custom-call.5} parent=144 // loop_body
            #allocation24 [shape = 'f32[1024]{0}', space=vmem, size = 0x1000, scoped, tag = 'a_tl_diag vmem']
            #allocation25 [shape = 'f32[1024]{0}', space=vmem, size = 0x1000, scoped, tag = 'a_tr_diag vmem']
            #allocation26 [shape = 'f32[1024]{0}', space=vmem, size = 0x1000, scoped, tag = 'a_br_diag vmem']
            #allocation27 [shape = 'f32[1024]{0}', space=vmem, size = 0x1000, scoped, tag = 'rt1 vmem']
            #allocation28 [shape = 'f32[1024]{0}', space=vmem, size = 0x1000, scoped, tag = 'rt2 vmem']
            #allocation29 [shape = 'f32[1024]{0}', space=vmem, size = 0x1000, scoped, tag = 'c vmem']
            #allocation30 [shape = 'f32[1024]{0}', space=vmem, size = 0x1000, scoped, tag = 's vmem']
            #allocation31 [shape = 'f32[4096]{0}', space=vmem, size = 0x4000, scoped, tag = 'c broadcast']
            #allocation32 [shape = 'f32[4096]{0}', space=vmem, size = 0x4000, scoped, tag = 's broadcast']
            %s478 = smov [#allocation20]
            %s479 = smov [#allocation24]
            %v480 = vlaneseq
            %v481 = vand.u32 %v480, 127
            %v482 = vmov %v481
            %v483 = vlaneseq
            %v484 = vshrl.u32 %v483, 7
            %v485 = vmov %v484
            %v486 = vld [vmem:[%s478] sm:$0x3]
            %vm489 = vcmp.eq.s32.totalorder %v485, %v482
            %v490 = vsel %vm489, %v486, 0.0
            %v491 = vrot.slane %v490, 4
            %v492 = vadd.f32 %v490, %v491
            %v493 = vrot.slane %v492, 2
            %v494 = vadd.f32 %v492, %v493
            %v495 = vrot.slane %v494, 1
            %v496 = vadd.f32 %v494, %v495
            %497 = vst [vmem:[%s479] sm:$0x1] %v496
            %s498 = smov [#allocation21]
            %s499 = smov [#allocation25]
            %v500 = vlaneseq
            %v501 = vand.u32 %v500, 127
            %v502 = vmov %v501
            %v503 = vlaneseq
            %v504 = vshrl.u32 %v503, 7
            %v505 = vmov %v504
            %v506 = vld [vmem:[%s498] sm:$0x3]
            %vm509 = vcmp.eq.s32.totalorder %v505, %v502
            %v510 = vsel %vm509, %v506, 0.0
            %v511 = vrot.slane %v510, 4
            %v512 = vadd.f32 %v510, %v511
            %v513 = vrot.slane %v512, 2
            %v514 = vadd.f32 %v512, %v513
            %v515 = vrot.slane %v514, 1
            %v516 = vadd.f32 %v514, %v515
            %517 = vst [vmem:[%s499] sm:$0x1] %v516
            %s518 = smov [#allocation23]
            %s519 = smov [#allocation26]
            %v520 = vlaneseq
            %v521 = vand.u32 %v520, 127
            %v522 = vmov %v521
            %v523 = vlaneseq
            %v524 = vshrl.u32 %v523, 7
            %v525 = vmov %v524
            %v526 = vld [vmem:[%s518] sm:$0x3]
            %vm529 = vcmp.eq.s32.totalorder %v525, %v522
            %v530 = vsel %vm529, %v526, 0.0
            %v531 = vrot.slane %v530, 4
            %v532 = vadd.f32 %v530, %v531
            %v533 = vrot.slane %v532, 2
            %v534 = vadd.f32 %v532, %v533
            %v535 = vrot.slane %v534, 1
            %v536 = vadd.f32 %v534, %v535
            %537 = vst [vmem:[%s519] sm:$0x1] %v536
            %s538 = smov [#allocation29]
            %s539 = smov [#allocation30]
            %s540 = smov [#allocation24]
            %v541 = vld [vmem:[%s540] sm:$0xff]
            %s542 = smov [#allocation25]
            %v543 = vld [vmem:[%s542] sm:$0xff]
            %s544 = smov [#allocation26]
            %v545 = vld [vmem:[%s544] sm:$0xff]
            %v546 = vsub.f32 %v545, %v541
            %v547 = vmul.f32 2.0, %v543
            %v548 = vrcp.pop %v547
            %v549 = vmul.f32 %v546, %v548
            %vm550 = vcmp.ge.f32.partialorder %v549, 0.0
            %v551 = vmul.f32 %v549, %v549
            %v552 = vadd.f32 1.0, %v551
            %v553 = vrsqrt.pop %v552
            %v554 = vmul.f32 %v552, %v553
            %vm555 = vcmp.eq.f32.partialorder %v552, inf
            %v556 = vsel %vm555, %v552, %v554
            %vm557 = vcmp.eq.f32.partialorder %v552, 0.0
            %v558 = vand.u32 %v552, 2147483648
            %v559 = vsel %vm557, %v558, %v556
            %v560 = vxor.u32 %v559, 2147483648
            %v561 = vsel %vm550, %v559, %v560
            %v562 = vadd.f32 %v549, %v561
            %v563 = vrcp.pop %v562
            %v564 = vand.u32 2147483647, %v541
            %v565 = vand.u32 2147483647, %v543
            %v566 = vand.u32 2147483647, %v545
            %v567 = vmin.f32 %v564, %v566
            %v568 = vmul.f32 1.1920929e-08, %v567
            %vm569 = vcmp.le.f32.partialorder %v565, %v568
            %v570 = vsel %vm569, 0.0, %v563
            %v571 = vmul.f32 %v570, %v570
            %v572 = vadd.f32 1.0, %v571
            %v573 = vrsqrt.pop %v572
            %v574 = vmul.f32 %v570, %v573
            %v575 = vmul.f32 %v570, %v543
            %v576 = vsub.f32 %v541, %v575
            %v577 = vmul.f32 %v570, %v543
            %v578 = vadd.f32 %v545, %v577
            %s579 = smov [#allocation27]
            %580 = vst [vmem:[%s579] sm:$0xff] %v576
            %s581 = smov [#allocation28]
            %582 = vst [vmem:[%s581] sm:$0xff] %v578
            %s583 = smov %s538
            %584 = vst [vmem:[%s583] sm:$0xff] %v573
            %s585 = smov %s539
            %586 = vst [vmem:[%s585] sm:$0xff] %v574
            %s587 = smov [#allocation29]
            %v588 = vld [vmem:[%s587] ss:$0 sm:$0xff]
            %v589 = vlaneseq
            %v590 = vand.u32 %v589, 127
            %v591 = vmov %v590
            %v592 = vlaneseq
            %v593 = vshrl.u32 %v592, 7
            %v594 = vmov %v593
            %vm596 = vcmp.eq.s32.totalorder %v594, %v591
            %v597 = vsel %vm596, %v588, 0.0
            %598 = vadd.xlane.f32.xlu0 %v597
            %v599 = vpop.xlane.xlu0 %598
            %s600 = smov [#allocation31]
            %601 = vst [vmem:[%s600] sm:$0xff] %v599
            %s602 = smov [#allocation30]
            %v603 = vld [vmem:[%s602] ss:$0 sm:$0xff]
            %v604 = vlaneseq
            %v605 = vand.u32 %v604, 127
            %v606 = vmov %v605
            %v607 = vlaneseq
            %v608 = vshrl.u32 %v607, 7
            %v609 = vmov %v608
            %vm611 = vcmp.eq.s32.totalorder %v609, %v606
            %v612 = vsel %vm611, %v603, 0.0
            %613 = vadd.xlane.f32.xlu0 %v612
            %v614 = vpop.xlane.xlu0 %613
            %s615 = smov [#allocation32]
            %616 = vst [vmem:[%s615] sm:$0xff] %v614
            %s617 = smov [#allocation31]
            %v618 = vld [vmem:[%s617] sm:$0xff]
            %s619 = smov [#allocation32]
            %v620 = vld [vmem:[%s619] sm:$0xff]
            %s621 = smov [#allocation20]
            %s622 = smov [#allocation21]
            %s623 = smov [#allocation22]
            %s624 = smov [#allocation23]
            %v625 = vld [vmem:[%s621] sm:$0x3]
            %v626 = vld [vmem:[%s622] sm:$0x3]
            %v627 = vld [vmem:[%s623] sm:$0x3]
            %v628 = vld [vmem:[%s624] sm:$0x3]
            %v629 = vmul.f32 %v618, %v625
            %v630 = vmul.f32 %v620, %v627
            %v631 = vsub.f32 %v629, %v630
            %v632 = vmul.f32 %v618, %v626
            %v633 = vmul.f32 %v620, %v628
            %v634 = vsub.f32 %v632, %v633
            %v635 = vmul.f32 %v620, %v625
            %v636 = vmul.f32 %v618, %v627
            %v637 = vadd.f32 %v635, %v636
            %v638 = vmul.f32 %v620, %v626
            %v639 = vmul.f32 %v618, %v628
            %v640 = vadd.f32 %v638, %v639
            %641 = vst [vmem:[%s621] sm:$0x3] %v631
            %642 = vst [vmem:[%s622] sm:$0x3] %v634
            %643 = vst [vmem:[%s623] sm:$0x3] %v637
            %644 = vst [vmem:[%s624] sm:$0x3] %v640
            %s645 = smov [#allocation29]
            %v646 = vld [vmem:[%s645] ss:$0 sm:$0xff]
            %s647 = smov [#allocation30]
            %v648 = vld [vmem:[%s647] ss:$0 sm:$0xff]
            %s649 = smov [#allocation20]
            %s650 = smov [#allocation21]
            %s651 = smov [#allocation22]
            %s652 = smov [#allocation23]
            %v653 = vld [vmem:[%s649] sm:$0x3]
            %v654 = vld [vmem:[%s650] sm:$0x3]
            %v655 = vld [vmem:[%s651] sm:$0x3]
            %v656 = vld [vmem:[%s652] sm:$0x3]
            %v657 = vmul.f32 %v646, %v653
            %v658 = vmul.f32 %v648, %v654
            %v659 = vsub.f32 %v657, %v658
            %v660 = vmul.f32 %v648, %v653
            %v661 = vmul.f32 %v646, %v654
            %v662 = vadd.f32 %v660, %v661
            %v663 = vmul.f32 %v646, %v655
            %v664 = vmul.f32 %v648, %v656
            %v665 = vsub.f32 %v663, %v664
            %v666 = vmul.f32 %v648, %v655
            %v667 = vmul.f32 %v646, %v656
            %v668 = vadd.f32 %v666, %v667
            %669 = vst [vmem:[%s649] sm:$0x3] %v659
            %670 = vst [vmem:[%s650] sm:$0x3] %v662
            %671 = vst [vmem:[%s651] sm:$0x3] %v665
            %672 = vst [vmem:[%s652] sm:$0x3] %v668
            %s673 = smov [#allocation20]
            %s674 = smov [#allocation27]
            %v675 = vlaneseq
            %v676 = vand.u32 %v675, 127
            %v677 = vmov %v676
            %v678 = vlaneseq
            %v679 = vshrl.u32 %v678, 7
            %v680 = vmov %v679
            %v681 = vld [vmem:[%s674] ss:$0 sm:$0xff]
            %v682 = vld [vmem:[%s673] sm:$0x3]
            %vm685 = vcmp.eq.s32.totalorder %v680, %v677
            %v686 = vsel %vm685, %v681, %v682
            %687 = vst [vmem:[%s673] sm:$0x3] %v686
            %s688 = smov [#allocation21]
            %v689 = vlaneseq
            %v690 = vand.u32 %v689, 127
            %v691 = vmov %v690
            %v692 = vlaneseq
            %v693 = vshrl.u32 %v692, 7
            %v694 = vmov %v693
            %v695 = vld [vmem:[%s688] sm:$0x3]
            %vm698 = vcmp.eq.s32.totalorder %v694, %v691
            %v699 = vsel %vm698, 0.0, %v695
            %700 = vst [vmem:[%s688] sm:$0x3] %v699
            %s701 = smov [#allocation22]
            %v702 = vlaneseq
            %v703 = vand.u32 %v702, 127
            %v704 = vmov %v703
            %v705 = vlaneseq
            %v706 = vshrl.u32 %v705, 7
            %v707 = vmov %v706
            %v708 = vld [vmem:[%s701] sm:$0x3]
            %vm711 = vcmp.eq.s32.totalorder %v707, %v704
            %v712 = vsel %vm711, 0.0, %v708
            %713 = vst [vmem:[%s701] sm:$0x3] %v712
            %s714 = smov [#allocation23]
            %s715 = smov [#allocation28]
            %v716 = vlaneseq
            %v717 = vand.u32 %v716, 127
            %v718 = vmov %v717
            %v719 = vlaneseq
            %v720 = vshrl.u32 %v719, 7
            %v721 = vmov %v720
            %v722 = vld [vmem:[%s715] ss:$0 sm:$0xff]
            %v723 = vld [vmem:[%s714] sm:$0x3]
            %vm726 = vcmp.eq.s32.totalorder %v721, %v718
            %v727 = vsel %vm726, %v722, %v723
            %728 = vst [vmem:[%s714] sm:$0x3] %v727
            %s729 = smov [#allocation20]
            %s730 = smov [#allocation21]
            %v731 = vld [vmem:[%s730] sm:$0x3]
            %732 = vrot.lane.b32.xlu0 %v731, 1
            %v733 = vpop.permute.xlu0 %732
            %v734 = vld [vmem:[%s729] sm:$0x3]
            %v735 = vld [vmem:[%s729] sm:$0x3]
            %736 = vrot.lane.b32.xlu0 %v735, 1
            %v737 = vpop.permute.xlu0 %736
            %v738 = vlaneseq
            %v739 = vand.u32 %v738, 127
            %vm740 = vcmp.eq.s32.totalorder %v739, 0
            %v741 = vsel %vm740, %v735, %v737
            %v742 = vlaneseq
            %v743 = vand.u32 %v742, 127
            %vm744 = vcmp.eq.s32.totalorder %v743, 1
            %v745 = vsel %vm744, %v733, %v741
            %v746 = vlaneseq
            %v747 = vand.u32 %v746, 127
            %vm748 = vcmp.ge.s32.totalorder %v747, 0
            %vm749 = vcmp.lt.s32.totalorder %v747, 2
            %vm750 = vmand %vm748, %vm749
            %v751 = vsel %vm750, %v745, 0.0
            %v752 = vld [vmem:[%s730] sm:$0x3]
            %753 = vrot.lane.b32.xlu0 %v752, 127
            %v754 = vpop.permute.xlu0 %753
            %v755 = vlaneseq
            %v756 = vand.u32 %v755, 127
            %vm757 = vcmp.eq.s32.totalorder %v756, 1
            %v758 = vsel %vm757, %v734, %v754
            %759 = vst [vmem:[%s729] sm:$0x3] %v751
            %760 = vst [vmem:[%s730] sm:$0x3] %v758
            %s761 = smov [#allocation22]
            %s762 = smov [#allocation23]
            %v763 = vld [vmem:[%s762] sm:$0x3]
            %764 = vrot.lane.b32.xlu0 %v763, 1
            %v765 = vpop.permute.xlu0 %764
            %v766 = vld [vmem:[%s761] sm:$0x3]
            %v767 = vld [vmem:[%s761] sm:$0x3]
            %768 = vrot.lane.b32.xlu0 %v767, 1
            %v769 = vpop.permute.xlu0 %768
            %v770 = vlaneseq
            %v771 = vand.u32 %v770, 127
            %vm772 = vcmp.eq.s32.totalorder %v771, 0
            %v773 = vsel %vm772, %v767, %v769
            %v774 = vlaneseq
            %v775 = vand.u32 %v774, 127
            %vm776 = vcmp.eq.s32.totalorder %v775, 1
            %v777 = vsel %vm776, %v765, %v773
            %v778 = vlaneseq
            %v779 = vand.u32 %v778, 127
            %vm780 = vcmp.ge.s32.totalorder %v779, 0
            %vm781 = vcmp.lt.s32.totalorder %v779, 2
            %vm782 = vmand %vm780, %vm781
            %v783 = vsel %vm782, %v777, 0.0
            %v784 = vld [vmem:[%s762] sm:$0x3]
            %785 = vrot.lane.b32.xlu0 %v784, 127
            %v786 = vpop.permute.xlu0 %785
            %v787 = vlaneseq
            %v788 = vand.u32 %v787, 127
            %vm789 = vcmp.eq.s32.totalorder %v788, 1
            %v790 = vsel %vm789, %v766, %v786
            %791 = vst [vmem:[%s761] sm:$0x3] %v783
            %792 = vst [vmem:[%s762] sm:$0x3] %v790
            %s793 = smov [#allocation20]
            %s794 = smov [#allocation22]
            %v795 = vld [vmem:[%s793] ss:$0 sm:$0xff]
            %s797 = scalar_lea.vmem %s793, 4294967295
            %v798 = vld [vmem:[%s797] sm:$0x2]
            %v799 = vlaneseq
            %v800 = vshrl.u32 %v799, 7
            %vm801 = vcmp.eq.s32.totalorder %v800, 0
            %v802 = vsel %vm801, %v795, %v798
            %s803 = scalar_lea.vmem %s793, 1
            %v804 = vld [vmem:[%s803] ss:$0 sm:$0xff]
            %805 = vst [vmem:[%s793] sm:$0x3] %v802
            %v806 = vld [vmem:[%s794] ss:$0 sm:$0xff]
            %s807 = scalar_lea.vmem %s793, 1
            %808 = vst [vmem:[%s807] sm:$0x1] %v806
            %s809 = scalar_lea.vmem %s794, 1
            %v810 = vld [vmem:[%s809] sm:$0x1]
            %v811 = vlaneseq
            %v812 = vshrl.u32 %v811, 7
            %vm813 = vcmp.eq.s32.totalorder %v812, 1
            %v814 = vsel %vm813, %v804, %v810
            %v815 = vld [vmem:[%s794] ss:$0 sm:$0xff]
            %816 = vst [vmem:[%s794] sm:$0x3] %v814
            %s817 = smov [#allocation21]
            %s818 = smov [#allocation23]
            %v819 = vld [vmem:[%s817] ss:$0 sm:$0xff]
            %s821 = scalar_lea.vmem %s817, 4294967295
            %v822 = vld [vmem:[%s821] sm:$0x2]
            %v823 = vlaneseq
            %v824 = vshrl.u32 %v823, 7
            %vm825 = vcmp.eq.s32.totalorder %v824, 0
            %v826 = vsel %vm825, %v819, %v822
            %s827 = scalar_lea.vmem %s817, 1
            %v828 = vld [vmem:[%s827] ss:$0 sm:$0xff]
            %829 = vst [vmem:[%s817] sm:$0x3] %v826
            %v830 = vld [vmem:[%s818] ss:$0 sm:$0xff]
            %s831 = scalar_lea.vmem %s817, 1
            %832 = vst [vmem:[%s831] sm:$0x1] %v830
            %s833 = scalar_lea.vmem %s818, 1
            %v834 = vld [vmem:[%s833] sm:$0x1]
            %v835 = vlaneseq
            %v836 = vshrl.u32 %v835, 7
            %vm837 = vcmp.eq.s32.totalorder %v836, 1
            %v838 = vsel %vm837, %v828, %v834
            %v839 = vld [vmem:[%s818] ss:$0 sm:$0xff]
            %840 = vst [vmem:[%s818] sm:$0x3] %v838
            %s841 = smov [#allocation31]
            %v842 = vld [vmem:[%s841] sm:$0xff]
            %s843 = smov [#allocation32]
            %v844 = vld [vmem:[%s843] sm:$0xff]
            %s845 = smov [#allocation12]
            %s846 = smov [#allocation14]
            %s847 = smov [#allocation16]
            %s848 = smov [#allocation18]
            %v849 = vld [vmem:[%s845] sm:$0x3]
            %v850 = vld [vmem:[%s846] sm:$0x3]
            %v851 = vld [vmem:[%s847] sm:$0x3]
            %v852 = vld [vmem:[%s848] sm:$0x3]
            %v853 = vmul.f32 %v842, %v849
            %v854 = vmul.f32 %v844, %v851
            %v855 = vsub.f32 %v853, %v854
            %v856 = vmul.f32 %v842, %v850
            %v857 = vmul.f32 %v844, %v852
            %v858 = vsub.f32 %v856, %v857
            %v859 = vmul.f32 %v844, %v849
            %v860 = vmul.f32 %v842, %v851
            %v861 = vadd.f32 %v859, %v860
            %v862 = vmul.f32 %v844, %v850
            %v863 = vmul.f32 %v842, %v852
            %v864 = vadd.f32 %v862, %v863
            %865 = vst [vmem:[%s845] sm:$0x3] %v855
            %866 = vst [vmem:[%s846] sm:$0x3] %v858
            %867 = vst [vmem:[%s847] sm:$0x3] %v861
            %868 = vst [vmem:[%s848] sm:$0x3] %v864
            %s869 = smov [#allocation12]
            %s870 = smov [#allocation16]
            %v871 = vld [vmem:[%s869] ss:$0 sm:$0xff]
            %s873 = scalar_lea.vmem %s869, 4294967295
            %v874 = vld [vmem:[%s873] sm:$0x2]
            %v875 = vlaneseq
            %v876 = vshrl.u32 %v875, 7
            %vm877 = vcmp.eq.s32.totalorder %v876, 0
            %v878 = vsel %vm877, %v871, %v874
            %s879 = scalar_lea.vmem %s869, 1
            %v880 = vld [vmem:[%s879] ss:$0 sm:$0xff]
            %881 = vst [vmem:[%s869] sm:$0x3] %v878
            %v882 = vld [vmem:[%s870] ss:$0 sm:$0xff]
            %s883 = scalar_lea.vmem %s869, 1
            %884 = vst [vmem:[%s883] sm:$0x1] %v882
            %s885 = scalar_lea.vmem %s870, 1
            %v886 = vld [vmem:[%s885] sm:$0x1]
            %v887 = vlaneseq
            %v888 = vshrl.u32 %v887, 7
            %vm889 = vcmp.eq.s32.totalorder %v888, 1
            %v890 = vsel %vm889, %v880, %v886
            %v891 = vld [vmem:[%s870] ss:$0 sm:$0xff]
            %892 = vst [vmem:[%s870] sm:$0x3] %v890
            %s893 = smov [#allocation14]
            %s894 = smov [#allocation18]
            %v895 = vld [vmem:[%s893] ss:$0 sm:$0xff]
            %s897 = scalar_lea.vmem %s893, 4294967295
            %v898 = vld [vmem:[%s897] sm:$0x2]
            %v899 = vlaneseq
            %v900 = vshrl.u32 %v899, 7
            %vm901 = vcmp.eq.s32.totalorder %v900, 0
            %v902 = vsel %vm901, %v895, %v898
            %s903 = scalar_lea.vmem %s893, 1
            %v904 = vld [vmem:[%s903] ss:$0 sm:$0xff]
            %905 = vst [vmem:[%s893] sm:$0x3] %v902
            %v906 = vld [vmem:[%s894] ss:$0 sm:$0xff]
            %s907 = scalar_lea.vmem %s893, 1
            %908 = vst [vmem:[%s907] sm:$0x1] %v906
            %s909 = scalar_lea.vmem %s894, 1
            %v910 = vld [vmem:[%s909] sm:$0x1]
            %v911 = vlaneseq
            %v912 = vshrl.u32 %v911, 7
            %vm913 = vcmp.eq.s32.totalorder %v912, 1
            %v914 = vsel %vm913, %v904, %v910
            %v915 = vld [vmem:[%s894] ss:$0 sm:$0xff]
            %916 = vst [vmem:[%s894] sm:$0x3] %v914
          $region152: #{custom-call.5} parent=144 // loop_footer
            %s477 = sadd.s32 1, %s473
          $region153: #{custom-call.5} parent=144 // loop_footer_branch
            %472 = sbr.rel target = $region149
          $region154: #{custom-call.5} parent=144 // loop_exit
            _
          %s917 = sadd.s32 %s375, 1
        $region145: #{custom-call.5} parent=139 // loop_footer
          _
        $region146: #{custom-call.5} parent=139 // loop_footer_branch
          %374 = sbr.rel target = $region142
        $region147: #{custom-call.5} parent=139 // loop_exit
          _
        %s920 = sand.u32 %s17, 7
        %s921 = scalar_lea.vmem [#allocation8], %s920
        %s922 = sand.u32 %s17, 7
        %s923 = scalar_lea.vmem [#allocation10], %s922
        %s924 = smov [#allocation20]
        %s925 = smov %s921
        %v926 = vlaneseq
        %v927 = vand.u32 %v926, 127
        %v928 = vmov %v927
        %v929 = vlaneseq
        %v930 = vshrl.u32 %v929, 7
        %v931 = vmov %v930
        %v932 = vld [vmem:[%s924] sm:$0x3]
        %vm935 = vcmp.eq.s32.totalorder %v931, %v928
        %v936 = vsel %vm935, %v932, 0.0
        %v937 = vrot.slane %v936, 4
        %v938 = vadd.f32 %v936, %v937
        %v939 = vrot.slane %v938, 2
        %v940 = vadd.f32 %v938, %v939
        %v941 = vrot.slane %v940, 1
        %v942 = vadd.f32 %v940, %v941
        %943 = vst [vmem:[%s925] sm:$0x1] %v942
        %s944 = smov [#allocation23]
        %s945 = smov %s923
        %v946 = vlaneseq
        %v947 = vand.u32 %v946, 127
        %v948 = vmov %v947
        %v949 = vlaneseq
        %v950 = vshrl.u32 %v949, 7
        %v951 = vmov %v950
        %v952 = vld [vmem:[%s944] sm:$0x3]
        %vm955 = vcmp.eq.s32.totalorder %v951, %v948
        %v956 = vsel %vm955, %v952, 0.0
        %v957 = vrot.slane %v956, 4
        %v958 = vadd.f32 %v956, %v957
        %v959 = vrot.slane %v958, 2
        %v960 = vadd.f32 %v958, %v959
        %v961 = vrot.slane %v960, 1
        %v962 = vadd.f32 %v960, %v961
        %963 = vst [vmem:[%s945] sm:$0x1] %v962
        %s965 = sshll.u32 1, 4
        %s966 = ssub.s32 %s965, 1
        %v968 = vld [vmem:[#allocation8] sm:%s966]
        %s969 = sshll.u32 1, 4
        %s970 = ssub.s32 %s969, 1
        %971 = vst [vmem:[%s287] sm:%s970] %v968
        %s973 = sshll.u32 1, 4
        %s974 = ssub.s32 %s973, 1
        %v976 = vld [vmem:[#allocation10] sm:%s974]
        %s977 = sshll.u32 1, 4
        %s978 = ssub.s32 %s977, 1
        %979 = vst [vmem:[%s293] sm:%s978] %v976
        %s981 = sshll.u32 1, 2
        %s982 = ssub.s32 %s981, 1
        %v984 = vld [vmem:[#allocation12] sm:%s982]
        %s985 = sshll.u32 1, 2
        %s986 = ssub.s32 %s985, 1
        %987 = vst [vmem:[%s297] sm:%s986] %v984
        %s989 = sshll.u32 1, 2
        %s990 = ssub.s32 %s989, 1
        %v992 = vld [vmem:[#allocation14] sm:%s990]
        %s993 = sshll.u32 1, 2
        %s994 = ssub.s32 %s993, 1
        %995 = vst [vmem:[%s301] sm:%s994] %v992
        %s997 = sshll.u32 1, 2
        %s998 = ssub.s32 %s997, 1
        %v1000 = vld [vmem:[#allocation16] sm:%s998]
        %s1001 = sshll.u32 1, 2
        %s1002 = ssub.s32 %s1001, 1
        %1003 = vst [vmem:[%s305] sm:%s1002] %v1000
        %s1005 = sshll.u32 1, 2
        %s1006 = ssub.s32 %s1005, 1
        %v1008 = vld [vmem:[#allocation18] sm:%s1006]
        %s1009 = sshll.u32 1, 2
        %s1010 = ssub.s32 %s1009, 1
        %1011 = vst [vmem:[%s309] sm:%s1010] %v1008
        %s1012 = sand.u32 %s27, 1
        %s1013 = sand.u32 %s27, 1
        %s1014 = smul.addr %s1013, 4
        %s1015 = scalar_lea.vmem [#allocation9], %s1014
        %s1016 = sand.u32 %s55, 1
        %s1017 = sand.u32 %s55, 1
        %s1018 = smul.addr %s1017, 4
        %s1019 = scalar_lea.vmem [#allocation11], %s1018
        %s1020 = sand.u32 %s17, 1
        %s1021 = sand.u32 %s17, 1
        %s1022 = smul.addr %s1021, 2
        %s1023 = scalar_lea.vmem [#allocation13], %s1022
        %s1024 = sand.u32 %s17, 1
        %s1025 = sand.u32 %s17, 1
        %s1026 = smul.addr %s1025, 2
        %s1027 = scalar_lea.vmem [#allocation15], %s1026
        %s1028 = sand.u32 %s17, 1
        %s1029 = sand.u32 %s17, 1
        %s1030 = smul.addr %s1029, 2
        %s1031 = scalar_lea.vmem [#allocation17], %s1030
        %s1032 = sand.u32 %s17, 1
        %s1033 = sand.u32 %s17, 1
        %s1034 = smul.addr %s1033, 2
        %s1035 = scalar_lea.vmem [#allocation19], %s1034
        // Predicated region
        $region155: #{custom-call.5} parent=139 // pred_check
          %p1036 = pneg %p37
        $region156: #{custom-call.5} parent=139 // pred_check_branch
          %1038 = sbr.rel (%p1036) target = $region158
        $region157: #{custom-call.5} parent=139 // pred_region
          %s1039 = sshrl.u32 %s17, 3
          %s1040 = smul.addr %s1039, 4
          %s1041 = scalar_lea.vmem %s4, %s1040
          // Predicated region
          $region159: #{custom-call.5} parent=157 // pred_check
            _
          $region160: #{custom-call.5} parent=157 // pred_check_branch
            %1043 = sbr.rel (0) target = $region162
          $region161: #{custom-call.5} parent=157 // pred_region
            // Predicated region
            $region163: #{custom-call.5} parent=161 // pred_check
              _
            $region164: #{custom-call.5} parent=161 // pred_check_branch
              %1045 = sbr.rel target = $region166
            $region165: #{custom-call.5} parent=161 // pred_region
              // Predicated region
              $region178: #{custom-call.5} parent=165 // pred_check
                _
              $region179: #{custom-call.5} parent=165 // pred_check_branch
                %1061 = sbr.rel (0) target = $region181
              $region180: #{custom-call.5} parent=165 // pred_region
                %s1063 = ssub.s32 16, 1
                loop: start=0, step=1, limit=1
                $region182: #{custom-call.5} parent=180 // loop_pre_header
                  _
                $region183: #{custom-call.5} parent=180 // loop_header
                  %s1065 = sphi 0, %s1069
                  %p1066 = scmp.ge.s32.totalorder %s1065, 1
                  %s1070 = sphi %s1015, %s1015
                  %s1071 = sphi %s1041, %s1041
                $region184: #{custom-call.5} parent=180 // loop_header_branch
                  %1068 = sbr.rel (%p1066) target = $region188
                $region185: #{custom-call.5} parent=180 // loop_body
                  %v1072 = vld [vmem:[%s1070] sm:%s1063]
                  %1073 = vst [vmem:[%s1071] sm:%s1063] %v1072
                $region186: #{custom-call.5} parent=180 // loop_footer
                  %s1069 = sadd.s32 1, %s1065
                $region187: #{custom-call.5} parent=180 // loop_footer_branch
                  %1064 = sbr.rel target = $region183
                $region188: #{custom-call.5} parent=180 // loop_exit
                  _
              $region181: #{custom-call.5} parent=165 // pred_fallthru
                _
            $region166: #{custom-call.5} parent=161 // pred_fallthru
              _
            // Predicated region
            $region167: #{custom-call.5} parent=161 // pred_check
              _
            $region168: #{custom-call.5} parent=161 // pred_check_branch
              %1047 = sbr.rel (0) target = $region170
            $region169: #{custom-call.5} parent=161 // pred_region
              %s1049 = ssub.s32 16, 1
              loop: start=0, step=1, limit=1
              $region171: #{custom-call.5} parent=169 // loop_pre_header
                _
              $region172: #{custom-call.5} parent=169 // loop_header
                %s1051 = sphi 0, %s1055
                %p1052 = scmp.ge.s32.totalorder %s1051, 1
                %s1056 = sphi %s1015, %s1015
                %s1057 = sphi %s1041, %s1041
              $region173: #{custom-call.5} parent=169 // loop_header_branch
                %1054 = sbr.rel (%p1052) target = $region177
              $region174: #{custom-call.5} parent=169 // loop_body
                %v1058 = vld [vmem:[%s1056] sm:%s1049]
                %1059 = vst [vmem:[%s1057] sm:%s1049] %v1058
              $region175: #{custom-call.5} parent=169 // loop_footer
                %s1055 = sadd.s32 1, %s1051
              $region176: #{custom-call.5} parent=169 // loop_footer_branch
                %1050 = sbr.rel target = $region172
              $region177: #{custom-call.5} parent=169 // loop_exit
                _
            $region170: #{custom-call.5} parent=161 // pred_fallthru
              _
          $region162: #{custom-call.5} parent=157 // pred_fallthru
            _
          %1074 = vnop
        $region158: #{custom-call.5} parent=139 // pred_fallthru
          _
        // Predicated region
        $region189: #{custom-call.5} parent=139 // pred_check
          %p1075 = pneg %p65
        $region190: #{custom-call.5} parent=139 // pred_check_branch
          %1077 = sbr.rel (%p1075) target = $region192
        $region191: #{custom-call.5} parent=139 // pred_region
          %s1078 = sshrl.u32 %s17, 3
          %s1079 = smul.addr %s1078, 4
          %s1080 = scalar_lea.vmem %s5, %s1079
          // Predicated region
          $region193: #{custom-call.5} parent=191 // pred_check
            _
          $region194: #{custom-call.5} parent=191 // pred_check_branch
            %1082 = sbr.rel (0) target = $region196
          $region195: #{custom-call.5} parent=191 // pred_region
            // Predicated region
            $region197: #{custom-call.5} parent=195 // pred_check
              _
            $region198: #{custom-call.5} parent=195 // pred_check_branch
              %1084 = sbr.rel target = $region200
            $region199: #{custom-call.5} parent=195 // pred_region
              // Predicated region
              $region212: #{custom-call.5} parent=199 // pred_check
                _
              $region213: #{custom-call.5} parent=199 // pred_check_branch
                %1100 = sbr.rel (0) target = $region215
              $region214: #{custom-call.5} parent=199 // pred_region
                %s1102 = ssub.s32 16, 1
                loop: start=0, step=1, limit=1
                $region216: #{custom-call.5} parent=214 // loop_pre_header
                  _
                $region217: #{custom-call.5} parent=214 // loop_header
                  %s1104 = sphi 0, %s1108
                  %p1105 = scmp.ge.s32.totalorder %s1104, 1
                  %s1109 = sphi %s1019, %s1019
                  %s1110 = sphi %s1080, %s1080
                $region218: #{custom-call.5} parent=214 // loop_header_branch
                  %1107 = sbr.rel (%p1105) target = $region222
                $region219: #{custom-call.5} parent=214 // loop_body
                  %v1111 = vld [vmem:[%s1109] sm:%s1102]
                  %1112 = vst [vmem:[%s1110] sm:%s1102] %v1111
                $region220: #{custom-call.5} parent=214 // loop_footer
                  %s1108 = sadd.s32 1, %s1104
                $region221: #{custom-call.5} parent=214 // loop_footer_branch
                  %1103 = sbr.rel target = $region217
                $region222: #{custom-call.5} parent=214 // loop_exit
                  _
              $region215: #{custom-call.5} parent=199 // pred_fallthru
                _
            $region200: #{custom-call.5} parent=195 // pred_fallthru
              _
            // Predicated region
            $region201: #{custom-call.5} parent=195 // pred_check
              _
            $region202: #{custom-call.5} parent=195 // pred_check_branch
              %1086 = sbr.rel (0) target = $region204
            $region203: #{custom-call.5} parent=195 // pred_region
              %s1088 = ssub.s32 16, 1
              loop: start=0, step=1, limit=1
              $region205: #{custom-call.5} parent=203 // loop_pre_header
                _
              $region206: #{custom-call.5} parent=203 // loop_header
                %s1090 = sphi 0, %s1094
                %p1091 = scmp.ge.s32.totalorder %s1090, 1
                %s1095 = sphi %s1019, %s1019
                %s1096 = sphi %s1080, %s1080
              $region207: #{custom-call.5} parent=203 // loop_header_branch
                %1093 = sbr.rel (%p1091) target = $region211
              $region208: #{custom-call.5} parent=203 // loop_body
                %v1097 = vld [vmem:[%s1095] sm:%s1088]
                %1098 = vst [vmem:[%s1096] sm:%s1088] %v1097
              $region209: #{custom-call.5} parent=203 // loop_footer
                %s1094 = sadd.s32 1, %s1090
              $region210: #{custom-call.5} parent=203 // loop_footer_branch
                %1089 = sbr.rel target = $region206
              $region211: #{custom-call.5} parent=203 // loop_exit
                _
            $region204: #{custom-call.5} parent=195 // pred_fallthru
              _
          $region196: #{custom-call.5} parent=191 // pred_fallthru
            _
          %1113 = vnop
        $region192: #{custom-call.5} parent=139 // pred_fallthru
          _
        %s1114 = smul.addr %s17, 2
        %s1115 = scalar_lea.vmem %s6, %s1114
        // Predicated region
        $region223: #{custom-call.5} parent=139 // pred_check
          _
        $region224: #{custom-call.5} parent=139 // pred_check_branch
          %1117 = sbr.rel (0) target = $region226
        $region225: #{custom-call.5} parent=139 // pred_region
          // Predicated region
          $region227: #{custom-call.5} parent=225 // pred_check
            _
          $region228: #{custom-call.5} parent=225 // pred_check_branch
            %1119 = sbr.rel target = $region230
          $region229: #{custom-call.5} parent=225 // pred_region
            // Predicated region
            $region242: #{custom-call.5} parent=229 // pred_check
              _
            $region243: #{custom-call.5} parent=229 // pred_check_branch
              %1135 = sbr.rel (0) target = $region245
            $region244: #{custom-call.5} parent=229 // pred_region
              %s1137 = ssub.s32 4, 1
              loop: start=0, step=1, limit=1
              $region246: #{custom-call.5} parent=244 // loop_pre_header
                _
              $region247: #{custom-call.5} parent=244 // loop_header
                %s1139 = sphi 0, %s1143
                %p1140 = scmp.ge.s32.totalorder %s1139, 1
                %s1144 = sphi %s1023, %s1023
                %s1145 = sphi %s1115, %s1115
              $region248: #{custom-call.5} parent=244 // loop_header_branch
                %1142 = sbr.rel (%p1140) target = $region252
              $region249: #{custom-call.5} parent=244 // loop_body
                %v1146 = vld [vmem:[%s1144] sm:%s1137]
                %1147 = vst [vmem:[%s1145] sm:%s1137] %v1146
              $region250: #{custom-call.5} parent=244 // loop_footer
                %s1143 = sadd.s32 1, %s1139
              $region251: #{custom-call.5} parent=244 // loop_footer_branch
                %1138 = sbr.rel target = $region247
              $region252: #{custom-call.5} parent=244 // loop_exit
                _
            $region245: #{custom-call.5} parent=229 // pred_fallthru
              _
          $region230: #{custom-call.5} parent=225 // pred_fallthru
            _
          // Predicated region
          $region231: #{custom-call.5} parent=225 // pred_check
            _
          $region232: #{custom-call.5} parent=225 // pred_check_branch
            %1121 = sbr.rel (0) target = $region234
          $region233: #{custom-call.5} parent=225 // pred_region
            %s1123 = ssub.s32 4, 1
            loop: start=0, step=1, limit=1
            $region235: #{custom-call.5} parent=233 // loop_pre_header
              _
            $region236: #{custom-call.5} parent=233 // loop_header
              %s1125 = sphi 0, %s1129
              %p1126 = scmp.ge.s32.totalorder %s1125, 1
              %s1130 = sphi %s1023, %s1023
              %s1131 = sphi %s1115, %s1115
            $region237: #{custom-call.5} parent=233 // loop_header_branch
              %1128 = sbr.rel (%p1126) target = $region241
            $region238: #{custom-call.5} parent=233 // loop_body
              %v1132 = vld [vmem:[%s1130] sm:%s1123]
              %1133 = vst [vmem:[%s1131] sm:%s1123] %v1132
            $region239: #{custom-call.5} parent=233 // loop_footer
              %s1129 = sadd.s32 1, %s1125
            $region240: #{custom-call.5} parent=233 // loop_footer_branch
              %1124 = sbr.rel target = $region236
            $region241: #{custom-call.5} parent=233 // loop_exit
              _
          $region234: #{custom-call.5} parent=225 // pred_fallthru
            _
        $region226: #{custom-call.5} parent=139 // pred_fallthru
          _
        %1148 = vnop
        %s1149 = smul.addr %s17, 2
        %s1150 = scalar_lea.vmem %s7, %s1149
        // Predicated region
        $region253: #{custom-call.5} parent=139 // pred_check
          _
        $region254: #{custom-call.5} parent=139 // pred_check_branch
          %1152 = sbr.rel (0) target = $region256
        $region255: #{custom-call.5} parent=139 // pred_region
          // Predicated region
          $region257: #{custom-call.5} parent=255 // pred_check
            _
          $region258: #{custom-call.5} parent=255 // pred_check_branch
            %1154 = sbr.rel target = $region260
          $region259: #{custom-call.5} parent=255 // pred_region
            // Predicated region
            $region272: #{custom-call.5} parent=259 // pred_check
              _
            $region273: #{custom-call.5} parent=259 // pred_check_branch
              %1170 = sbr.rel (0) target = $region275
            $region274: #{custom-call.5} parent=259 // pred_region
              %s1172 = ssub.s32 4, 1
              loop: start=0, step=1, limit=1
              $region276: #{custom-call.5} parent=274 // loop_pre_header
                _
              $region277: #{custom-call.5} parent=274 // loop_header
                %s1174 = sphi 0, %s1178
                %p1175 = scmp.ge.s32.totalorder %s1174, 1
                %s1179 = sphi %s1027, %s1027
                %s1180 = sphi %s1150, %s1150
              $region278: #{custom-call.5} parent=274 // loop_header_branch
                %1177 = sbr.rel (%p1175) target = $region282
              $region279: #{custom-call.5} parent=274 // loop_body
                %v1181 = vld [vmem:[%s1179] sm:%s1172]
                %1182 = vst [vmem:[%s1180] sm:%s1172] %v1181
              $region280: #{custom-call.5} parent=274 // loop_footer
                %s1178 = sadd.s32 1, %s1174
              $region281: #{custom-call.5} parent=274 // loop_footer_branch
                %1173 = sbr.rel target = $region277
              $region282: #{custom-call.5} parent=274 // loop_exit
                _
            $region275: #{custom-call.5} parent=259 // pred_fallthru
              _
          $region260: #{custom-call.5} parent=255 // pred_fallthru
            _
          // Predicated region
          $region261: #{custom-call.5} parent=255 // pred_check
            _
          $region262: #{custom-call.5} parent=255 // pred_check_branch
            %1156 = sbr.rel (0) target = $region264
          $region263: #{custom-call.5} parent=255 // pred_region
            %s1158 = ssub.s32 4, 1
            loop: start=0, step=1, limit=1
            $region265: #{custom-call.5} parent=263 // loop_pre_header
              _
            $region266: #{custom-call.5} parent=263 // loop_header
              %s1160 = sphi 0, %s1164
              %p1161 = scmp.ge.s32.totalorder %s1160, 1
              %s1165 = sphi %s1027, %s1027
              %s1166 = sphi %s1150, %s1150
            $region267: #{custom-call.5} parent=263 // loop_header_branch
              %1163 = sbr.rel (%p1161) target = $region271
            $region268: #{custom-call.5} parent=263 // loop_body
              %v1167 = vld [vmem:[%s1165] sm:%s1158]
              %1168 = vst [vmem:[%s1166] sm:%s1158] %v1167
            $region269: #{custom-call.5} parent=263 // loop_footer
              %s1164 = sadd.s32 1, %s1160
            $region270: #{custom-call.5} parent=263 // loop_footer_branch
              %1159 = sbr.rel target = $region266
            $region271: #{custom-call.5} parent=263 // loop_exit
              _
          $region264: #{custom-call.5} parent=255 // pred_fallthru
            _
        $region256: #{custom-call.5} parent=139 // pred_fallthru
          _
        %1183 = vnop
        %s1184 = smul.addr %s17, 2
        %s1185 = scalar_lea.vmem %s8, %s1184
        // Predicated region
        $region283: #{custom-call.5} parent=139 // pred_check
          _
        $region284: #{custom-call.5} parent=139 // pred_check_branch
          %1187 = sbr.rel (0) target = $region286
        $region285: #{custom-call.5} parent=139 // pred_region
          // Predicated region
          $region287: #{custom-call.5} parent=285 // pred_check
            _
          $region288: #{custom-call.5} parent=285 // pred_check_branch
            %1189 = sbr.rel target = $region290
          $region289: #{custom-call.5} parent=285 // pred_region
            // Predicated region
            $region302: #{custom-call.5} parent=289 // pred_check
              _
            $region303: #{custom-call.5} parent=289 // pred_check_branch
              %1205 = sbr.rel (0) target = $region305
            $region304: #{custom-call.5} parent=289 // pred_region
              %s1207 = ssub.s32 4, 1
              loop: start=0, step=1, limit=1
              $region306: #{custom-call.5} parent=304 // loop_pre_header
                _
              $region307: #{custom-call.5} parent=304 // loop_header
                %s1209 = sphi 0, %s1213
                %p1210 = scmp.ge.s32.totalorder %s1209, 1
                %s1214 = sphi %s1031, %s1031
                %s1215 = sphi %s1185, %s1185
              $region308: #{custom-call.5} parent=304 // loop_header_branch
                %1212 = sbr.rel (%p1210) target = $region312
              $region309: #{custom-call.5} parent=304 // loop_body
                %v1216 = vld [vmem:[%s1214] sm:%s1207]
                %1217 = vst [vmem:[%s1215] sm:%s1207] %v1216
              $region310: #{custom-call.5} parent=304 // loop_footer
                %s1213 = sadd.s32 1, %s1209
              $region311: #{custom-call.5} parent=304 // loop_footer_branch
                %1208 = sbr.rel target = $region307
              $region312: #{custom-call.5} parent=304 // loop_exit
                _
            $region305: #{custom-call.5} parent=289 // pred_fallthru
              _
          $region290: #{custom-call.5} parent=285 // pred_fallthru
            _
          // Predicated region
          $region291: #{custom-call.5} parent=285 // pred_check
            _
          $region292: #{custom-call.5} parent=285 // pred_check_branch
            %1191 = sbr.rel (0) target = $region294
          $region293: #{custom-call.5} parent=285 // pred_region
            %s1193 = ssub.s32 4, 1
            loop: start=0, step=1, limit=1
            $region295: #{custom-call.5} parent=293 // loop_pre_header
              _
            $region296: #{custom-call.5} parent=293 // loop_header
              %s1195 = sphi 0, %s1199
              %p1196 = scmp.ge.s32.totalorder %s1195, 1
              %s1200 = sphi %s1031, %s1031
              %s1201 = sphi %s1185, %s1185
            $region297: #{custom-call.5} parent=293 // loop_header_branch
              %1198 = sbr.rel (%p1196) target = $region301
            $region298: #{custom-call.5} parent=293 // loop_body
              %v1202 = vld [vmem:[%s1200] sm:%s1193]
              %1203 = vst [vmem:[%s1201] sm:%s1193] %v1202
            $region299: #{custom-call.5} parent=293 // loop_footer
              %s1199 = sadd.s32 1, %s1195
            $region300: #{custom-call.5} parent=293 // loop_footer_branch
              %1194 = sbr.rel target = $region296
            $region301: #{custom-call.5} parent=293 // loop_exit
              _
          $region294: #{custom-call.5} parent=285 // pred_fallthru
            _
        $region286: #{custom-call.5} parent=139 // pred_fallthru
          _
        %1218 = vnop
        %s1219 = smul.addr %s17, 2
        %s1220 = scalar_lea.vmem %s9, %s1219
        // Predicated region
        $region313: #{custom-call.5} parent=139 // pred_check
          _
        $region314: #{custom-call.5} parent=139 // pred_check_branch
          %1222 = sbr.rel (0) target = $region316
        $region315: #{custom-call.5} parent=139 // pred_region
          // Predicated region
          $region317: #{custom-call.5} parent=315 // pred_check
            _
          $region318: #{custom-call.5} parent=315 // pred_check_branch
            %1224 = sbr.rel target = $region320
          $region319: #{custom-call.5} parent=315 // pred_region
            // Predicated region
            $region332: #{custom-call.5} parent=319 // pred_check
              _
            $region333: #{custom-call.5} parent=319 // pred_check_branch
              %1240 = sbr.rel (0) target = $region335
            $region334: #{custom-call.5} parent=319 // pred_region
              %s1242 = ssub.s32 4, 1
              loop: start=0, step=1, limit=1
              $region336: #{custom-call.5} parent=334 // loop_pre_header
                _
              $region337: #{custom-call.5} parent=334 // loop_header
                %s1244 = sphi 0, %s1248
                %p1245 = scmp.ge.s32.totalorder %s1244, 1
                %s1249 = sphi %s1035, %s1035
                %s1250 = sphi %s1220, %s1220
              $region338: #{custom-call.5} parent=334 // loop_header_branch
                %1247 = sbr.rel (%p1245) target = $region342
              $region339: #{custom-call.5} parent=334 // loop_body
                %v1251 = vld [vmem:[%s1249] sm:%s1242]
                %1252 = vst [vmem:[%s1250] sm:%s1242] %v1251
              $region340: #{custom-call.5} parent=334 // loop_footer
                %s1248 = sadd.s32 1, %s1244
              $region341: #{custom-call.5} parent=334 // loop_footer_branch
                %1243 = sbr.rel target = $region337
              $region342: #{custom-call.5} parent=334 // loop_exit
                _
            $region335: #{custom-call.5} parent=319 // pred_fallthru
              _
          $region320: #{custom-call.5} parent=315 // pred_fallthru
            _
          // Predicated region
          $region321: #{custom-call.5} parent=315 // pred_check
            _
          $region322: #{custom-call.5} parent=315 // pred_check_branch
            %1226 = sbr.rel (0) target = $region324
          $region323: #{custom-call.5} parent=315 // pred_region
            %s1228 = ssub.s32 4, 1
            loop: start=0, step=1, limit=1
            $region325: #{custom-call.5} parent=323 // loop_pre_header
              _
            $region326: #{custom-call.5} parent=323 // loop_header
              %s1230 = sphi 0, %s1234
              %p1231 = scmp.ge.s32.totalorder %s1230, 1
              %s1235 = sphi %s1035, %s1035
              %s1236 = sphi %s1220, %s1220
            $region327: #{custom-call.5} parent=323 // loop_header_branch
              %1233 = sbr.rel (%p1231) target = $region331
            $region328: #{custom-call.5} parent=323 // loop_body
              %v1237 = vld [vmem:[%s1235] sm:%s1228]
              %1238 = vst [vmem:[%s1236] sm:%s1228] %v1237
            $region329: #{custom-call.5} parent=323 // loop_footer
              %s1234 = sadd.s32 1, %s1230
            $region330: #{custom-call.5} parent=323 // loop_footer_branch
              %1229 = sbr.rel target = $region326
            $region331: #{custom-call.5} parent=323 // loop_exit
              _
          $region324: #{custom-call.5} parent=315 // pred_fallthru
            _
        $region316: #{custom-call.5} parent=139 // pred_fallthru
          _
        %1253 = vnop
      $region140: #{custom-call.5} parent=5 // pred_fallthru
        _
      %p1254 = scmp.le.s32.totalorder 2, %s12
      // Predicated region
      $region343: #{custom-call.5} parent=5 // pred_check
        %p1255 = pneg %p1254
      $region344: #{custom-call.5} parent=5 // pred_check_branch
        %1257 = sbr.rel (%p1255) target = $region346
      $region345: #{custom-call.5} parent=5 // pred_region
        %s1258 = ssub.s32 %s12, 2
        // Predicated region
        $region347: #{custom-call.5} parent=345 // pred_check
          %p1259 = pneg %p43
        $region348: #{custom-call.5} parent=345 // pred_check_branch
          %1261 = sbr.rel (%p1259) target = $region350
        $region349: #{custom-call.5} parent=345 // pred_region
          %s1262 = sand.u32 %s28, 1
          %s1263 = sand.u32 %s28, 1
          %s1264 = smul.addr %s1263, 4
          %s1265 = scalar_lea.vmem [#allocation9], %s1264
        $region350: #{custom-call.5} parent=345 // pred_fallthru
          _
        // Predicated region
        $region351: #{custom-call.5} parent=345 // pred_check
          %p1266 = pneg %p71
        $region352: #{custom-call.5} parent=345 // pred_check_branch
          %1268 = sbr.rel (%p1266) target = $region354
        $region353: #{custom-call.5} parent=345 // pred_region
          %s1269 = sand.u32 %s56, 1
          %s1270 = sand.u32 %s56, 1
          %s1271 = smul.addr %s1270, 4
          %s1272 = scalar_lea.vmem [#allocation11], %s1271
        $region354: #{custom-call.5} parent=345 // pred_fallthru
          _
        %s1273 = sand.u32 %s18, 1
        %s1274 = sand.u32 %s18, 1
        %s1275 = smul.addr %s1274, 2
        %s1276 = scalar_lea.vmem [#allocation13], %s1275
        %s1277 = sand.u32 %s18, 1
        %s1278 = sand.u32 %s18, 1
        %s1279 = smul.addr %s1278, 2
        %s1280 = scalar_lea.vmem [#allocation15], %s1279
        %s1281 = sand.u32 %s18, 1
        %s1282 = sand.u32 %s18, 1
        %s1283 = smul.addr %s1282, 2
        %s1284 = scalar_lea.vmem [#allocation17], %s1283
        %s1285 = sand.u32 %s18, 1
        %s1286 = sand.u32 %s18, 1
        %s1287 = smul.addr %s1286, 2
        %s1288 = scalar_lea.vmem [#allocation19], %s1287
      $region346: #{custom-call.5} parent=5 // pred_fallthru
        _
    $region6: #{custom-call.5} parent=1 // loop_footer
      %s16 = sadd.s32 1, %s12
    $region7: #{custom-call.5} parent=1 // loop_footer_branch
      %11 = sbr.rel target = $region3
    $region8: #{custom-call.5} parent=1 // loop_exit
      _

// kernel: shape_model_forward.4
$region0: #{shape_model_forward.4}
  #allocation0 [shape = 'u32[]', space=smem, size = 0x4, offset = 0x4, fixed_abs, tag = 'smem constant byte address 0x4 - core index']
  #allocation1 [shape = 'u32[144,128]{1,0:T(1,128)}', space=vmem, size = 0x12000, scoped, tag = 'internal scratch']
  %s0 = inlined_call_operand.vmem [shape: f32[4,3,128], index: 0, kind: input, shape index: {}]
  %s1 = inlined_call_operand.vmem [shape: f32[4,3,3], index: 1, kind: output, shape index: {0}]
  %s2 = inlined_call_operand.vmem [shape: f32[4,3,1], index: 2, kind: output, shape index: {1}]
  %3 = xla_tuple %s1, %s2
  %s4 = sld [smem:[#allocation0]]
  $region45: #{shape_model_forward.4} parent=0
    _
  %s6 = ssub.s32 1, %s4
  %s7 = scalar_select 0, %s6, %s4
  loop: start=0, step=1, limit=6
  $region2: #{shape_model_forward.4} parent=0 // loop_pre_header
    _
  $region3: #{shape_model_forward.4} parent=0 // loop_header
    %s9 = sphi 0, %s13
    %p10 = scmp.ge.s32.totalorder %s9, 6
    %s19 = sphi 0, %s21
    %s22 = sphi 0, %s19
    %s23 = sphi 0, %s22
    %s39 = sphi 0, %s23
    %s45 = sphi 0, %s47
    %s48 = sphi 0, %s45
    %s49 = sphi 0, %s48
    %s65 = sphi 0, %s49
    %s71 = sphi 0, %s73
    %s74 = sphi 0, %s71
    %s75 = sphi 0, %s74
    %s91 = sphi 0, %s75
  $region4: #{shape_model_forward.4} parent=0 // loop_header_branch
    %12 = sbr.rel (%p10) target = $region8
  $region5: #{shape_model_forward.4} parent=0 // loop_body
    %s14 = ssub.s32 %s9, 1
    %s15 = ssub.s32 %s9, 2
    %s16 = sadd.s32 %s9, 1
    %s17 = ssub.s32 %s9, %s16
    %p18 = scmp.eq.s32.totalorder %s17, 0
    %s20 = sadd.s32 %s19, 1
    %s21 = scalar_select %p18, %s19, %s20
    %p24 = pneg %p18
    %p25 = scmp.eq.s32.totalorder %s9, 3
    %p26 = por %p24, %p25
    %p27 = scmp.ne.s32.totalorder %s19, %s22
    %p28 = scmp.eq.s32.totalorder %s9, 0
    %p29 = por %p27, %p28
    %p30 = scmp.ne.s32.totalorder %s19, %s22
    %p31 = scmp.eq.s32.totalorder %s14, 3
    %p32 = por %p30, %p31
    %p33 = scmp.ne.s32.totalorder %s22, %s23
    %p34 = scmp.eq.s32.totalorder %s14, 0
    %p35 = por %p33, %p34
    %p36 = scmp.ne.s32.totalorder %s22, %s23
    %p37 = scmp.eq.s32.totalorder %s15, 3
    %p38 = por %p36, %p37
    %p40 = scmp.ne.s32.totalorder %s23, %s39
    %p41 = scmp.eq.s32.totalorder %s15, 0
    %p42 = por %p40, %p41
    %s43 = ssub.s32 %s9, %s16
    %p44 = scmp.eq.s32.totalorder %s43, 0
    %s46 = sadd.s32 %s45, 1
    %s47 = scalar_select %p44, %s45, %s46
    %p50 = pneg %p44
    %p51 = scmp.eq.s32.totalorder %s9, 3
    %p52 = por %p50, %p51
    %p53 = scmp.ne.s32.totalorder %s45, %s48
    %p54 = scmp.eq.s32.totalorder %s9, 0
    %p55 = por %p53, %p54
    %p56 = scmp.ne.s32.totalorder %s45, %s48
    %p57 = scmp.eq.s32.totalorder %s14, 3
    %p58 = por %p56, %p57
    %p59 = scmp.ne.s32.totalorder %s48, %s49
    %p60 = scmp.eq.s32.totalorder %s14, 0
    %p61 = por %p59, %p60
    %p62 = scmp.ne.s32.totalorder %s48, %s49
    %p63 = scmp.eq.s32.totalorder %s15, 3
    %p64 = por %p62, %p63
    %p66 = scmp.ne.s32.totalorder %s49, %s65
    %p67 = scmp.eq.s32.totalorder %s15, 0
    %p68 = por %p66, %p67
    %s69 = ssub.s32 %s9, %s16
    %p70 = scmp.eq.s32.totalorder %s69, 0
    %s72 = sadd.s32 %s71, 1
    %s73 = scalar_select %p70, %s71, %s72
    %p76 = pneg %p70
    %p77 = scmp.eq.s32.totalorder %s9, 3
    %p78 = por %p76, %p77
    %p79 = scmp.ne.s32.totalorder %s71, %s74
    %p80 = scmp.eq.s32.totalorder %s9, 0
    %p81 = por %p79, %p80
    %p82 = scmp.ne.s32.totalorder %s71, %s74
    %p83 = scmp.eq.s32.totalorder %s14, 3
    %p84 = por %p82, %p83
    %p85 = scmp.ne.s32.totalorder %s74, %s75
    %p86 = scmp.eq.s32.totalorder %s14, 0
    %p87 = por %p85, %p86
    %p88 = scmp.ne.s32.totalorder %s74, %s75
    %p89 = scmp.eq.s32.totalorder %s15, 3
    %p90 = por %p88, %p89
    %p92 = scmp.ne.s32.totalorder %s75, %s91
    %p93 = scmp.eq.s32.totalorder %s15, 0
    %p94 = por %p92, %p93
    %p95 = scmp.le.s32.totalorder 1, %s9
    %p96 = scmp.lt.s32.totalorder %s9, 5
    %p97 = pnand %p95, %p96
    %p98 = pneg %p97
    // Predicated region
    $region9: #{shape_model_forward.4} parent=5 // pred_check
      _
    $region10: #{shape_model_forward.4} parent=5 // pred_check_branch
      %100 = sbr.rel (%p97) target = $region12
    $region11: #{shape_model_forward.4} parent=5 // pred_region
      %s101 = ssub.s32 %s9, 1
    $region12: #{shape_model_forward.4} parent=5 // pred_fallthru
      _
    %p102 = scmp.lt.s32.totalorder %s9, 4
    // Predicated region
    $region13: #{shape_model_forward.4} parent=5 // pred_check
      %p103 = pneg %p102
    $region14: #{shape_model_forward.4} parent=5 // pred_check_branch
      %105 = sbr.rel (%p103) target = $region16
    $region15: #{shape_model_forward.4} parent=5 // pred_region
      // Predicated region
      $region17: #{shape_model_forward.4} parent=15 // pred_check
        %p106 = pneg %p29
      $region18: #{shape_model_forward.4} parent=15 // pred_check_branch
        %108 = sbr.rel (%p106) target = $region20
      $region19: #{shape_model_forward.4} parent=15 // pred_region
        %p109 = scmp.lt.s32.totalorder %s9, 3
        %s110 = scalar_select %p109, %s9, 3
        %s111 = smul.addr %s110, 4
        %s112 = scalar_lea.vmem %s0, %s111
      $region20: #{shape_model_forward.4} parent=15 // pred_fallthru
        _
    $region16: #{shape_model_forward.4} parent=5 // pred_fallthru
      _
    %p113 = scmp.le.s32.totalorder 1, %s9
    %p114 = scmp.lt.s32.totalorder %s9, 5
    %p115 = pnand %p113, %p114
    %p116 = pneg %p115
    // Predicated region
    $region21: #{shape_model_forward.4} parent=5 // pred_check
      _
    $region22: #{shape_model_forward.4} parent=5 // pred_check_branch
      %118 = sbr.rel (%p115) target = $region24
    $region23: #{shape_model_forward.4} parent=5 // pred_region
      %s119 = ssub.s32 %s9, 1
      %p120 = scmp.lt.s32.totalorder %s14, 3
      %s121 = scalar_select %p120, %s14, 3
      %s122 = smul.addr %s121, 4
      %s123 = scalar_lea.vmem %s0, %s122
      %p124 = pneg %p35
      %p125 = pneg %p32
      %p126 = pneg %p61
      %p127 = pneg %p58
      %p128 = scmp.lt.s32.totalorder %s14, 3
      %s129 = scalar_select %p128, %s14, 3
      %s130 = smul.addr %s129, 4
      %s131 = scalar_lea.vmem %s1, %s130
      %p132 = pneg %p87
      %p133 = pneg %p84
      %p134 = scmp.lt.s32.totalorder %s14, 3
      %s135 = scalar_select %p134, %s14, 3
      %s136 = smul.addr %s135, 4
      %s137 = scalar_lea.vmem %s2, %s136
      %p138 = scmp.lt.s32.totalorder %s14, 3
      %s139 = scalar_select %p138, %s14, 3
      %s140 = smul.addr %s139, 4
      %s141 = scalar_lea.vmem %s0, %s140
      %p142 = scmp.lt.s32.totalorder %s14, 3
      %s143 = scalar_select %p142, %s14, 3
      %s144 = smul.addr %s143, 4
      %s145 = scalar_lea.vmem %s1, %s144
      %p146 = scmp.lt.s32.totalorder %s14, 3
      %s147 = scalar_select %p146, %s14, 3
      %s148 = smul.addr %s147, 4
      %s149 = scalar_lea.vmem %s2, %s148
      %v150 = vld [vmem:[%s141] sm:$0x7]
      %vm151 = vcmask 1042432
      %v152 = vsel %vm151, %v150, 0.0
      %153 = vadd.xlane.f32.xlu0 %v152
      %v154 = vpop.xlane.xlu0 %153
      %v155 = vrcp.pop 128.0
      %v156 = vmul.f32 %v154, %v155
      %v157 = vsub.f32 %v150, %v156
      %v158 = vmul.f32 %v157, %v157
      %v159 = vsel %vm151, %v158, 0.0
      %160 = vadd.xlane.f32.xlu0 %v159
      %v161 = vpop.xlane.xlu0 %160
      %v162 = vsel %vm151, %v161, 0.0
      %v163 = vrot.slane %v162, 4
      %v164 = vadd.f32 %v162, %v163
      %v165 = vrot.slane %v164, 2
      %v166 = vadd.f32 %v164, %v165
      %v167 = vrot.slane %v166, 1
      %v168 = vadd.f32 %v166, %v167
      %v169 = vmax.f32 %v168, 1e-24
      %v170 = vrsqrt.pop %v169
      %v171 = vmul.f32 %v169, %v170
      %vm172 = vcmp.eq.f32.partialorder %v169, inf
      %v173 = vsel %vm172, %v169, %v171
      %vm174 = vcmp.eq.f32.partialorder %v169, 0.0
      %v175 = vand.u32 %v169, 2147483648
      %v176 = vsel %vm174, %v175, %v173
      %v177 = vrcp.pop %v176
      %v178 = vmul.f32 1.0, %v177
      %v179 = vmul.f32 %v157, %v178
      %v180 = vlaneseq
      %v181 = vshrl.u32 %v180, 7
      %v182 = vsub.s32 0, %v181
      %v183 = vrot.slane %v179, %v182
      %v184 = vmul.f32 %v179, %v183
      %v185 = vsel %vm151, %v184, 0.0
      %186 = vadd.xlane.f32.xlu0 %v185
      %v187 = vpop.xlane.xlu0 %186
      %vm188 = vcmask 2048
      %189 = vst.msk [vmem:[%s145] sm:$0x7] %vm188, %v187
      %v190 = vlaneseq
      %v191 = vshrl.u32 %v190, 7
      %v192 = vsub.s32 1, %v191
      %v193 = vrot.slane %v179, %v192
      %v194 = vmul.f32 %v179, %v193
      %v195 = vsel %vm151, %v194, 0.0
      %196 = vadd.xlane.f32.xlu0 %v195
      %v197 = vpop.xlane.xlu0 %196
      %vm198 = vcmask 10248
      %199 = vst.msk [vmem:[%s145] sm:$0x7] %vm198, %v197
      %v200 = vlaneseq
      %v201 = vshrl.u32 %v200, 7
      %v202 = vsub.s32 2, %v201
      %v203 = vrot.slane %v179, %v202
      %v204 = vmul.f32 %v179, %v203
      %v205 = vsel %vm151, %v204, 0.0
      %206 = vadd.xlane.f32.xlu0 %v205
      %v207 = vpop.xlane.xlu0 %206
      %vm208 = vcmask 18448
      %209 = vst.msk [vmem:[%s145] sm:$0x7] %vm208, %v207
      %210 = vst.msk [vmem:[%s149] sm:$0x7] %vm188, %v156
      %p211 = scmp.lt.s32.totalorder %s14, 3
      %s212 = scalar_select %p211, %s14, 3
      %s213 = smul.addr %s212, 4
      %s214 = scalar_lea.vmem %s1, %s213
      %p215 = scmp.lt.s32.totalorder %s14, 3
      %s216 = scalar_select %p215, %s14, 3
      %s217 = smul.addr %s216, 4
      %s218 = scalar_lea.vmem %s2, %s217
      // Predicated region
      $region25: #{shape_model_forward.4} parent=23 // pred_check
        %p219 = pneg %p58
      $region26: #{shape_model_forward.4} parent=23 // pred_check_branch
        %221 = sbr.rel (%p219) target = $region28
      $region27: #{shape_model_forward.4} parent=23 // pred_region
        _
      $region28: #{shape_model_forward.4} parent=23 // pred_fallthru
        _
      // Predicated region
      $region29: #{shape_model_forward.4} parent=23 // pred_check
        %p222 = pneg %p84
      $region30: #{shape_model_forward.4} parent=23 // pred_check_branch
        %224 = sbr.rel (%p222) target = $region32
      $region31: #{shape_model_forward.4} parent=23 // pred_region
        _
      $region32: #{shape_model_forward.4} parent=23 // pred_fallthru
        _
    $region24: #{shape_model_forward.4} parent=5 // pred_fallthru
      _
    %p225 = scmp.le.s32.totalorder 2, %s9
    // Predicated region
    $region33: #{shape_model_forward.4} parent=5 // pred_check
      %p226 = pneg %p225
    $region34: #{shape_model_forward.4} parent=5 // pred_check_branch
      %228 = sbr.rel (%p226) target = $region36
    $region35: #{shape_model_forward.4} parent=5 // pred_region
      %s229 = ssub.s32 %s9, 2
      // Predicated region
      $region37: #{shape_model_forward.4} parent=35 // pred_check
        %p230 = pneg %p64
      $region38: #{shape_model_forward.4} parent=35 // pred_check_branch
        %232 = sbr.rel (%p230) target = $region40
      $region39: #{shape_model_forward.4} parent=35 // pred_region
        %p233 = scmp.lt.s32.totalorder %s15, 3
        %s234 = scalar_select %p233, %s15, 3
        %s235 = smul.addr %s234, 4
        %s236 = scalar_lea.vmem %s1, %s235
      $region40: #{shape_model_forward.4} parent=35 // pred_fallthru
        _
      // Predicated region
      $region41: #{shape_model_forward.4} parent=35 // pred_check
        %p237 = pneg %p90
      $region42: #{shape_model_forward.4} parent=35 // pred_check_branch
        %239 = sbr.rel (%p237) target = $region44
      $region43: #{shape_model_forward.4} parent=35 // pred_region
        %p240 = scmp.lt.s32.totalorder %s15, 3
        %s241 = scalar_select %p240, %s15, 3
        %s242 = smul.addr %s241, 4
        %s243 = scalar_lea.vmem %s2, %s242
      $region44: #{shape_model_forward.4} parent=35 // pred_fallthru
        _
    $region36: #{shape_model_forward.4} parent=5 // pred_fallthru
      _
  $region6: #{shape_model_forward.4} parent=0 // loop_footer
    %s13 = sadd.s32 1, %s9
  $region7: #{shape_model_forward.4} parent=0 // loop_footer_branch
    %8 = sbr.rel target = $region3
  $region8: #{shape_model_forward.4} parent=0 // loop_exit
    _

// kernel: shape_model_forward.5
$region0: #{shape_model_forward.5}
  #allocation0 [shape = 'u32[]', space=smem, size = 0x4, offset = 0x4, fixed_abs, tag = 'smem constant byte address 0x4 - core index']
  #allocation1 [shape = 'u32[144,128]{1,0:T(1,128)}', space=vmem, size = 0x12000, scoped, tag = 'internal scratch']
  %s0 = inlined_call_operand.vmem [shape: f32[4,3,128], index: 0, kind: input, shape index: {}]
  %s1 = inlined_call_operand.vmem [shape: f32[4,3,3], index: 1, kind: input, shape index: {}]
  %s2 = inlined_call_operand.vmem [shape: f32[4,3,1], index: 2, kind: input, shape index: {}]
  %s3 = inlined_call_operand.vmem [shape: f32[4,3,128], index: 3, kind: output, shape index: {0}]
  %s4 = inlined_call_operand.hbm [shape: f32[3,128], index: 4, kind: output, shape index: {1}]
  %5 = xla_tuple %s3, %s4
  %s6 = sld [smem:[#allocation0]]
  $region61: #{shape_model_forward.5} parent=0
    _
  %s8 = ssub.s32 1, %s6
  %s9 = scalar_select 0, %s8, %s6
  $region1: #{shape_model_forward.5} parent=0
    #allocation2 [shape = 'u8[2048]{0}', space=vmem, size = 0x800, scoped, tag = 'output window, operand 1, single buffered']
    #allocation3 [shape = 's32[2]{0}', space=sflag, size = 0x8, scoped, tag = 'scoped memory for shape_model_forward.5']
    %10 = vsyncpa [#allocation3], 0
    loop: start=0, step=1, limit=6
    $region2: #{shape_model_forward.5} parent=1 // loop_pre_header
      _
    $region3: #{shape_model_forward.5} parent=1 // loop_header
      %s12 = sphi 0, %s16
      %p13 = scmp.ge.s32.totalorder %s12, 6
      %s22 = sphi 0, %s24
      %s25 = sphi 0, %s22
      %s26 = sphi 0, %s25
      %s42 = sphi 0, %s26
      %s48 = sphi 0, %s50
      %s51 = sphi 0, %s48
      %s52 = sphi 0, %s51
      %s68 = sphi 0, %s52
      %s74 = sphi 0, %s76
      %s77 = sphi 0, %s74
      %s78 = sphi 0, %s77
      %s94 = sphi 0, %s78
      %s100 = sphi 0, %s102
      %s103 = sphi 0, %s100
      %s104 = sphi 0, %s103
      %s120 = sphi 0, %s104
      %s124 = sphi 0, %s124
      %s126 = sphi 0, %s124
      %s127 = sphi 0, %s126
      %s141 = sphi 0, %s127
    $region4: #{shape_model_forward.5} parent=1 // loop_header_branch
      %15 = sbr.rel (%p13) target = $region8
    $region5: #{shape_model_forward.5} parent=1 // loop_body
      %s17 = ssub.s32 %s12, 1
      %s18 = ssub.s32 %s12, 2
      %s19 = sadd.s32 %s12, 1
      %s20 = ssub.s32 %s12, %s19
      %p21 = scmp.eq.s32.totalorder %s20, 0
      %s23 = sadd.s32 %s22, 1
      %s24 = scalar_select %p21, %s22, %s23
      %p27 = pneg %p21
      %p28 = scmp.eq.s32.totalorder %s12, 3
      %p29 = por %p27, %p28
      %p30 = scmp.ne.s32.totalorder %s22, %s25
      %p31 = scmp.eq.s32.totalorder %s12, 0
      %p32 = por %p30, %p31
      %p33 = scmp.ne.s32.totalorder %s22, %s25
      %p34 = scmp.eq.s32.totalorder %s17, 3
      %p35 = por %p33, %p34
      %p36 = scmp.ne.s32.totalorder %s25, %s26
      %p37 = scmp.eq.s32.totalorder %s17, 0
      %p38 = por %p36, %p37
      %p39 = scmp.ne.s32.totalorder %s25, %s26
      %p40 = scmp.eq.s32.totalorder %s18, 3
      %p41 = por %p39, %p40
      %p43 = scmp.ne.s32.totalorder %s26, %s42
      %p44 = scmp.eq.s32.totalorder %s18, 0
      %p45 = por %p43, %p44
      %s46 = ssub.s32 %s12, %s19
      %p47 = scmp.eq.s32.totalorder %s46, 0
      %s49 = sadd.s32 %s48, 1
      %s50 = scalar_select %p47, %s48, %s49
      %p53 = pneg %p47
      %p54 = scmp.eq.s32.totalorder %s12, 3
      %p55 = por %p53, %p54
      %p56 = scmp.ne.s32.totalorder %s48, %s51
      %p57 = scmp.eq.s32.totalorder %s12, 0
      %p58 = por %p56, %p57
      %p59 = scmp.ne.s32.totalorder %s48, %s51
      %p60 = scmp.eq.s32.totalorder %s17, 3
      %p61 = por %p59, %p60
      %p62 = scmp.ne.s32.totalorder %s51, %s52
      %p63 = scmp.eq.s32.totalorder %s17, 0
      %p64 = por %p62, %p63
      %p65 = scmp.ne.s32.totalorder %s51, %s52
      %p66 = scmp.eq.s32.totalorder %s18, 3
      %p67 = por %p65, %p66
      %p69 = scmp.ne.s32.totalorder %s52, %s68
      %p70 = scmp.eq.s32.totalorder %s18, 0
      %p71 = por %p69, %p70
      %s72 = ssub.s32 %s12, %s19
      %p73 = scmp.eq.s32.totalorder %s72, 0
      %s75 = sadd.s32 %s74, 1
      %s76 = scalar_select %p73, %s74, %s75
      %p79 = pneg %p73
      %p80 = scmp.eq.s32.totalorder %s12, 3
      %p81 = por %p79, %p80
      %p82 = scmp.ne.s32.totalorder %s74, %s77
      %p83 = scmp.eq.s32.totalorder %s12, 0
      %p84 = por %p82, %p83
      %p85 = scmp.ne.s32.totalorder %s74, %s77
      %p86 = scmp.eq.s32.totalorder %s17, 3
      %p87 = por %p85, %p86
      %p88 = scmp.ne.s32.totalorder %s77, %s78
      %p89 = scmp.eq.s32.totalorder %s17, 0
      %p90 = por %p88, %p89
      %p91 = scmp.ne.s32.totalorder %s77, %s78
      %p92 = scmp.eq.s32.totalorder %s18, 3
      %p93 = por %p91, %p92
      %p95 = scmp.ne.s32.totalorder %s78, %s94
      %p96 = scmp.eq.s32.totalorder %s18, 0
      %p97 = por %p95, %p96
      %s98 = ssub.s32 %s12, %s19
      %p99 = scmp.eq.s32.totalorder %s98, 0
      %s101 = sadd.s32 %s100, 1
      %s102 = scalar_select %p99, %s100, %s101
      %p105 = pneg %p99
      %p106 = scmp.eq.s32.totalorder %s12, 3
      %p107 = por %p105, %p106
      %p108 = scmp.ne.s32.totalorder %s100, %s103
      %p109 = scmp.eq.s32.totalorder %s12, 0
      %p110 = por %p108, %p109
      %p111 = scmp.ne.s32.totalorder %s100, %s103
      %p112 = scmp.eq.s32.totalorder %s17, 3
      %p113 = por %p111, %p112
      %p114 = scmp.ne.s32.totalorder %s103, %s104
      %p115 = scmp.eq.s32.totalorder %s17, 0
      %p116 = por %p114, %p115
      %p117 = scmp.ne.s32.totalorder %s103, %s104
      %p118 = scmp.eq.s32.totalorder %s18, 3
      %p119 = por %p117, %p118
      %p121 = scmp.ne.s32.totalorder %s104, %s120
      %p122 = scmp.eq.s32.totalorder %s18, 0
      %p123 = por %p121, %p122
      %s125 = sadd.s32 %s124, 1
      %p128 = scmp.eq.s32.totalorder %s12, 3
      %p129 = scmp.ne.s32.totalorder %s124, %s126
      %p130 = scmp.eq.s32.totalorder %s12, 0
      %p131 = por %p129, %p130
      %p132 = scmp.ne.s32.totalorder %s124, %s126
      %p133 = scmp.eq.s32.totalorder %s17, 3
      %p134 = por %p132, %p133
      %p135 = scmp.ne.s32.totalorder %s126, %s127
      %p136 = scmp.eq.s32.totalorder %s17, 0
      %p137 = por %p135, %p136
      %p138 = scmp.ne.s32.totalorder %s126, %s127
      %p139 = scmp.eq.s32.totalorder %s18, 3
      %p140 = por %p138, %p139
      %p142 = scmp.ne.s32.totalorder %s127, %s141
      %p143 = scmp.eq.s32.totalorder %s18, 0
      %p144 = por %p142, %p143
      %p145 = scmp.le.s32.totalorder 1, %s12
      %p146 = scmp.lt.s32.totalorder %s12, 5
      %p147 = pnand %p145, %p146
      %p148 = pneg %p147
      // Predicated region
      $region9: #{shape_model_forward.5} parent=5 // pred_check
        _
      $region10: #{shape_model_forward.5} parent=5 // pred_check_branch
        %150 = sbr.rel (%p147) target = $region12
      $region11: #{shape_model_forward.5} parent=5 // pred_region
        %s151 = ssub.s32 %s12, 1
      $region12: #{shape_model_forward.5} parent=5 // pred_fallthru
        _
      %p152 = scmp.lt.s32.totalorder %s12, 4
      // Predicated region
      $region13: #{shape_model_forward.5} parent=5 // pred_check
        %p153 = pneg %p152
      $region14: #{shape_model_forward.5} parent=5 // pred_check_branch
        %155 = sbr.rel (%p153) target = $region16
      $region15: #{shape_model_forward.5} parent=5 // pred_region
        // Predicated region
        $region17: #{shape_model_forward.5} parent=15 // pred_check
          %p156 = pneg %p32
        $region18: #{shape_model_forward.5} parent=15 // pred_check_branch
          %158 = sbr.rel (%p156) target = $region20
        $region19: #{shape_model_forward.5} parent=15 // pred_region
          %p159 = scmp.lt.s32.totalorder %s12, 3
          %s160 = scalar_select %p159, %s12, 3
          %s161 = smul.addr %s160, 4
          %s162 = scalar_lea.vmem %s0, %s161
        $region20: #{shape_model_forward.5} parent=15 // pred_fallthru
          _
        // Predicated region
        $region21: #{shape_model_forward.5} parent=15 // pred_check
          %p163 = pneg %p58
        $region22: #{shape_model_forward.5} parent=15 // pred_check_branch
          %165 = sbr.rel (%p163) target = $region24
        $region23: #{shape_model_forward.5} parent=15 // pred_region
          %p166 = scmp.lt.s32.totalorder %s12, 3
          %s167 = scalar_select %p166, %s12, 3
          %s168 = smul.addr %s167, 4
          %s169 = scalar_lea.vmem %s1, %s168
        $region24: #{shape_model_forward.5} parent=15 // pred_fallthru
          _
        // Predicated region
        $region25: #{shape_model_forward.5} parent=15 // pred_check
          %p170 = pneg %p84
        $region26: #{shape_model_forward.5} parent=15 // pred_check_branch
          %172 = sbr.rel (%p170) target = $region28
        $region27: #{shape_model_forward.5} parent=15 // pred_region
          %p173 = scmp.lt.s32.totalorder %s12, 3
          %s174 = scalar_select %p173, %s12, 3
          %s175 = smul.addr %s174, 4
          %s176 = scalar_lea.vmem %s2, %s175
        $region28: #{shape_model_forward.5} parent=15 // pred_fallthru
          _
      $region16: #{shape_model_forward.5} parent=5 // pred_fallthru
        _
      %p177 = scmp.le.s32.totalorder 1, %s12
      %p178 = scmp.lt.s32.totalorder %s12, 5
      %p179 = pnand %p177, %p178
      %p180 = pneg %p179
      // Predicated region
      $region29: #{shape_model_forward.5} parent=5 // pred_check
        _
      $region30: #{shape_model_forward.5} parent=5 // pred_check_branch
        %182 = sbr.rel (%p179) target = $region32
      $region31: #{shape_model_forward.5} parent=5 // pred_region
        %s183 = ssub.s32 %s12, 1
        %p184 = scmp.lt.s32.totalorder %s17, 3
        %s185 = scalar_select %p184, %s17, 3
        %s186 = smul.addr %s185, 4
        %s187 = scalar_lea.vmem %s0, %s186
        %p188 = pneg %p38
        %p189 = pneg %p35
        %p190 = scmp.lt.s32.totalorder %s17, 3
        %s191 = scalar_select %p190, %s17, 3
        %s192 = smul.addr %s191, 4
        %s193 = scalar_lea.vmem %s1, %s192
        %p194 = pneg %p64
        %p195 = pneg %p61
        %p196 = scmp.lt.s32.totalorder %s17, 3
        %s197 = scalar_select %p196, %s17, 3
        %s198 = smul.addr %s197, 4
        %s199 = scalar_lea.vmem %s2, %s198
        %p200 = pneg %p90
        %p201 = pneg %p87
        %p202 = pneg %p116
        %p203 = pneg %p113
        %p204 = scmp.lt.s32.totalorder %s17, 3
        %s205 = scalar_select %p204, %s17, 3
        %s206 = smul.addr %s205, 4
        %s207 = scalar_lea.vmem %s3, %s206
        %p208 = pneg %p137
        %p209 = pneg %p134
        %p210 = scmp.lt.s32.totalorder %s17, 3
        %s211 = scalar_select %p210, %s17, 3
        %s212 = smul.addr %s211, 4
        %s213 = scalar_lea.vmem %s0, %s212
        %p214 = scmp.lt.s32.totalorder %s17, 3
        %s215 = scalar_select %p214, %s17, 3
        %s216 = smul.addr %s215, 4
        %s217 = scalar_lea.vmem %s1, %s216
        %p218 = scmp.lt.s32.totalorder %s17, 3
        %s219 = scalar_select %p218, %s17, 3
        %s220 = smul.addr %s219, 4
        %s221 = scalar_lea.vmem %s2, %s220
        %p222 = scmp.lt.s32.totalorder %s17, 3
        %s223 = scalar_select %p222, %s17, 3
        %s224 = smul.addr %s223, 4
        %s225 = scalar_lea.vmem %s3, %s224
        %p226 = scmp.eq.s32.totalorder %s17, 0
        // Predicated region
        $region33: #{shape_model_forward.5} parent=31 // pred_check
          %p227 = pneg %p226
        $region34: #{shape_model_forward.5} parent=31 // pred_check_branch
          %229 = sbr.rel (%p227) target = $region36
        $region35: #{shape_model_forward.5} parent=31 // pred_region
          %230 = vst [vmem:[#allocation2] sm:$0x7] 0.0
        $region36: #{shape_model_forward.5} parent=31 // pred_fallthru
          _
        %v231 = vld [vmem:[%s213] sm:$0x7]
        %v232 = vld [vmem:[%s217] sm:$0x7]
        %v233 = vld [vmem:[%s221] sm:$0x7]
        %235 = vset.pattern.permute.xlu0 0
        %236 = vperm.xlu0 %235, %v232
        %v237 = vpop.permute.xlu0 %236
        %v239 = vmul.f32 %v237, %v231
        %240 = vset.pattern.permute.xlu0 1
        %241 = vperm.xlu0 %240, %v232
        %v242 = vpop.permute.xlu0 %241
        %v245 = vrot.slane %v231, 1
        %v247 = vmul.f32 %v242, %v245
        %v248 = vadd.f32 %v239, %v247
        %249 = vset.pattern.permute.xlu0 2
        %250 = vperm.xlu0 %249, %v232
        %v251 = vpop.permute.xlu0 %250
        %v253 = vrot.slane %v231, 2
        %v255 = vmul.f32 %v251, %v253
        %v256 = vadd.f32 %v248, %v255
        %258 = vset.pattern.permute.xlu0 0
        %259 = vperm.xlu0 %258, %v233
        %v260 = vpop.permute.xlu0 %259
        %v262 = vadd.f32 %v256, %v260
        %263 = vst [vmem:[%s225] sm:$0x1] %v262
        %v264 = vld [vmem:[#allocation2] sm:$0x1]
        %v265 = vadd.f32 %v264, %v262
        %266 = vst [vmem:[#allocation2] sm:$0x1] %v265
        %v267 = vrot.slane %v231, 7
        %v269 = vmul.f32 %v237, %v267
        %v270 = vmul.f32 %v242, %v231
        %v271 = vadd.f32 %v269, %v270
        %v272 = vmul.f32 %v251, %v245
        %v273 = vadd.f32 %v271, %v272
        %v274 = vadd.f32 %v273, %v260
        %275 = vst [vmem:[%s225] sm:$0x2] %v274
        %v276 = vld [vmem:[#allocation2 + $0x1] sm:$0x1]
        %v278 = vrot.slane %v274, 1
        %v280 = vadd.f32 %v276, %v278
        %281 = vst [vmem:[#allocation2 + $0x1] sm:$0x1] %v280
        %v282 = vrot.slane %v231, 6
        %v284 = vmul.f32 %v237, %v282
        %v285 = vmul.f32 %v242, %v267
        %v286 = vadd.f32 %v284, %v285
        %v287 = vmul.f32 %v251, %v231
        %v288 = vadd.f32 %v286, %v287
        %v289 = vadd.f32 %v288, %v260
        %290 = vst [vmem:[%s225] sm:$0x4] %v289
        %v291 = vld [vmem:[#allocation2 + $0x2] sm:$0x1]
        %v293 = vrot.slane %v289, 2
        %v295 = vadd.f32 %v291, %v293
        %296 = vst [vmem:[#allocation2 + $0x2] sm:$0x1] %v295
        %p297 = scmp.eq.s32.totalorder %s17, 3
        // Predicated region
        $region37: #{shape_model_forward.5} parent=31 // pred_check
          %p298 = pneg %p297
        $region38: #{shape_model_forward.5} parent=31 // pred_check_branch
          %300 = sbr.rel (%p298) target = $region40
        $region39: #{shape_model_forward.5} parent=31 // pred_region
          %v301 = vld [vmem:[#allocation2] sm:$0x7]
          %v302 = vmul.f32 %v301, 0.25
          %303 = vst [vmem:[#allocation2] sm:$0x7] %v302
        $region40: #{shape_model_forward.5} parent=31 // pred_fallthru
          _
        %p304 = scmp.lt.s32.totalorder %s17, 3
        %s305 = scalar_select %p304, %s17, 3
        %s306 = smul.addr %s305, 4
        %s307 = scalar_lea.vmem %s3, %s306
        // Predicated region
        $region41: #{shape_model_forward.5} parent=31 // pred_check
          %p308 = pneg %p113
        $region42: #{shape_model_forward.5} parent=31 // pred_check_branch
          %310 = sbr.rel (%p308) target = $region44
        $region43: #{shape_model_forward.5} parent=31 // pred_region
          _
        $region44: #{shape_model_forward.5} parent=31 // pred_fallthru
          _
        // Predicated region
        $region45: #{shape_model_forward.5} parent=31 // pred_check
          %p311 = pneg %p134
        $region46: #{shape_model_forward.5} parent=31 // pred_check_branch
          %313 = sbr.rel (%p311) target = $region48
        $region47: #{shape_model_forward.5} parent=31 // pred_region
          %s315 = ssub.s32 64, 64
          %316 = vsyncadd [#allocation3], %s315
          %s318 = sshll.u32 [#allocation2], 4
          %s319 = int_to_ptr.vmem [resolvable:$true] %s318
          %321 = dma.vmem_to_hbm [thread:$0]  %s319, 64, %s4, [#allocation3]
        $region48: #{shape_model_forward.5} parent=31 // pred_fallthru
          _
        // Predicated region
        $region49: #{shape_model_forward.5} parent=31 // pred_check
          %p322 = pneg %p134
        $region50: #{shape_model_forward.5} parent=31 // pred_check_branch
          %324 = sbr.rel (%p322) target = $region52
        $region51: #{shape_model_forward.5} parent=31 // pred_region
          %325 = dma.done [#allocation3], 64
        $region52: #{shape_model_forward.5} parent=31 // pred_fallthru
          _
      $region32: #{shape_model_forward.5} parent=5 // pred_fallthru
        _
      %p326 = scmp.le.s32.totalorder 2, %s12
      // Predicated region
      $region53: #{shape_model_forward.5} parent=5 // pred_check
        %p327 = pneg %p326
      $region54: #{shape_model_forward.5} parent=5 // pred_check_branch
        %329 = sbr.rel (%p327) target = $region56
      $region55: #{shape_model_forward.5} parent=5 // pred_region
        %s330 = ssub.s32 %s12, 2
        // Predicated region
        $region57: #{shape_model_forward.5} parent=55 // pred_check
          %p331 = pneg %p119
        $region58: #{shape_model_forward.5} parent=55 // pred_check_branch
          %333 = sbr.rel (%p331) target = $region60
        $region59: #{shape_model_forward.5} parent=55 // pred_region
          %p334 = scmp.lt.s32.totalorder %s18, 3
          %s335 = scalar_select %p334, %s18, 3
          %s336 = smul.addr %s335, 4
          %s337 = scalar_lea.vmem %s3, %s336
        $region60: #{shape_model_forward.5} parent=55 // pred_fallthru
          _
      $region56: #{shape_model_forward.5} parent=5 // pred_fallthru
        _
    $region6: #{shape_model_forward.5} parent=1 // loop_footer
      %s16 = sadd.s32 1, %s12
    $region7: #{shape_model_forward.5} parent=1 // loop_footer_branch
      %11 = sbr.rel target = $region3
    $region8: #{shape_model_forward.5} parent=1 // loop_exit
      _
    %338 = vsyncpa [#allocation3], 1
    %s339 = scalar_lea.sflag [#allocation3], 1
    %340 = vsyncpa %s339, 1

</llo_original>
